<compile_context>
chip_gen: v6e
topology: v6e:2x2x1
jax: 0.10.0
libtpu: 0.0.40
codegen_flags: <defaults>
</compile_context>

<pallas_src>
import functools

import jax
import jax.numpy as jnp
from jax import lax
from jax.experimental import pallas as pl
from jax.experimental.pallas import tpu as pltpu


# --------------------------------------------------------------------------- kernel
def _full_spec(shape):
    # whole-array block, grid=() -> index_map takes no args
    return pl.BlockSpec(shape, lambda: tuple(0 for _ in shape))


def _policy_fused_kernel(*refs, n_conv, n_enc, k, oh2):
    """Single fused kernel: conv tower + ws_fc + block-diag encoders + head."""
    it = iter(refs)
    x_ref = next(it)                                   # (B*H, W*Cin) world state
    dense_ref = next(it)                               # (B, ego+cmd+tgt) fused input
    conv_refs = [(next(it), next(it), next(it)) for _ in range(n_conv)]  # (R, N, b)
    s_ref = next(it)                                   # (oh2, B, B*oh2)
    wfc_ref = next(it)                                 # (oh2, ow2*C, hidden)
    bfc_ref = next(it)                                 # (1, hidden)
    wenc1_ref = next(it)                               # (12, 3*hidden) block-diag
    benc1_ref = next(it)                               # (1, 3*hidden)
    wr_ref = br_ref = None
    if n_enc > 1:
        wr_ref = next(it)                              # (n_enc-1, 3*hidden, 3*hidden)
        br_ref = next(it)                              # (n_enc-1, 1, 3*hidden)
    wh1ws_ref = next(it)                               # (hidden, 2*hidden)
    wh1enc_ref = next(it)                              # (3*hidden, 2*hidden)
    bh1_ref = next(it)                                 # (1, 2*hidden)
    wh2_ref = next(it)                                 # (2*hidden, hidden)
    bh2_ref = next(it)                                 # (1, hidden)
    wh3_ref = next(it)                                 # (hidden, 2)  [accel | steer]
    bh3_ref = next(it)                                 # (1, 2)
    o_ref = next(it)                                   # (B, 2) output

    def dot(a, b):
        return jnp.dot(a, b, preferred_element_type=jnp.float32)

    # ---- conv tower: each layer = sum of k (row-select @ act @ lowered-weight) ----
    y = x_ref[...]
    for (r_ref, n_ref, b_ref) in conv_refs:
        acc = dot(dot(r_ref[0], y), n_ref[0])
        for ky in range(1, k):
            acc = acc + dot(dot(r_ref[ky], y), n_ref[ky])
        y = jnp.maximum(acc + b_ref[...], 0.0)          # (B*OH, OW*Cout)

    # ---- world_state fc (flatten via row-selection matmuls, NHWC order) ----
    ws_enc = dot(dot(s_ref[0], y), wfc_ref[0])
    for oy in range(1, oh2):
        ws_enc = ws_enc + dot(dot(s_ref[oy], y), wfc_ref[oy])
    ws_enc = ws_enc + bfc_ref[...]                      # (B, hidden), no ReLU

    # ---- fused ego / command / target encoders (block-diagonal, 3*hidden lanes) ----
    h = jnp.maximum(dot(dense_ref[...], wenc1_ref[...]) + benc1_ref[...], 0.0)
    for l in range(n_enc - 1):
        h = jnp.maximum(dot(h, wr_ref[l]) + br_ref[l], 0.0)   # (B, 3*hidden)

    # ---- head: fc (2 layers) + fused acceleration/steer tanh (no lane concat) ----
    h1 = jnp.maximum(dot(ws_enc, wh1ws_ref[...]) + dot(h, wh1enc_ref[...])
                     + bh1_ref[...], 0.0)
    h2 = jnp.maximum(dot(h1, wh2_ref[...]) + bh2_ref[...], 0.0)
    o_ref[...] = jnp.tanh(dot(h2, wh3_ref[...]) + bh3_ref[...]).astype(o_ref.dtype)


@functools.partial(jax.jit, static_argnames=("n_conv", "n_enc", "k", "oh2"))
def policy_forward(consts, ego_state, world_state, command, target_location,
                   *, n_conv, n_enc, k, oh2):
    B = world_state.shape[0]
    H, W = world_state.shape[-2], world_state.shape[-1]
    # torch: world_state.view(B, -1, H, W)  (NCHW) -> NHWC -> (B*H, W*Cin) layout
    ws = world_state.reshape(B, -1, H, W)
    x = jnp.transpose(ws, (0, 2, 3, 1))
    x2d = x.reshape(B * H, W * x.shape[-1]).astype(jnp.float32)

    # Fused dense-encoder input built outside the kernel: ego(loc,yaw,speed) | cmd |
    # delta-target.  One tiny operand instead of five, no in-kernel lane concat.
    loc = ego_state["location"].astype(jnp.float32)
    dense_in = jnp.concatenate(
        [loc,
         ego_state["yaw"].astype(jnp.float32),
         ego_state["speed"].astype(jnp.float32),
         command.astype(jnp.float32),
         target_location.astype(jnp.float32) - loc], axis=1)

    inputs = [x2d, dense_in] + list(consts)

    return pl.pallas_call(
        functools.partial(_policy_fused_kernel, n_conv=n_conv, n_enc=n_enc,
                          k=k, oh2=oh2),
        out_shape=jax.ShapeDtypeStruct((B, 2), jnp.float32),
        in_specs=[_full_spec(a.shape) for a in inputs],
        out_specs=_full_spec((B, 2)),
        compiler_params=pltpu.CompilerParams(vmem_limit_bytes=32 * 1024 * 1024),
    )(*inputs)


# ------------------------------------------------------------------------------ params
def _lin_init(key, fan_in, fan_out):
    scale = 1.0 / jnp.sqrt(jnp.float32(fan_in))
    kw, kb = jax.random.split(key)
    w = jax.random.uniform(kw, (fan_in, fan_out), jnp.float32, -scale, scale)
    b = jax.random.uniform(kb, (fan_out,), jnp.float32, -scale, scale)
    return w, b


def _conv_init(key, k, cin, cout):
    fan_in = k * k * cin
    scale = 1.0 / jnp.sqrt(jnp.float32(fan_in))
    kw, kb = jax.random.split(key)
    w = jax.random.uniform(kw, (k, k, cin, cout), jnp.float32, -scale, scale)  # HWIO
    b = jax.random.uniform(kb, (cout,), jnp.float32, -scale, scale)
    return w, b


def init_policy_params(key, *, world_channels, H, W, ego_size, command_size,
                       target_size, hidden, layers):
    keys = iter(jax.random.split(key, 64))
    params = {}

    conv = []
    cin = world_channels
    for _ in range(layers):
        conv.append(_conv_init(next(keys), 3, cin, hidden))
        cin = hidden
    params["conv"] = conv
    oh, ow = H // (2 ** layers), W // (2 ** layers)
    params["ws_fc"] = _lin_init(next(keys), hidden * oh * ow, hidden)

    def mlp_init(in_size):
        layers_p = [_lin_init(next(keys), in_size, hidden)]
        for _ in range(layers - 1):
            layers_p.append(_lin_init(next(keys), hidden, hidden))
        return layers_p

    params["ego"] = mlp_init(ego_size)
    params["cmd"] = mlp_init(command_size)
    params["tgt"] = mlp_init(target_size)

    params["head"] = (
        _lin_init(next(keys), hidden * 4, hidden * 2),   # fc[0]
        _lin_init(next(keys), hidden * 2, hidden),       # fc[2]
        _lin_init(next(keys), hidden, 1),                # fc_acceleration
        _lin_init(next(keys), hidden, 1),                # fc_steer
    )
    return params


def build_fused_params(params, *, B, H, W, hidden, layers, k=3, stride=2, pad=1):
    """Lower the Policy params into the constant operands of the fused kernel."""
    consts = []

    # -- conv layers: fold padding + stride into 0/1 row selectors and lowered cols --
    h_in, w_in = H, W
    for (w_hwio, b) in params["conv"]:
        cin, cout = w_hwio.shape[2], w_hwio.shape[3]
        oh = (h_in + 2 * pad - k) // stride + 1
        ow = (w_in + 2 * pad - k) // stride + 1

        r_stack = []
        for ky in range(k):
            r = jnp.zeros((oh, h_in), jnp.float32)
            for oy in range(oh):
                y = stride * oy + ky - pad
                if 0 <= y < h_in:
                    r = r.at[oy, y].set(1.0)
            r_stack.append(jnp.kron(jnp.eye(B, dtype=jnp.float32), r))
        r_stack = jnp.stack(r_stack)                       # (k, B*oh, B*h_in)

        n_stack = []
        for ky in range(k):
            n = jnp.zeros((w_in, cin, ow, cout), jnp.float32)
            for kx in range(k):
                for ox in range(ow):
                    x = stride * ox + kx - pad
                    if 0 <= x < w_in:
                        n = n.at[x, :, ox, :].add(w_hwio[ky, kx])
            n_stack.append(n.reshape(w_in * cin, ow * cout))
        n_stack = jnp.stack(n_stack)                       # (k, w_in*cin, ow*cout)

        bias_row = jnp.tile(b, ow).reshape(1, ow * cout)
        consts += [r_stack, n_stack, bias_row]
        h_in, w_in = oh, ow
    oh2, ow2, cout = h_in, w_in, params["conv"][-1][0].shape[3]

    # -- world_state fc: per-oy row selectors + weight blocks (NHWC flatten order) --
    w_fc, b_fc = params["ws_fc"]
    S = jnp.zeros((oh2, B, B * oh2), jnp.float32)
    for oy in range(oh2):
        for bi in range(B):
            S = S.at[oy, bi, bi * oh2 + oy].set(1.0)
    consts += [S, w_fc.reshape(oh2, ow2 * cout, hidden), b_fc.reshape(1, hidden)]

    # -- fused (block-diagonal) ego / cmd / tgt encoders --
    (we1, be1) = params["ego"][0]
    (wc1, bc1) = params["cmd"][0]
    (wt1, bt1) = params["tgt"][0]
    d_ego, d_cmd, d_tgt = we1.shape[0], wc1.shape[0], wt1.shape[0]
    W1 = jnp.zeros((d_ego + d_cmd + d_tgt, 3 * hidden), jnp.float32)
    W1 = W1.at[:d_ego, 0:hidden].set(we1)
    W1 = W1.at[d_ego:d_ego + d_cmd, hidden:2 * hidden].set(wc1)
    W1 = W1.at[d_ego + d_cmd:, 2 * hidden:].set(wt1)
    b1 = jnp.concatenate([be1, bc1, bt1]).reshape(1, 3 * hidden)
    consts += [W1, b1]

    if layers > 1:
        w_rest, b_rest = [], []
        for l in range(1, layers):
            (we, be) = params["ego"][l]
            (wc, bc) = params["cmd"][l]
            (wt, bt) = params["tgt"][l]
            wl = jnp.zeros((3 * hidden, 3 * hidden), jnp.float32)
            wl = wl.at[0:hidden, 0:hidden].set(we)
            wl = wl.at[hidden:2 * hidden, hidden:2 * hidden].set(wc)
            wl = wl.at[2 * hidden:, 2 * hidden:].set(wt)
            w_rest.append(wl)
            b_rest.append(jnp.concatenate([be, bc, bt]).reshape(1, 3 * hidden))
        consts += [jnp.stack(w_rest), jnp.stack(b_rest)]

    # -- head: split fc[0] by [ws | (ego,cmd,tgt)] input blocks; fuse the two heads --
    (w1, bh1), (w2, bh2), (wa, ba), (ws_, bs) = params["head"]
    consts += [w1[:hidden, :], w1[hidden:, :], bh1.reshape(1, -1),
               w2, bh2.reshape(1, -1),
               jnp.concatenate([wa, ws_], axis=1),
               jnp.concatenate([ba, bs]).reshape(1, 2)]

    meta = dict(n_conv=len(params["conv"]), n_enc=layers, k=k, oh2=oh2)
    return dict(consts=tuple(consts), meta=meta)


# --------------------------------------------------------------------------- reference
def _ref_forward(params, ego_state, world_state, command, target_location):
    B = world_state.shape[0]
    ws = world_state.reshape(B, -1, world_state.shape[-2], world_state.shape[-1])
    x = jnp.transpose(ws, (0, 2, 3, 1))
    for w_hwio, b in params["conv"]:
        x = lax.conv_general_dilated(
            x, w_hwio, window_strides=(2, 2), padding=((1, 1), (1, 1)),
            dimension_numbers=("NHWC", "HWIO", "NHWC"))
        x = jnp.maximum(x + b, 0.0)
    ws_feat = x.reshape(B, -1)
    w, b = params["ws_fc"]
    ws_enc = ws_feat @ w + b

    def mlp(v, ps):
        for w_, b_ in ps:
            v = jnp.maximum(v @ w_ + b_, 0.0)
        return v

    ego_vec = jnp.concatenate(
        [ego_state["location"], ego_state["yaw"], ego_state["speed"]], axis=1)
    ego_enc = mlp(ego_vec, params["ego"])
    cmd_enc = mlp(command, params["cmd"])
    tgt_enc = mlp(target_location - ego_state["location"], params["tgt"])

    feats = jnp.concatenate([ws_enc, ego_enc, cmd_enc, tgt_enc], axis=1)
    (w1, b1), (w2, b2), (wa, ba), (ws_, bs) = params["head"]
    h = jnp.maximum(feats @ w1 + b1, 0.0)
    h = jnp.maximum(h @ w2 + b2, 0.0)
    return jnp.concatenate([jnp.tanh(h @ wa + ba), jnp.tanh(h @ ws_ + bs)], axis=1)


# ------------------------------------------------------------------------------- main
if __name__ == "__main__":
    B, T, C, H, W = 2, 2, 2, 16, 16
    hidden, layers = 32, 2
    command_size, target_size = 6, 2
    ego_size = 1 * 2 + 1 + 1  # location(2) + yaw(1) + speed(1)

    key = jax.random.PRNGKey(0)
    k_ws, k_loc, k_yaw, k_spd, k_cmd, k_tgt, k_par = jax.random.split(key, 7)

    world_state = jax.random.normal(k_ws, (B, T, C, H, W), jnp.float32)
    ego_state = {
        "location": jax.random.normal(k_loc, (B, 2), jnp.float32),
        "yaw": jax.random.normal(k_yaw, (B, 1), jnp.float32),
        "speed": jax.random.normal(k_spd, (B, 1), jnp.float32),
    }
    command = jax.random.normal(k_cmd, (B, command_size), jnp.float32)
    target_location = jax.random.normal(k_tgt, (B, target_size), jnp.float32)

    params = init_policy_params(
        k_par, world_channels=T * C, H=H, W=W, ego_size=ego_size,
        command_size=command_size, target_size=target_size,
        hidden=hidden, layers=layers)
    fused = build_fused_params(params, B=B, H=H, W=W, hidden=hidden, layers=layers)

    action = policy_forward(fused["consts"], ego_state, world_state, command,
                            target_location, **fused["meta"])
    action = jax.block_until_ready(action)
    assert action.shape == (B, 2)

    ref = _ref_forward(params, ego_state, world_state, command, target_location)
    assert jnp.allclose(action, ref, atol=1e-4, rtol=1e-4), (action, ref)

    print("KERNEL_OK")
</pallas_src>

<mosaic_0001>
module attributes {stable_mosaic.version = 11 : i64} {
  func.func @_policy_fused_kernel(%arg0: memref<32x64xf32, #tpu.memory_space<vmem>>, %arg1: memref<2x12xf32, #tpu.memory_space<vmem>>, %arg2: memref<3x16x32xf32, #tpu.memory_space<vmem>>, %arg3: memref<3x64x256xf32, #tpu.memory_space<vmem>>, %arg4: memref<1x256xf32, #tpu.memory_space<vmem>>, %arg5: memref<3x8x16xf32, #tpu.memory_space<vmem>>, %arg6: memref<3x256x128xf32, #tpu.memory_space<vmem>>, %arg7: memref<1x128xf32, #tpu.memory_space<vmem>>, %arg8: memref<4x2x8xf32, #tpu.memory_space<vmem>>, %arg9: memref<4x128x32xf32, #tpu.memory_space<vmem>>, %arg10: memref<1x32xf32, #tpu.memory_space<vmem>>, %arg11: memref<12x96xf32, #tpu.memory_space<vmem>>, %arg12: memref<1x96xf32, #tpu.memory_space<vmem>>, %arg13: memref<1x96x96xf32, #tpu.memory_space<vmem>>, %arg14: memref<1x1x96xf32, #tpu.memory_space<vmem>>, %arg15: memref<32x64xf32, #tpu.memory_space<vmem>>, %arg16: memref<96x64xf32, #tpu.memory_space<vmem>>, %arg17: memref<1x64xf32, #tpu.memory_space<vmem>>, %arg18: memref<64x32xf32, #tpu.memory_space<vmem>>, %arg19: memref<1x32xf32, #tpu.memory_space<vmem>>, %arg20: memref<32x2xf32, #tpu.memory_space<vmem>>, %arg21: memref<1x2xf32, #tpu.memory_space<vmem>>, %arg22: memref<2x2xf32, #tpu.memory_space<vmem>>) attributes {dimension_semantics = [], scalar_prefetch = 0 : i64, scratch_operands = 0 : i64, tpu.core_type = #tpu.core_type<tc>} {
    %c0 = arith.constant 0 : index
    %c0_0 = arith.constant 0 : index
    %0 = vector.load %arg0[%c0, %c0_0] : memref<32x64xf32, #tpu.memory_space<vmem>>, vector<32x64xf32>
    %c0_1 = arith.constant 0 : index
    %c0_2 = arith.constant 0 : index
    %c0_3 = arith.constant 0 : index
    %1 = vector.load %arg2[%c0_1, %c0_2, %c0_3] : memref<3x16x32xf32, #tpu.memory_space<vmem>>, vector<1x16x32xf32>
    %2 = vector.shape_cast %1 : vector<1x16x32xf32> to vector<16x32xf32>
    %cst = arith.constant dense<0.000000e+00> : vector<16x64xf32>
    %3 = tpu.matmul %2, %0, %cst {dimension_numbers = #tpu.dot_dimension_numbers<[1], [0], [0], [1], [0, 0, 1, 1], [], []>} : vector<16x32xf32>, vector<32x64xf32>, vector<16x64xf32> -> vector<16x64xf32>
    %c0_4 = arith.constant 0 : index
    %c0_5 = arith.constant 0 : index
    %c0_6 = arith.constant 0 : index
    %4 = vector.load %arg3[%c0_4, %c0_5, %c0_6] : memref<3x64x256xf32, #tpu.memory_space<vmem>>, vector<1x64x256xf32>
    %5 = vector.shape_cast %4 : vector<1x64x256xf32> to vector<64x256xf32>
    %cst_7 = arith.constant dense<0.000000e+00> : vector<16x256xf32>
    %6 = tpu.matmul %3, %5, %cst_7 {dimension_numbers = #tpu.dot_dimension_numbers<[1], [0], [0], [1], [0, 0, 1, 1], [], []>} : vector<16x64xf32>, vector<64x256xf32>, vector<16x256xf32> -> vector<16x256xf32>
    %c1 = arith.constant 1 : index
    %c0_8 = arith.constant 0 : index
    %c0_9 = arith.constant 0 : index
    %7 = vector.load %arg2[%c1, %c0_8, %c0_9] : memref<3x16x32xf32, #tpu.memory_space<vmem>>, vector<1x16x32xf32>
    %8 = vector.shape_cast %7 : vector<1x16x32xf32> to vector<16x32xf32>
    %cst_10 = arith.constant dense<0.000000e+00> : vector<16x64xf32>
    %9 = tpu.matmul %8, %0, %cst_10 {dimension_numbers = #tpu.dot_dimension_numbers<[1], [0], [0], [1], [0, 0, 1, 1], [], []>} : vector<16x32xf32>, vector<32x64xf32>, vector<16x64xf32> -> vector<16x64xf32>
    %c1_11 = arith.constant 1 : index
    %c0_12 = arith.constant 0 : index
    %c0_13 = arith.constant 0 : index
    %10 = vector.load %arg3[%c1_11, %c0_12, %c0_13] : memref<3x64x256xf32, #tpu.memory_space<vmem>>, vector<1x64x256xf32>
    %11 = vector.shape_cast %10 : vector<1x64x256xf32> to vector<64x256xf32>
    %cst_14 = arith.constant dense<0.000000e+00> : vector<16x256xf32>
    %12 = tpu.matmul %9, %11, %cst_14 {dimension_numbers = #tpu.dot_dimension_numbers<[1], [0], [0], [1], [0, 0, 1, 1], [], []>} : vector<16x64xf32>, vector<64x256xf32>, vector<16x256xf32> -> vector<16x256xf32>
    %13 = arith.addf %6, %12 : vector<16x256xf32>
    %c2 = arith.constant 2 : index
    %c0_15 = arith.constant 0 : index
    %c0_16 = arith.constant 0 : index
    %14 = vector.load %arg2[%c2, %c0_15, %c0_16] : memref<3x16x32xf32, #tpu.memory_space<vmem>>, vector<1x16x32xf32>
    %15 = vector.shape_cast %14 : vector<1x16x32xf32> to vector<16x32xf32>
    %cst_17 = arith.constant dense<0.000000e+00> : vector<16x64xf32>
    %16 = tpu.matmul %15, %0, %cst_17 {dimension_numbers = #tpu.dot_dimension_numbers<[1], [0], [0], [1], [0, 0, 1, 1], [], []>} : vector<16x32xf32>, vector<32x64xf32>, vector<16x64xf32> -> vector<16x64xf32>
    %c2_18 = arith.constant 2 : index
    %c0_19 = arith.constant 0 : index
    %c0_20 = arith.constant 0 : index
    %17 = vector.load %arg3[%c2_18, %c0_19, %c0_20] : memref<3x64x256xf32, #tpu.memory_space<vmem>>, vector<1x64x256xf32>
    %18 = vector.shape_cast %17 : vector<1x64x256xf32> to vector<64x256xf32>
    %cst_21 = arith.constant dense<0.000000e+00> : vector<16x256xf32>
    %19 = tpu.matmul %16, %18, %cst_21 {dimension_numbers = #tpu.dot_dimension_numbers<[1], [0], [0], [1], [0, 0, 1, 1], [], []>} : vector<16x64xf32>, vector<64x256xf32>, vector<16x256xf32> -> vector<16x256xf32>
    %20 = arith.addf %13, %19 : vector<16x256xf32>
    %c0_22 = arith.constant 0 : index
    %c0_23 = arith.constant 0 : index
    %21 = vector.load %arg4[%c0_22, %c0_23] : memref<1x256xf32, #tpu.memory_space<vmem>>, vector<1x256xf32>
    %22 = vector.broadcast %21 : vector<1x256xf32> to vector<16x256xf32>
    %23 = arith.addf %20, %22 : vector<16x256xf32>
    %cst_24 = arith.constant 0.000000e+00 : f32
    %24 = vector.broadcast %cst_24 : f32 to vector<16x256xf32>
    %25 = arith.maximumf %23, %24 : vector<16x256xf32>
    %c0_25 = arith.constant 0 : index
    %c0_26 = arith.constant 0 : index
    %c0_27 = arith.constant 0 : index
    %26 = vector.load %arg5[%c0_25, %c0_26, %c0_27] : memref<3x8x16xf32, #tpu.memory_space<vmem>>, vector<1x8x16xf32>
    %27 = vector.shape_cast %26 : vector<1x8x16xf32> to vector<8x16xf32>
    %cst_28 = arith.constant dense<0.000000e+00> : vector<8x256xf32>
    %28 = tpu.matmul %27, %25, %cst_28 {dimension_numbers = #tpu.dot_dimension_numbers<[1], [0], [0], [1], [0, 0, 1, 1], [], []>} : vector<8x16xf32>, vector<16x256xf32>, vector<8x256xf32> -> vector<8x256xf32>
    %c0_29 = arith.constant 0 : index
    %c0_30 = arith.constant 0 : index
    %c0_31 = arith.constant 0 : index
    %29 = vector.load %arg6[%c0_29, %c0_30, %c0_31] : memref<3x256x128xf32, #tpu.memory_space<vmem>>, vector<1x256x128xf32>
    %30 = vector.shape_cast %29 : vector<1x256x128xf32> to vector<256x128xf32>
    %cst_32 = arith.constant dense<0.000000e+00> : vector<8x128xf32>
    %31 = tpu.matmul %28, %30, %cst_32 {dimension_numbers = #tpu.dot_dimension_numbers<[1], [0], [0], [1], [0, 0, 1, 1], [], []>} : vector<8x256xf32>, vector<256x128xf32>, vector<8x128xf32> -> vector<8x128xf32>
    %c1_33 = arith.constant 1 : index
    %c0_34 = arith.constant 0 : index
    %c0_35 = arith.constant 0 : index
    %32 = vector.load %arg5[%c1_33, %c0_34, %c0_35] : memref<3x8x16xf32, #tpu.memory_space<vmem>>, vector<1x8x16xf32>
    %33 = vector.shape_cast %32 : vector<1x8x16xf32> to vector<8x16xf32>
    %cst_36 = arith.constant dense<0.000000e+00> : vector<8x256xf32>
    %34 = tpu.matmul %33, %25, %cst_36 {dimension_numbers = #tpu.dot_dimension_numbers<[1], [0], [0], [1], [0, 0, 1, 1], [], []>} : vector<8x16xf32>, vector<16x256xf32>, vector<8x256xf32> -> vector<8x256xf32>
    %c1_37 = arith.constant 1 : index
    %c0_38 = arith.constant 0 : index
    %c0_39 = arith.constant 0 : index
    %35 = vector.load %arg6[%c1_37, %c0_38, %c0_39] : memref<3x256x128xf32, #tpu.memory_space<vmem>>, vector<1x256x128xf32>
    %36 = vector.shape_cast %35 : vector<1x256x128xf32> to vector<256x128xf32>
    %cst_40 = arith.constant dense<0.000000e+00> : vector<8x128xf32>
    %37 = tpu.matmul %34, %36, %cst_40 {dimension_numbers = #tpu.dot_dimension_numbers<[1], [0], [0], [1], [0, 0, 1, 1], [], []>} : vector<8x256xf32>, vector<256x128xf32>, vector<8x128xf32> -> vector<8x128xf32>
    %38 = arith.addf %31, %37 : vector<8x128xf32>
    %c2_41 = arith.constant 2 : index
    %c0_42 = arith.constant 0 : index
    %c0_43 = arith.constant 0 : index
    %39 = vector.load %arg5[%c2_41, %c0_42, %c0_43] : memref<3x8x16xf32, #tpu.memory_space<vmem>>, vector<1x8x16xf32>
    %40 = vector.shape_cast %39 : vector<1x8x16xf32> to vector<8x16xf32>
    %cst_44 = arith.constant dense<0.000000e+00> : vector<8x256xf32>
    %41 = tpu.matmul %40, %25, %cst_44 {dimension_numbers = #tpu.dot_dimension_numbers<[1], [0], [0], [1], [0, 0, 1, 1], [], []>} : vector<8x16xf32>, vector<16x256xf32>, vector<8x256xf32> -> vector<8x256xf32>
    %c2_45 = arith.constant 2 : index
    %c0_46 = arith.constant 0 : index
    %c0_47 = arith.constant 0 : index
    %42 = vector.load %arg6[%c2_45, %c0_46, %c0_47] : memref<3x256x128xf32, #tpu.memory_space<vmem>>, vector<1x256x128xf32>
    %43 = vector.shape_cast %42 : vector<1x256x128xf32> to vector<256x128xf32>
    %cst_48 = arith.constant dense<0.000000e+00> : vector<8x128xf32>
    %44 = tpu.matmul %41, %43, %cst_48 {dimension_numbers = #tpu.dot_dimension_numbers<[1], [0], [0], [1], [0, 0, 1, 1], [], []>} : vector<8x256xf32>, vector<256x128xf32>, vector<8x128xf32> -> vector<8x128xf32>
    %45 = arith.addf %38, %44 : vector<8x128xf32>
    %c0_49 = arith.constant 0 : index
    %c0_50 = arith.constant 0 : index
    %46 = vector.load %arg7[%c0_49, %c0_50] : memref<1x128xf32, #tpu.memory_space<vmem>>, vector<1x128xf32>
    %47 = vector.broadcast %46 : vector<1x128xf32> to vector<8x128xf32>
    %48 = arith.addf %45, %47 : vector<8x128xf32>
    %cst_51 = arith.constant 0.000000e+00 : f32
    %49 = vector.broadcast %cst_51 : f32 to vector<8x128xf32>
    %50 = arith.maximumf %48, %49 : vector<8x128xf32>
    %c0_52 = arith.constant 0 : index
    %c0_53 = arith.constant 0 : index
    %c0_54 = arith.constant 0 : index
    %51 = vector.load %arg8[%c0_52, %c0_53, %c0_54] : memref<4x2x8xf32, #tpu.memory_space<vmem>>, vector<1x2x8xf32>
    %52 = vector.shape_cast %51 : vector<1x2x8xf32> to vector<2x8xf32>
    %cst_55 = arith.constant dense<0.000000e+00> : vector<2x128xf32>
    %53 = tpu.matmul %52, %50, %cst_55 {dimension_numbers = #tpu.dot_dimension_numbers<[1], [0], [0], [1], [0, 0, 1, 1], [], []>} : vector<2x8xf32>, vector<8x128xf32>, vector<2x128xf32> -> vector<2x128xf32>
    %c0_56 = arith.constant 0 : index
    %c0_57 = arith.constant 0 : index
    %c0_58 = arith.constant 0 : index
    %54 = vector.load %arg9[%c0_56, %c0_57, %c0_58] : memref<4x128x32xf32, #tpu.memory_space<vmem>>, vector<1x128x32xf32>
    %55 = vector.shape_cast %54 : vector<1x128x32xf32> to vector<128x32xf32>
    %cst_59 = arith.constant dense<0.000000e+00> : vector<2x32xf32>
    %56 = tpu.matmul %53, %55, %cst_59 {dimension_numbers = #tpu.dot_dimension_numbers<[1], [0], [0], [1], [0, 0, 1, 1], [], []>} : vector<2x128xf32>, vector<128x32xf32>, vector<2x32xf32> -> vector<2x32xf32>
    %c1_60 = arith.constant 1 : index
    %c0_61 = arith.constant 0 : index
    %c0_62 = arith.constant 0 : index
    %57 = vector.load %arg8[%c1_60, %c0_61, %c0_62] : memref<4x2x8xf32, #tpu.memory_space<vmem>>, vector<1x2x8xf32>
    %58 = vector.shape_cast %57 : vector<1x2x8xf32> to vector<2x8xf32>
    %cst_63 = arith.constant dense<0.000000e+00> : vector<2x128xf32>
    %59 = tpu.matmul %58, %50, %cst_63 {dimension_numbers = #tpu.dot_dimension_numbers<[1], [0], [0], [1], [0, 0, 1, 1], [], []>} : vector<2x8xf32>, vector<8x128xf32>, vector<2x128xf32> -> vector<2x128xf32>
    %c1_64 = arith.constant 1 : index
    %c0_65 = arith.constant 0 : index
    %c0_66 = arith.constant 0 : index
    %60 = vector.load %arg9[%c1_64, %c0_65, %c0_66] : memref<4x128x32xf32, #tpu.memory_space<vmem>>, vector<1x128x32xf32>
    %61 = vector.shape_cast %60 : vector<1x128x32xf32> to vector<128x32xf32>
    %cst_67 = arith.constant dense<0.000000e+00> : vector<2x32xf32>
    %62 = tpu.matmul %59, %61, %cst_67 {dimension_numbers = #tpu.dot_dimension_numbers<[1], [0], [0], [1], [0, 0, 1, 1], [], []>} : vector<2x128xf32>, vector<128x32xf32>, vector<2x32xf32> -> vector<2x32xf32>
    %63 = arith.addf %56, %62 : vector<2x32xf32>
    %c2_68 = arith.constant 2 : index
    %c0_69 = arith.constant 0 : index
    %c0_70 = arith.constant 0 : index
    %64 = vector.load %arg8[%c2_68, %c0_69, %c0_70] : memref<4x2x8xf32, #tpu.memory_space<vmem>>, vector<1x2x8xf32>
    %65 = vector.shape_cast %64 : vector<1x2x8xf32> to vector<2x8xf32>
    %cst_71 = arith.constant dense<0.000000e+00> : vector<2x128xf32>
    %66 = tpu.matmul %65, %50, %cst_71 {dimension_numbers = #tpu.dot_dimension_numbers<[1], [0], [0], [1], [0, 0, 1, 1], [], []>} : vector<2x8xf32>, vector<8x128xf32>, vector<2x128xf32> -> vector<2x128xf32>
    %c2_72 = arith.constant 2 : index
    %c0_73 = arith.constant 0 : index
    %c0_74 = arith.constant 0 : index
    %67 = vector.load %arg9[%c2_72, %c0_73, %c0_74] : memref<4x128x32xf32, #tpu.memory_space<vmem>>, vector<1x128x32xf32>
    %68 = vector.shape_cast %67 : vector<1x128x32xf32> to vector<128x32xf32>
    %cst_75 = arith.constant dense<0.000000e+00> : vector<2x32xf32>
    %69 = tpu.matmul %66, %68, %cst_75 {dimension_numbers = #tpu.dot_dimension_numbers<[1], [0], [0], [1], [0, 0, 1, 1], [], []>} : vector<2x128xf32>, vector<128x32xf32>, vector<2x32xf32> -> vector<2x32xf32>
    %70 = arith.addf %63, %69 : vector<2x32xf32>
    %c3 = arith.constant 3 : index
    %c0_76 = arith.constant 0 : index
    %c0_77 = arith.constant 0 : index
    %71 = vector.load %arg8[%c3, %c0_76, %c0_77] : memref<4x2x8xf32, #tpu.memory_space<vmem>>, vector<1x2x8xf32>
    %72 = vector.shape_cast %71 : vector<1x2x8xf32> to vector<2x8xf32>
    %cst_78 = arith.constant dense<0.000000e+00> : vector<2x128xf32>
    %73 = tpu.matmul %72, %50, %cst_78 {dimension_numbers = #tpu.dot_dimension_numbers<[1], [0], [0], [1], [0, 0, 1, 1], [], []>} : vector<2x8xf32>, vector<8x128xf32>, vector<2x128xf32> -> vector<2x128xf32>
    %c3_79 = arith.constant 3 : index
    %c0_80 = arith.constant 0 : index
    %c0_81 = arith.constant 0 : index
    %74 = vector.load %arg9[%c3_79, %c0_80, %c0_81] : memref<4x128x32xf32, #tpu.memory_space<vmem>>, vector<1x128x32xf32>
    %75 = vector.shape_cast %74 : vector<1x128x32xf32> to vector<128x32xf32>
    %cst_82 = arith.constant dense<0.000000e+00> : vector<2x32xf32>
    %76 = tpu.matmul %73, %75, %cst_82 {dimension_numbers = #tpu.dot_dimension_numbers<[1], [0], [0], [1], [0, 0, 1, 1], [], []>} : vector<2x128xf32>, vector<128x32xf32>, vector<2x32xf32> -> vector<2x32xf32>
    %77 = arith.addf %70, %76 : vector<2x32xf32>
    %c0_83 = arith.constant 0 : index
    %c0_84 = arith.constant 0 : index
    %78 = vector.load %arg10[%c0_83, %c0_84] : memref<1x32xf32, #tpu.memory_space<vmem>>, vector<1x32xf32>
    %79 = vector.broadcast %78 : vector<1x32xf32> to vector<2x32xf32>
    %80 = arith.addf %77, %79 : vector<2x32xf32>
    %c0_85 = arith.constant 0 : index
    %c0_86 = arith.constant 0 : index
    %81 = vector.load %arg1[%c0_85, %c0_86] : memref<2x12xf32, #tpu.memory_space<vmem>>, vector<2x12xf32>
    %c0_87 = arith.constant 0 : index
    %c0_88 = arith.constant 0 : index
    %82 = vector.load %arg11[%c0_87, %c0_88] : memref<12x96xf32, #tpu.memory_space<vmem>>, vector<12x96xf32>
    %cst_89 = arith.constant dense<0.000000e+00> : vector<2x96xf32>
    %83 = tpu.matmul %81, %82, %cst_89 {dimension_numbers = #tpu.dot_dimension_numbers<[1], [0], [0], [1], [0, 0, 1, 1], [], []>} : vector<2x12xf32>, vector<12x96xf32>, vector<2x96xf32> -> vector<2x96xf32>
    %c0_90 = arith.constant 0 : index
    %c0_91 = arith.constant 0 : index
    %84 = vector.load %arg12[%c0_90, %c0_91] : memref<1x96xf32, #tpu.memory_space<vmem>>, vector<1x96xf32>
    %85 = vector.broadcast %84 : vector<1x96xf32> to vector<2x96xf32>
    %86 = arith.addf %83, %85 : vector<2x96xf32>
    %cst_92 = arith.constant 0.000000e+00 : f32
    %87 = vector.broadcast %cst_92 : f32 to vector<2x96xf32>
    %88 = arith.maximumf %86, %87 : vector<2x96xf32>
    %c0_93 = arith.constant 0 : index
    %c0_94 = arith.constant 0 : index
    %c0_95 = arith.constant 0 : index
    %89 = vector.load %arg13[%c0_93, %c0_94, %c0_95] : memref<1x96x96xf32, #tpu.memory_space<vmem>>, vector<1x96x96xf32>
    %90 = vector.shape_cast %89 : vector<1x96x96xf32> to vector<96x96xf32>
    %cst_96 = arith.constant dense<0.000000e+00> : vector<2x96xf32>
    %91 = tpu.matmul %88, %90, %cst_96 {dimension_numbers = #tpu.dot_dimension_numbers<[1], [0], [0], [1], [0, 0, 1, 1], [], []>} : vector<2x96xf32>, vector<96x96xf32>, vector<2x96xf32> -> vector<2x96xf32>
    %c0_97 = arith.constant 0 : index
    %c0_98 = arith.constant 0 : index
    %c0_99 = arith.constant 0 : index
    %92 = vector.load %arg14[%c0_97, %c0_98, %c0_99] : memref<1x1x96xf32, #tpu.memory_space<vmem>>, vector<1x1x96xf32>
    %93 = vector.shape_cast %92 : vector<1x1x96xf32> to vector<1x96xf32>
    %94 = vector.broadcast %93 : vector<1x96xf32> to vector<2x96xf32>
    %95 = arith.addf %91, %94 : vector<2x96xf32>
    %cst_100 = arith.constant 0.000000e+00 : f32
    %96 = vector.broadcast %cst_100 : f32 to vector<2x96xf32>
    %97 = arith.maximumf %95, %96 : vector<2x96xf32>
    %c0_101 = arith.constant 0 : index
    %c0_102 = arith.constant 0 : index
    %98 = vector.load %arg15[%c0_101, %c0_102] : memref<32x64xf32, #tpu.memory_space<vmem>>, vector<32x64xf32>
    %cst_103 = arith.constant dense<0.000000e+00> : vector<2x64xf32>
    %99 = tpu.matmul %80, %98, %cst_103 {dimension_numbers = #tpu.dot_dimension_numbers<[1], [0], [0], [1], [0, 0, 1, 1], [], []>} : vector<2x32xf32>, vector<32x64xf32>, vector<2x64xf32> -> vector<2x64xf32>
    %c0_104 = arith.constant 0 : index
    %c0_105 = arith.constant 0 : index
    %100 = vector.load %arg16[%c0_104, %c0_105] : memref<96x64xf32, #tpu.memory_space<vmem>>, vector<96x64xf32>
    %cst_106 = arith.constant dense<0.000000e+00> : vector<2x64xf32>
    %101 = tpu.matmul %97, %100, %cst_106 {dimension_numbers = #tpu.dot_dimension_numbers<[1], [0], [0], [1], [0, 0, 1, 1], [], []>} : vector<2x96xf32>, vector<96x64xf32>, vector<2x64xf32> -> vector<2x64xf32>
    %102 = arith.addf %99, %101 : vector<2x64xf32>
    %c0_107 = arith.constant 0 : index
    %c0_108 = arith.constant 0 : index
    %103 = vector.load %arg17[%c0_107, %c0_108] : memref<1x64xf32, #tpu.memory_space<vmem>>, vector<1x64xf32>
    %104 = vector.broadcast %103 : vector<1x64xf32> to vector<2x64xf32>
    %105 = arith.addf %102, %104 : vector<2x64xf32>
    %cst_109 = arith.constant 0.000000e+00 : f32
    %106 = vector.broadcast %cst_109 : f32 to vector<2x64xf32>
    %107 = arith.maximumf %105, %106 : vector<2x64xf32>
    %c0_110 = arith.constant 0 : index
    %c0_111 = arith.constant 0 : index
    %108 = vector.load %arg18[%c0_110, %c0_111] : memref<64x32xf32, #tpu.memory_space<vmem>>, vector<64x32xf32>
    %cst_112 = arith.constant dense<0.000000e+00> : vector<2x32xf32>
    %109 = tpu.matmul %107, %108, %cst_112 {dimension_numbers = #tpu.dot_dimension_numbers<[1], [0], [0], [1], [0, 0, 1, 1], [], []>} : vector<2x64xf32>, vector<64x32xf32>, vector<2x32xf32> -> vector<2x32xf32>
    %c0_113 = arith.constant 0 : index
    %c0_114 = arith.constant 0 : index
    %110 = vector.load %arg19[%c0_113, %c0_114] : memref<1x32xf32, #tpu.memory_space<vmem>>, vector<1x32xf32>
    %111 = vector.broadcast %110 : vector<1x32xf32> to vector<2x32xf32>
    %112 = arith.addf %109, %111 : vector<2x32xf32>
    %cst_115 = arith.constant 0.000000e+00 : f32
    %113 = vector.broadcast %cst_115 : f32 to vector<2x32xf32>
    %114 = arith.maximumf %112, %113 : vector<2x32xf32>
    %c0_116 = arith.constant 0 : index
    %c0_117 = arith.constant 0 : index
    %115 = vector.load %arg20[%c0_116, %c0_117] : memref<32x2xf32, #tpu.memory_space<vmem>>, vector<32x2xf32>
    %cst_118 = arith.constant dense<0.000000e+00> : vector<2x2xf32>
    %116 = tpu.matmul %114, %115, %cst_118 {dimension_numbers = #tpu.dot_dimension_numbers<[1], [0], [0], [1], [0, 0, 1, 1], [], []>} : vector<2x32xf32>, vector<32x2xf32>, vector<2x2xf32> -> vector<2x2xf32>
    %c0_119 = arith.constant 0 : index
    %c0_120 = arith.constant 0 : index
    %117 = vector.load %arg21[%c0_119, %c0_120] : memref<1x2xf32, #tpu.memory_space<vmem>>, vector<1x2xf32>
    %118 = vector.broadcast %117 : vector<1x2xf32> to vector<2x2xf32>
    %119 = arith.addf %116, %118 : vector<2x2xf32>
    %120 = math.tanh %119 : vector<2x2xf32>
    %c0_121 = arith.constant 0 : index
    %c0_122 = arith.constant 0 : index
    %121 = vector.load %arg22[%c0_121, %c0_122] : memref<2x2xf32, #tpu.memory_space<vmem>>, vector<2x2xf32>
    tpu.vector_store %arg22[%c0_121, %c0_122], %120 {strides = array<i32>} : memref<2x2xf32, #tpu.memory_space<vmem>>, vector<2x2xf32>,
    return
  }
}

</mosaic_0001>

<llo_original>
// kernel: sub.1
$region0: #{sub.1}
  #allocation0 [shape = 's32[1]{0}', space=sflag, size = 0x4, scoped, tag = 'scoped memory for sub.1']
  %s0 = inlined_call_operand.vmem [shape: f32[2,2], index: 0, kind: input, shape index: {}]
  %s1 = inlined_call_operand.vmem [shape: f32[2,2], index: 1, kind: input, shape index: {}]
  %s2 = inlined_call_operand.vmem [shape: f32[2,2], index: 2, kind: output, shape index: {}]
  %v3 = vld [vmem:[%s0] sm:$0x3]
  %v4 = vld [vmem:[%s1] sm:$0x3]
  %5 = xla_tuple %v3, %v4
  %6 = xla_tuple %5
  %v7 = vsub.f32 %v3, %v4
  %8 = xla_tuple %v7
  %9 = vst [vmem:[%s2] sm:$0x3] %v7

// kernel: policy_forward.1
$region0: #{policy_forward.1}
  #allocation0 [shape = 'u32[]', space=smem, size = 0x4, offset = 0x4, fixed_abs, tag = 'smem constant byte address 0x4 - core index']
  #allocation1 [shape = 'u32[144,128]{1,0:T(1,128)}', space=vmem, size = 0x12000, scoped, tag = 'internal scratch']
  %s0 = inlined_call_operand.vmem [shape: f32[32,64], index: 0, kind: input, shape index: {}]
  %s1 = inlined_call_operand.vmem [shape: f32[2,12], index: 1, kind: input, shape index: {}]
  %s2 = inlined_call_operand.vmem [shape: f32[3,16,32], index: 2, kind: input, shape index: {}]
  %s3 = inlined_call_operand.vmem [shape: f32[3,64,256], index: 3, kind: input, shape index: {}]
  %s4 = inlined_call_operand.hbm [shape: f32[1,256], index: 4, kind: input, shape index: {}]
  %s5 = inlined_call_operand.hbm [shape: f32[3,8,16], index: 5, kind: input, shape index: {}]
  %s6 = inlined_call_operand.vmem [shape: f32[3,256,128], index: 6, kind: input, shape index: {}]
  %s7 = inlined_call_operand.vmem [shape: f32[1,128], index: 7, kind: input, shape index: {}]
  %s8 = inlined_call_operand.hbm [shape: f32[4,2,8], index: 8, kind: input, shape index: {}]
  %s9 = inlined_call_operand.vmem [shape: f32[4,128,32], index: 9, kind: input, shape index: {}]
  %s10 = inlined_call_operand.hbm [shape: f32[1,32], index: 10, kind: input, shape index: {}]
  %s11 = inlined_call_operand.hbm [shape: f32[12,96], index: 11, kind: input, shape index: {}]
  %s12 = inlined_call_operand.hbm [shape: f32[1,96], index: 12, kind: input, shape index: {}]
  %s13 = inlined_call_operand.vmem [shape: f32[1,96,96], index: 13, kind: input, shape index: {}]
  %s14 = inlined_call_operand.hbm [shape: f32[1,1,96], index: 14, kind: input, shape index: {}]
  %s15 = inlined_call_operand.hbm [shape: f32[32,64], index: 15, kind: input, shape index: {}]
  %s16 = inlined_call_operand.vmem [shape: f32[96,64], index: 16, kind: input, shape index: {}]
  %s17 = inlined_call_operand.hbm [shape: f32[1,64], index: 17, kind: input, shape index: {}]
  %s18 = inlined_call_operand.vmem [shape: f32[64,32], index: 18, kind: input, shape index: {}]
  %s19 = inlined_call_operand.hbm [shape: f32[1,32], index: 19, kind: input, shape index: {}]
  %s20 = inlined_call_operand.vmem [shape: f32[32,2], index: 20, kind: input, shape index: {}]
  %s21 = inlined_call_operand.hbm [shape: f32[1,2], index: 21, kind: input, shape index: {}]
  %s22 = inlined_call_operand.hbm [shape: f32[2,2], index: 22, kind: output, shape index: {}]
  %s23 = sld [smem:[#allocation0]]
  $region142: #{policy_forward.1} parent=0
    _
  %s25 = ssub.s32 1, %s23
  %s26 = scalar_select 0, %s25, %s23
  $region1: #{policy_forward.1} parent=0
    #allocation2 [shape = 'u8[1024]{0}', space=vmem, size = 0x400, scoped, tag = 'input window, operand 4, single buffered']
    #allocation3 [shape = 's32[1]{0}', space=sflag, size = 0x4, scoped, tag = 'scoped memory for policy_forward.1']
    #allocation4 [shape = 's32[1]{0}', space=sflag, size = 0x4, scoped, tag = 'scoped memory for policy_forward.1']
    #allocation5 [shape = 'u8[12288]{0}', space=vmem, size = 0x3000, scoped, tag = 'input window, operand 5, single buffered']
    #allocation6 [shape = 's32[1]{0}', space=sflag, size = 0x4, scoped, tag = 'scoped memory for policy_forward.1']
    #allocation7 [shape = 'u8[4096]{0}', space=vmem, size = 0x1000, scoped, tag = 'input window, operand 8, single buffered']
    #allocation8 [shape = 'u8[512]{0}', space=vmem, size = 0x400, scoped, tag = 'input window, operand 10, single buffered']
    #allocation9 [shape = 's32[1]{0}', space=sflag, size = 0x4, scoped, tag = 'scoped memory for policy_forward.1']
    #allocation10 [shape = 'u8[8192]{0}', space=vmem, size = 0x2000, scoped, tag = 'input window, operand 11, single buffered']
    #allocation11 [shape = 'u8[512]{0}', space=vmem, size = 0x400, scoped, tag = 'input window, operand 12, single buffered']
    #allocation12 [shape = 's32[1]{0}', space=sflag, size = 0x4, scoped, tag = 'scoped memory for policy_forward.1']
    #allocation13 [shape = 'u8[512]{0}', space=vmem, size = 0x400, scoped, tag = 'input window, operand 14, single buffered']
    #allocation14 [shape = 'u8[16384]{0}', space=vmem, size = 0x4000, scoped, tag = 'input window, operand 15, single buffered']
    #allocation15 [shape = 's32[1]{0}', space=sflag, size = 0x4, scoped, tag = 'scoped memory for policy_forward.1']
    #allocation16 [shape = 'u8[512]{0}', space=vmem, size = 0x400, scoped, tag = 'input window, operand 17, single buffered']
    #allocation17 [shape = 'u8[512]{0}', space=vmem, size = 0x400, scoped, tag = 'input window, operand 19, single buffered']
    #allocation18 [shape = 's32[1]{0}', space=sflag, size = 0x4, scoped, tag = 'scoped memory for policy_forward.1']
    #allocation19 [shape = 'u8[512]{0}', space=vmem, size = 0x400, scoped, tag = 'input window, operand 21, single buffered']
    #allocation20 [shape = 'u8[1024]{0}', space=vmem, size = 0x400, scoped, tag = 'output window, operand 0, single buffered']
    %27 = vsyncpa [#allocation3], 0
    %28 = vsyncpa [#allocation6], 0
    %29 = vsyncpa [#allocation9], 0
    %30 = vsyncpa [#allocation12], 0
    %31 = vsyncpa [#allocation15], 0
    %32 = vsyncpa [#allocation18], 0
    %33 = vsyncpa [#allocation4], 0
    // Predicated region
    $region2: #{policy_forward.1} parent=1 // pred_check
      _
    $region3: #{policy_forward.1} parent=1 // pred_check_branch
      %35 = sbr.rel (0) target = $region5
    $region4: #{policy_forward.1} parent=1 // pred_region
      _
    $region5: #{policy_forward.1} parent=1 // pred_fallthru
      _
    // Predicated region
    $region6: #{policy_forward.1} parent=1 // pred_check
      _
    $region7: #{policy_forward.1} parent=1 // pred_check_branch
      %37 = sbr.rel (0) target = $region9
    $region8: #{policy_forward.1} parent=1 // pred_region
      _
    $region9: #{policy_forward.1} parent=1 // pred_fallthru
      _
    // Predicated region
    $region10: #{policy_forward.1} parent=1 // pred_check
      _
    $region11: #{policy_forward.1} parent=1 // pred_check_branch
      %39 = sbr.rel (0) target = $region13
    $region12: #{policy_forward.1} parent=1 // pred_region
      _
    $region13: #{policy_forward.1} parent=1 // pred_fallthru
      _
    // Predicated region
    $region14: #{policy_forward.1} parent=1 // pred_check
      _
    $region15: #{policy_forward.1} parent=1 // pred_check_branch
      %41 = sbr.rel (0) target = $region17
    $region16: #{policy_forward.1} parent=1 // pred_region
      _
    $region17: #{policy_forward.1} parent=1 // pred_fallthru
      _
    // Predicated region
    $region18: #{policy_forward.1} parent=1 // pred_check
      _
    $region19: #{policy_forward.1} parent=1 // pred_check_branch
      %43 = sbr.rel (0) target = $region21
    $region20: #{policy_forward.1} parent=1 // pred_region
      %s45 = ssub.s32 32, 32
      %46 = vsyncadd [#allocation3], %s45
      %s48 = sshll.u32 [#allocation2], 4
      %s49 = int_to_ptr.vmem [resolvable:$true] %s48
      %51 = dma.hbm_to_vmem [thread:$0]  %s4, 32, %s49, [#allocation3]
    $region21: #{policy_forward.1} parent=1 // pred_fallthru
      _
    // Predicated region
    $region22: #{policy_forward.1} parent=1 // pred_check
      _
    $region23: #{policy_forward.1} parent=1 // pred_check_branch
      %53 = sbr.rel (0) target = $region25
    $region24: #{policy_forward.1} parent=1 // pred_region
      %s55 = ssub.s32 384, 384
      %56 = vsyncadd [#allocation6], %s55
      %s57 = sshll.u32 [#allocation5], 4
      %s58 = int_to_ptr.vmem [resolvable:$true] %s57
      %63 = dma.hbm_to_vmem [thread:$0]  %s5, 384, %s58, [#allocation6], 128, 128, 8
    $region25: #{policy_forward.1} parent=1 // pred_fallthru
      _
    // Predicated region
    $region26: #{policy_forward.1} parent=1 // pred_check
      _
    $region27: #{policy_forward.1} parent=1 // pred_check_branch
      %65 = sbr.rel (0) target = $region29
    $region28: #{policy_forward.1} parent=1 // pred_region
      _
    $region29: #{policy_forward.1} parent=1 // pred_fallthru
      _
    // Predicated region
    $region30: #{policy_forward.1} parent=1 // pred_check
      _
    $region31: #{policy_forward.1} parent=1 // pred_check_branch
      %67 = sbr.rel (0) target = $region33
    $region32: #{policy_forward.1} parent=1 // pred_region
      _
    $region33: #{policy_forward.1} parent=1 // pred_fallthru
      _
    // Predicated region
    $region34: #{policy_forward.1} parent=1 // pred_check
      _
    $region35: #{policy_forward.1} parent=1 // pred_check_branch
      %69 = sbr.rel (0) target = $region37
    $region36: #{policy_forward.1} parent=1 // pred_region
      %s71 = ssub.s32 128, 128
      %72 = vsyncadd [#allocation6], %s71
      %s73 = sshll.u32 [#allocation7], 4
      %s74 = int_to_ptr.vmem [resolvable:$true] %s73
      %79 = dma.hbm_to_vmem [thread:$0]  %s8, 128, %s74, [#allocation6], 32, 32, 2
    $region37: #{policy_forward.1} parent=1 // pred_fallthru
      _
    // Predicated region
    $region38: #{policy_forward.1} parent=1 // pred_check
      _
    $region39: #{policy_forward.1} parent=1 // pred_check_branch
      %81 = sbr.rel (0) target = $region41
    $region40: #{policy_forward.1} parent=1 // pred_region
      _
    $region41: #{policy_forward.1} parent=1 // pred_fallthru
      _
    // Predicated region
    $region42: #{policy_forward.1} parent=1 // pred_check
      _
    $region43: #{policy_forward.1} parent=1 // pred_check_branch
      %83 = sbr.rel (0) target = $region45
    $region44: #{policy_forward.1} parent=1 // pred_region
      %s85 = ssub.s32 16, 16
      %86 = vsyncadd [#allocation9], %s85
      %s88 = sshll.u32 [#allocation8], 4
      %s89 = int_to_ptr.vmem [resolvable:$true] %s88
      %91 = dma.hbm_to_vmem [thread:$0]  %s10, 16, %s89, [#allocation9]
    $region45: #{policy_forward.1} parent=1 // pred_fallthru
      _
    // Predicated region
    $region46: #{policy_forward.1} parent=1 // pred_check
      _
    $region47: #{policy_forward.1} parent=1 // pred_check_branch
      %93 = sbr.rel (0) target = $region49
    $region48: #{policy_forward.1} parent=1 // pred_region
      %s95 = ssub.s32 256, 256
      %96 = vsyncadd [#allocation9], %s95
      %s97 = sshll.u32 [#allocation10], 4
      %s98 = int_to_ptr.vmem [resolvable:$true] %s97
      %103 = dma.hbm_to_vmem [thread:$0]  %s11, 256, %s98, [#allocation9], 128, 128, 8
    $region49: #{policy_forward.1} parent=1 // pred_fallthru
      _
    // Predicated region
    $region50: #{policy_forward.1} parent=1 // pred_check
      _
    $region51: #{policy_forward.1} parent=1 // pred_check_branch
      %105 = sbr.rel (0) target = $region53
    $region52: #{policy_forward.1} parent=1 // pred_region
      %s107 = ssub.s32 16, 16
      %108 = vsyncadd [#allocation12], %s107
      %s110 = sshll.u32 [#allocation11], 4
      %s111 = int_to_ptr.vmem [resolvable:$true] %s110
      %113 = dma.hbm_to_vmem [thread:$0]  %s12, 16, %s111, [#allocation12]
    $region53: #{policy_forward.1} parent=1 // pred_fallthru
      _
    // Predicated region
    $region54: #{policy_forward.1} parent=1 // pred_check
      _
    $region55: #{policy_forward.1} parent=1 // pred_check_branch
      %115 = sbr.rel (0) target = $region57
    $region56: #{policy_forward.1} parent=1 // pred_region
      _
    $region57: #{policy_forward.1} parent=1 // pred_fallthru
      _
    // Predicated region
    $region58: #{policy_forward.1} parent=1 // pred_check
      _
    $region59: #{policy_forward.1} parent=1 // pred_check_branch
      %117 = sbr.rel (0) target = $region61
    $region60: #{policy_forward.1} parent=1 // pred_region
      %s119 = ssub.s32 16, 16
      %120 = vsyncadd [#allocation12], %s119
      %s122 = sshll.u32 [#allocation13], 4
      %s123 = int_to_ptr.vmem [resolvable:$true] %s122
      %125 = dma.hbm_to_vmem [thread:$0]  %s14, 16, %s123, [#allocation12]
    $region61: #{policy_forward.1} parent=1 // pred_fallthru
      _
    // Predicated region
    $region62: #{policy_forward.1} parent=1 // pred_check
      _
    $region63: #{policy_forward.1} parent=1 // pred_check_branch
      %127 = sbr.rel (0) target = $region65
    $region64: #{policy_forward.1} parent=1 // pred_region
      %s129 = ssub.s32 512, 512
      %130 = vsyncadd [#allocation15], %s129
      %s131 = sshll.u32 [#allocation14], 4
      %s132 = int_to_ptr.vmem [resolvable:$true] %s131
      %137 = dma.hbm_to_vmem [thread:$0]  %s15, 512, %s132, [#allocation15], 128, 128, 8
    $region65: #{policy_forward.1} parent=1 // pred_fallthru
      _
    // Predicated region
    $region66: #{policy_forward.1} parent=1 // pred_check
      _
    $region67: #{policy_forward.1} parent=1 // pred_check_branch
      %139 = sbr.rel (0) target = $region69
    $region68: #{policy_forward.1} parent=1 // pred_region
      _
    $region69: #{policy_forward.1} parent=1 // pred_fallthru
      _
    // Predicated region
    $region70: #{policy_forward.1} parent=1 // pred_check
      _
    $region71: #{policy_forward.1} parent=1 // pred_check_branch
      %141 = sbr.rel (0) target = $region73
    $region72: #{policy_forward.1} parent=1 // pred_region
      %s143 = ssub.s32 16, 16
      %144 = vsyncadd [#allocation15], %s143
      %s146 = sshll.u32 [#allocation16], 4
      %s147 = int_to_ptr.vmem [resolvable:$true] %s146
      %149 = dma.hbm_to_vmem [thread:$0]  %s17, 16, %s147, [#allocation15]
    $region73: #{policy_forward.1} parent=1 // pred_fallthru
      _
    // Predicated region
    $region74: #{policy_forward.1} parent=1 // pred_check
      _
    $region75: #{policy_forward.1} parent=1 // pred_check_branch
      %151 = sbr.rel (0) target = $region77
    $region76: #{policy_forward.1} parent=1 // pred_region
      _
    $region77: #{policy_forward.1} parent=1 // pred_fallthru
      _
    // Predicated region
    $region78: #{policy_forward.1} parent=1 // pred_check
      _
    $region79: #{policy_forward.1} parent=1 // pred_check_branch
      %153 = sbr.rel (0) target = $region81
    $region80: #{policy_forward.1} parent=1 // pred_region
      %s155 = ssub.s32 16, 16
      %156 = vsyncadd [#allocation18], %s155
      %s158 = sshll.u32 [#allocation17], 4
      %s159 = int_to_ptr.vmem [resolvable:$true] %s158
      %161 = dma.hbm_to_vmem [thread:$0]  %s19, 16, %s159, [#allocation18]
    $region81: #{policy_forward.1} parent=1 // pred_fallthru
      _
    // Predicated region
    $region82: #{policy_forward.1} parent=1 // pred_check
      _
    $region83: #{policy_forward.1} parent=1 // pred_check_branch
      %163 = sbr.rel (0) target = $region85
    $region84: #{policy_forward.1} parent=1 // pred_region
      _
    $region85: #{policy_forward.1} parent=1 // pred_fallthru
      _
    // Predicated region
    $region86: #{policy_forward.1} parent=1 // pred_check
      _
    $region87: #{policy_forward.1} parent=1 // pred_check_branch
      %165 = sbr.rel (0) target = $region89
    $region88: #{policy_forward.1} parent=1 // pred_region
      %s167 = ssub.s32 16, 16
      %168 = vsyncadd [#allocation18], %s167
      %s170 = sshll.u32 [#allocation19], 4
      %s171 = int_to_ptr.vmem [resolvable:$true] %s170
      %173 = dma.hbm_to_vmem [thread:$0]  %s21, 16, %s171, [#allocation18]
    $region89: #{policy_forward.1} parent=1 // pred_fallthru
      _
    // Predicated region
    $region90: #{policy_forward.1} parent=1 // pred_check
      _
    $region91: #{policy_forward.1} parent=1 // pred_check_branch
      %175 = sbr.rel (0) target = $region93
    $region92: #{policy_forward.1} parent=1 // pred_region
      %176 = dma.done [#allocation3], 32
    $region93: #{policy_forward.1} parent=1 // pred_fallthru
      _
    // Predicated region
    $region94: #{policy_forward.1} parent=1 // pred_check
      _
    $region95: #{policy_forward.1} parent=1 // pred_check_branch
      %178 = sbr.rel (0) target = $region97
    $region96: #{policy_forward.1} parent=1 // pred_region
      %179 = dma.done [#allocation6], 384
    $region97: #{policy_forward.1} parent=1 // pred_fallthru
      _
    // Predicated region
    $region98: #{policy_forward.1} parent=1 // pred_check
      _
    $region99: #{policy_forward.1} parent=1 // pred_check_branch
      %181 = sbr.rel (0) target = $region101
    $region100: #{policy_forward.1} parent=1 // pred_region
      %182 = dma.done [#allocation6], 128
    $region101: #{policy_forward.1} parent=1 // pred_fallthru
      _
    // Predicated region
    $region102: #{policy_forward.1} parent=1 // pred_check
      _
    $region103: #{policy_forward.1} parent=1 // pred_check_branch
      %184 = sbr.rel (0) target = $region105
    $region104: #{policy_forward.1} parent=1 // pred_region
      %185 = dma.done [#allocation9], 16
    $region105: #{policy_forward.1} parent=1 // pred_fallthru
      _
    // Predicated region
    $region106: #{policy_forward.1} parent=1 // pred_check
      _
    $region107: #{policy_forward.1} parent=1 // pred_check_branch
      %187 = sbr.rel (0) target = $region109
    $region108: #{policy_forward.1} parent=1 // pred_region
      %188 = dma.done [#allocation9], 256
    $region109: #{policy_forward.1} parent=1 // pred_fallthru
      _
    // Predicated region
    $region110: #{policy_forward.1} parent=1 // pred_check
      _
    $region111: #{policy_forward.1} parent=1 // pred_check_branch
      %190 = sbr.rel (0) target = $region113
    $region112: #{policy_forward.1} parent=1 // pred_region
      %191 = dma.done [#allocation12], 16
    $region113: #{policy_forward.1} parent=1 // pred_fallthru
      _
    // Predicated region
    $region114: #{policy_forward.1} parent=1 // pred_check
      _
    $region115: #{policy_forward.1} parent=1 // pred_check_branch
      %193 = sbr.rel (0) target = $region117
    $region116: #{policy_forward.1} parent=1 // pred_region
      %194 = dma.done [#allocation12], 16
    $region117: #{policy_forward.1} parent=1 // pred_fallthru
      _
    // Predicated region
    $region118: #{policy_forward.1} parent=1 // pred_check
      _
    $region119: #{policy_forward.1} parent=1 // pred_check_branch
      %196 = sbr.rel (0) target = $region121
    $region120: #{policy_forward.1} parent=1 // pred_region
      %197 = dma.done [#allocation15], 512
    $region121: #{policy_forward.1} parent=1 // pred_fallthru
      _
    // Predicated region
    $region122: #{policy_forward.1} parent=1 // pred_check
      _
    $region123: #{policy_forward.1} parent=1 // pred_check_branch
      %199 = sbr.rel (0) target = $region125
    $region124: #{policy_forward.1} parent=1 // pred_region
      %200 = dma.done [#allocation15], 16
    $region125: #{policy_forward.1} parent=1 // pred_fallthru
      _
    // Predicated region
    $region126: #{policy_forward.1} parent=1 // pred_check
      _
    $region127: #{policy_forward.1} parent=1 // pred_check_branch
      %202 = sbr.rel (0) target = $region129
    $region128: #{policy_forward.1} parent=1 // pred_region
      %203 = dma.done [#allocation18], 16
    $region129: #{policy_forward.1} parent=1 // pred_fallthru
      _
    // Predicated region
    $region130: #{policy_forward.1} parent=1 // pred_check
      _
    $region131: #{policy_forward.1} parent=1 // pred_check_branch
      %205 = sbr.rel (0) target = $region133
    $region132: #{policy_forward.1} parent=1 // pred_region
      %206 = dma.done [#allocation18], 16
    $region133: #{policy_forward.1} parent=1 // pred_fallthru
      _
    %v207 = vld [vmem:[%s0] sm:$0xff]
    %v208 = vld [vmem:[%s0 + $0x8] sm:$0xff]
    %v209 = vld [vmem:[%s0 + $0x10] sm:$0xff]
    %v210 = vld [vmem:[%s0 + $0x18] sm:$0xff]
    %v211 = vld [vmem:[%s2] sm:$0xff]
    %v212 = vld [vmem:[%s2 + $0x8] sm:$0xff]
    %vm213 = vcmask 261120
    %v215 = vsel %vm213, %v211, 0
    %v218 = vsel %vm213, %v212, 0
    %220 = vmatprep.subr.mxu0 0.0
    %221 = vmatpush1.msra.mxu0 0.0
    %222 = vmatprep.subr.mxu0 0.0
    %223 = vmatpush1.msra.mxu0 0.0
    %224 = vmatprep.subr.mxu0 0.0
    %225 = vmatpush1.msra.mxu0 0.0
    %226 = vmatprep.subr.mxu0 0.0
    %227 = vmatpush1.msra.mxu0 0.0
    %228 = vmatprep.subr.mxu0 0.0
    %229 = vmatpush1.msra.mxu0 0.0
    %230 = vmatprep.subr.mxu0 0.0
    %231 = vmatpush1.msra.mxu0 0.0
    %232 = vmatprep.subr.mxu0 0.0
    %233 = vmatpush1.msra.mxu0 0.0
    %234 = vmatprep.subr.mxu0 0.0
    %235 = vmatpush1.msra.mxu0 0.0
    %236 = vmatprep.subr.mxu0 0.0
    %237 = vmatpush1.msra.mxu0 0.0
    %238 = vmatprep.subr.mxu0 0.0
    %239 = vmatpush1.msra.mxu0 0.0
    %240 = vmatprep.subr.mxu0 0.0
    %241 = vmatpush1.msra.mxu0 0.0
    %242 = vmatprep.subr.mxu0 0.0
    %243 = vmatpush1.msra.mxu0 0.0
    %244 = vmatprep.subr.mxu0 0.0
    %245 = vmatpush1.msra.mxu0 %v210
    %246 = vmatprep.subr.mxu0 0.0
    %247 = vmatpush1.msra.mxu0 %v209
    %248 = vmatprep.subr.mxu0 0.0
    %249 = vmatpush1.msra.mxu0 %v208
    %250 = vmatprep.subr.mxu0 0.0
    %251 = vmatpush1.msra.mxu0 %v207
    %252 = vmatprep.subr.mxu0 0.0
    %253 = vmatpush2.msra.mxu0 0.0
    %254 = vmatprep.subr.mxu0 0.0
    %255 = vmatpush2.msra.mxu0 0.0
    %256 = vmatprep.subr.mxu0 0.0
    %257 = vmatpush2.msra.mxu0 0.0
    %258 = vmatprep.subr.mxu0 0.0
    %259 = vmatpush2.msra.mxu0 0.0
    %260 = vmatprep.subr.mxu0 0.0
    %261 = vmatpush2.msra.mxu0 0.0
    %262 = vmatprep.subr.mxu0 0.0
    %263 = vmatpush2.msra.mxu0 0.0
    %264 = vmatprep.subr.mxu0 0.0
    %265 = vmatpush2.msra.mxu0 0.0
    %266 = vmatprep.subr.mxu0 0.0
    %267 = vmatpush2.msra.mxu0 0.0
    %268 = vmatprep.subr.mxu0 0.0
    %269 = vmatpush2.msra.mxu0 0.0
    %270 = vmatprep.subr.mxu0 0.0
    %271 = vmatpush2.msra.mxu0 0.0
    %272 = vmatprep.subr.mxu0 0.0
    %273 = vmatpush2.msra.mxu0 0.0
    %274 = vmatprep.subr.mxu0 0.0
    %275 = vmatpush2.msra.mxu0 0.0
    %276 = vmatprep.subr.mxu0 0.0
    %277 = vmatpush2.msra.mxu0 0.0
    %278 = vmatprep.subr.mxu0 0.0
    %279 = vmatpush2.msra.mxu0 0.0
    %280 = vmatprep.subr.mxu0 0.0
    %281 = vmatpush2.msra.mxu0 0.0
    %282 = vmatprep.subr.mxu0 0.0
    %283 = vmatpush2.msra.mxu0 0.0
    %284 = vmatprep.mubr.f32.mxu0 0.0
    %285 = vmatmul.mubr.f32.gmra.mxu0 %v215
    %v286 = vpop.f32.mrf.mxu0
    %v287 = vadd.f32 0.0, %v286
    %v288 = vpop.f32.mrf.mxu0
    %289 = vmatprep.mubr.f32.mxu0 0.0
    %290 = vmatmul.mubr.f32.gmra.mxu0 %v218
    %v291 = vpop.f32.mrf.mxu0
    %v292 = vadd.f32 0.0, %v291
    %v293 = vpop.f32.mrf.mxu0
    %294 = vdwg.mxu0
    %v295 = vld [vmem:[%s3] sm:$0xff]
    %v296 = vld [vmem:[%s3 + $0x8] sm:$0xff]
    %v297 = vld [vmem:[%s3 + $0x10] sm:$0xff]
    %v298 = vld [vmem:[%s3 + $0x18] sm:$0xff]
    %v299 = vld [vmem:[%s3 + $0x20] sm:$0xff]
    %v300 = vld [vmem:[%s3 + $0x28] sm:$0xff]
    %v301 = vld [vmem:[%s3 + $0x30] sm:$0xff]
    %v302 = vld [vmem:[%s3 + $0x38] sm:$0xff]
    %v303 = vld [vmem:[%s3 + $0x40] sm:$0xff]
    %v304 = vld [vmem:[%s3 + $0x48] sm:$0xff]
    %v305 = vld [vmem:[%s3 + $0x50] sm:$0xff]
    %v306 = vld [vmem:[%s3 + $0x58] sm:$0xff]
    %v307 = vld [vmem:[%s3 + $0x60] sm:$0xff]
    %v308 = vld [vmem:[%s3 + $0x68] sm:$0xff]
    %v309 = vld [vmem:[%s3 + $0x70] sm:$0xff]
    %v310 = vld [vmem:[%s3 + $0x78] sm:$0xff]
    %s311 = scalar_lea.vmem %s2, 16
    %v312 = vld [vmem:[%s311] sm:$0xff]
    %v313 = vld [vmem:[%s311 + $0x8] sm:$0xff]
    %v315 = vsel %vm213, %v312, 0
    %v318 = vsel %vm213, %v313, 0
    %320 = vmatprep.subr.mxu0 0.0
    %321 = vmatpush1.msra.mxu0 0.0
    %322 = vmatprep.subr.mxu0 0.0
    %323 = vmatpush1.msra.mxu0 0.0
    %324 = vmatprep.subr.mxu0 0.0
    %325 = vmatpush1.msra.mxu0 0.0
    %326 = vmatprep.subr.mxu0 0.0
    %327 = vmatpush1.msra.mxu0 0.0
    %328 = vmatprep.subr.mxu0 0.0
    %329 = vmatpush1.msra.mxu0 0.0
    %330 = vmatprep.subr.mxu0 0.0
    %331 = vmatpush1.msra.mxu0 0.0
    %332 = vmatprep.subr.mxu0 0.0
    %333 = vmatpush1.msra.mxu0 0.0
    %334 = vmatprep.subr.mxu0 0.0
    %335 = vmatpush1.msra.mxu0 0.0
    %336 = vmatprep.subr.mxu0 0.0
    %337 = vmatpush1.msra.mxu0 0.0
    %338 = vmatprep.subr.mxu0 0.0
    %339 = vmatpush1.msra.mxu0 0.0
    %340 = vmatprep.subr.mxu0 0.0
    %341 = vmatpush1.msra.mxu0 0.0
    %342 = vmatprep.subr.mxu0 0.0
    %343 = vmatpush1.msra.mxu0 0.0
    %344 = vmatprep.subr.mxu0 0.0
    %345 = vmatpush1.msra.mxu0 %v210
    %346 = vmatprep.subr.mxu0 0.0
    %347 = vmatpush1.msra.mxu0 %v209
    %348 = vmatprep.subr.mxu0 0.0
    %349 = vmatpush1.msra.mxu0 %v208
    %350 = vmatprep.subr.mxu0 0.0
    %351 = vmatpush1.msra.mxu0 %v207
    %352 = vmatprep.subr.mxu0 0.0
    %353 = vmatpush2.msra.mxu0 0.0
    %354 = vmatprep.subr.mxu0 0.0
    %355 = vmatpush2.msra.mxu0 0.0
    %356 = vmatprep.subr.mxu0 0.0
    %357 = vmatpush2.msra.mxu0 0.0
    %358 = vmatprep.subr.mxu0 0.0
    %359 = vmatpush2.msra.mxu0 0.0
    %360 = vmatprep.subr.mxu0 0.0
    %361 = vmatpush2.msra.mxu0 0.0
    %362 = vmatprep.subr.mxu0 0.0
    %363 = vmatpush2.msra.mxu0 0.0
    %364 = vmatprep.subr.mxu0 0.0
    %365 = vmatpush2.msra.mxu0 0.0
    %366 = vmatprep.subr.mxu0 0.0
    %367 = vmatpush2.msra.mxu0 0.0
    %368 = vmatprep.subr.mxu0 0.0
    %369 = vmatpush2.msra.mxu0 0.0
    %370 = vmatprep.subr.mxu0 0.0
    %371 = vmatpush2.msra.mxu0 0.0
    %372 = vmatprep.subr.mxu0 0.0
    %373 = vmatpush2.msra.mxu0 0.0
    %374 = vmatprep.subr.mxu0 0.0
    %375 = vmatpush2.msra.mxu0 0.0
    %376 = vmatprep.subr.mxu0 0.0
    %377 = vmatpush2.msra.mxu0 0.0
    %378 = vmatprep.subr.mxu0 0.0
    %379 = vmatpush2.msra.mxu0 0.0
    %380 = vmatprep.subr.mxu0 0.0
    %381 = vmatpush2.msra.mxu0 0.0
    %382 = vmatprep.subr.mxu0 0.0
    %383 = vmatpush2.msra.mxu0 0.0
    %384 = vmatprep.mubr.f32.mxu0 0.0
    %385 = vmatmul.mubr.f32.gmra.mxu0 %v315
    %v386 = vpop.f32.mrf.mxu0
    %v387 = vadd.f32 0.0, %v386
    %v388 = vpop.f32.mrf.mxu0
    %389 = vmatprep.mubr.f32.mxu0 0.0
    %390 = vmatmul.mubr.f32.gmra.mxu0 %v318
    %v391 = vpop.f32.mrf.mxu0
    %v392 = vadd.f32 0.0, %v391
    %v393 = vpop.f32.mrf.mxu0
    %394 = vdwg.mxu0
    %s395 = scalar_lea.vmem %s3, 128
    %v396 = vld [vmem:[%s395] sm:$0xff]
    %v397 = vld [vmem:[%s395 + $0x8] sm:$0xff]
    %v398 = vld [vmem:[%s395 + $0x10] sm:$0xff]
    %v399 = vld [vmem:[%s395 + $0x18] sm:$0xff]
    %v400 = vld [vmem:[%s395 + $0x20] sm:$0xff]
    %v401 = vld [vmem:[%s395 + $0x28] sm:$0xff]
    %v402 = vld [vmem:[%s395 + $0x30] sm:$0xff]
    %v403 = vld [vmem:[%s395 + $0x38] sm:$0xff]
    %v404 = vld [vmem:[%s395 + $0x40] sm:$0xff]
    %v405 = vld [vmem:[%s395 + $0x48] sm:$0xff]
    %v406 = vld [vmem:[%s395 + $0x50] sm:$0xff]
    %v407 = vld [vmem:[%s395 + $0x58] sm:$0xff]
    %v408 = vld [vmem:[%s395 + $0x60] sm:$0xff]
    %v409 = vld [vmem:[%s395 + $0x68] sm:$0xff]
    %v410 = vld [vmem:[%s395 + $0x70] sm:$0xff]
    %v411 = vld [vmem:[%s395 + $0x78] sm:$0xff]
    %vm412 = vcmask 523264
    %v414 = vsel %vm412, %v387, 0
    %v417 = vsel %vm412, %v392, 0
    %419 = vmatprep.subr.mxu0 0.0
    %420 = vmatpush1.msra.mxu0 0.0
    %421 = vmatprep.subr.mxu0 0.0
    %422 = vmatpush1.msra.mxu0 0.0
    %423 = vmatprep.subr.mxu0 0.0
    %424 = vmatpush1.msra.mxu0 0.0
    %425 = vmatprep.subr.mxu0 0.0
    %426 = vmatpush1.msra.mxu0 0.0
    %427 = vmatprep.subr.mxu0 0.0
    %428 = vmatpush1.msra.mxu0 0.0
    %429 = vmatprep.subr.mxu0 0.0
    %430 = vmatpush1.msra.mxu0 0.0
    %431 = vmatprep.subr.mxu0 0.0
    %432 = vmatpush1.msra.mxu0 0.0
    %433 = vmatprep.subr.mxu0 0.0
    %434 = vmatpush1.msra.mxu0 0.0
    %435 = vmatprep.subr.mxu0 %v411
    %436 = vmatpush1.msra.mxu0 %v410
    %437 = vmatprep.subr.mxu0 %v409
    %438 = vmatpush1.msra.mxu0 %v408
    %439 = vmatprep.subr.mxu0 %v407
    %440 = vmatpush1.msra.mxu0 %v406
    %441 = vmatprep.subr.mxu0 %v405
    %442 = vmatpush1.msra.mxu0 %v404
    %443 = vmatprep.subr.mxu0 %v403
    %444 = vmatpush1.msra.mxu0 %v402
    %445 = vmatprep.subr.mxu0 %v401
    %446 = vmatpush1.msra.mxu0 %v400
    %447 = vmatprep.subr.mxu0 %v399
    %448 = vmatpush1.msra.mxu0 %v398
    %449 = vmatprep.subr.mxu0 %v397
    %450 = vmatpush1.msra.mxu0 %v396
    %451 = vmatprep.subr.mxu0 0.0
    %452 = vmatpush2.msra.mxu0 0.0
    %453 = vmatprep.subr.mxu0 0.0
    %454 = vmatpush2.msra.mxu0 0.0
    %455 = vmatprep.subr.mxu0 0.0
    %456 = vmatpush2.msra.mxu0 0.0
    %457 = vmatprep.subr.mxu0 0.0
    %458 = vmatpush2.msra.mxu0 0.0
    %459 = vmatprep.subr.mxu0 0.0
    %460 = vmatpush2.msra.mxu0 0.0
    %461 = vmatprep.subr.mxu0 0.0
    %462 = vmatpush2.msra.mxu0 0.0
    %463 = vmatprep.subr.mxu0 0.0
    %464 = vmatpush2.msra.mxu0 0.0
    %465 = vmatprep.subr.mxu0 0.0
    %466 = vmatpush2.msra.mxu0 0.0
    %467 = vmatprep.subr.mxu0 0.0
    %468 = vmatpush2.msra.mxu0 0.0
    %469 = vmatprep.subr.mxu0 0.0
    %470 = vmatpush2.msra.mxu0 0.0
    %471 = vmatprep.subr.mxu0 0.0
    %472 = vmatpush2.msra.mxu0 0.0
    %473 = vmatprep.subr.mxu0 0.0
    %474 = vmatpush2.msra.mxu0 0.0
    %475 = vmatprep.subr.mxu0 0.0
    %476 = vmatpush2.msra.mxu0 0.0
    %477 = vmatprep.subr.mxu0 0.0
    %478 = vmatpush2.msra.mxu0 0.0
    %479 = vmatprep.subr.mxu0 0.0
    %480 = vmatpush2.msra.mxu0 0.0
    %481 = vmatprep.subr.mxu0 0.0
    %482 = vmatpush2.msra.mxu0 0.0
    %483 = vmatprep.mubr.f32.mxu0 0.0
    %484 = vmatmul.mubr.f32.gmra.mxu0 %v414
    %v485 = vpop.f32.mrf.mxu0
    %v486 = vadd.f32 0.0, %v485
    %v487 = vpop.f32.mrf.mxu0
    %v488 = vadd.f32 0.0, %v487
    %489 = vmatprep.mubr.f32.mxu0 0.0
    %490 = vmatmul.mubr.f32.gmra.mxu0 %v417
    %v491 = vpop.f32.mrf.mxu0
    %v492 = vadd.f32 0.0, %v491
    %v493 = vpop.f32.mrf.mxu0
    %v494 = vadd.f32 0.0, %v493
    %495 = vdwg.mxu0
    %v497 = vsel %vm412, %v287, 0
    %v500 = vsel %vm412, %v292, 0
    %502 = vmatprep.subr.mxu0 0.0
    %503 = vmatpush1.msra.mxu0 0.0
    %504 = vmatprep.subr.mxu0 0.0
    %505 = vmatpush1.msra.mxu0 0.0
    %506 = vmatprep.subr.mxu0 0.0
    %507 = vmatpush1.msra.mxu0 0.0
    %508 = vmatprep.subr.mxu0 0.0
    %509 = vmatpush1.msra.mxu0 0.0
    %510 = vmatprep.subr.mxu0 0.0
    %511 = vmatpush1.msra.mxu0 0.0
    %512 = vmatprep.subr.mxu0 0.0
    %513 = vmatpush1.msra.mxu0 0.0
    %514 = vmatprep.subr.mxu0 0.0
    %515 = vmatpush1.msra.mxu0 0.0
    %516 = vmatprep.subr.mxu0 0.0
    %517 = vmatpush1.msra.mxu0 0.0
    %518 = vmatprep.subr.mxu0 %v310
    %519 = vmatpush1.msra.mxu0 %v309
    %520 = vmatprep.subr.mxu0 %v308
    %521 = vmatpush1.msra.mxu0 %v307
    %522 = vmatprep.subr.mxu0 %v306
    %523 = vmatpush1.msra.mxu0 %v305
    %524 = vmatprep.subr.mxu0 %v304
    %525 = vmatpush1.msra.mxu0 %v303
    %526 = vmatprep.subr.mxu0 %v302
    %527 = vmatpush1.msra.mxu0 %v301
    %528 = vmatprep.subr.mxu0 %v300
    %529 = vmatpush1.msra.mxu0 %v299
    %530 = vmatprep.subr.mxu0 %v298
    %531 = vmatpush1.msra.mxu0 %v297
    %532 = vmatprep.subr.mxu0 %v296
    %533 = vmatpush1.msra.mxu0 %v295
    %534 = vmatprep.subr.mxu0 0.0
    %535 = vmatpush2.msra.mxu0 0.0
    %536 = vmatprep.subr.mxu0 0.0
    %537 = vmatpush2.msra.mxu0 0.0
    %538 = vmatprep.subr.mxu0 0.0
    %539 = vmatpush2.msra.mxu0 0.0
    %540 = vmatprep.subr.mxu0 0.0
    %541 = vmatpush2.msra.mxu0 0.0
    %542 = vmatprep.subr.mxu0 0.0
    %543 = vmatpush2.msra.mxu0 0.0
    %544 = vmatprep.subr.mxu0 0.0
    %545 = vmatpush2.msra.mxu0 0.0
    %546 = vmatprep.subr.mxu0 0.0
    %547 = vmatpush2.msra.mxu0 0.0
    %548 = vmatprep.subr.mxu0 0.0
    %549 = vmatpush2.msra.mxu0 0.0
    %550 = vmatprep.subr.mxu0 0.0
    %551 = vmatpush2.msra.mxu0 0.0
    %552 = vmatprep.subr.mxu0 0.0
    %553 = vmatpush2.msra.mxu0 0.0
    %554 = vmatprep.subr.mxu0 0.0
    %555 = vmatpush2.msra.mxu0 0.0
    %556 = vmatprep.subr.mxu0 0.0
    %557 = vmatpush2.msra.mxu0 0.0
    %558 = vmatprep.subr.mxu0 0.0
    %559 = vmatpush2.msra.mxu0 0.0
    %560 = vmatprep.subr.mxu0 0.0
    %561 = vmatpush2.msra.mxu0 0.0
    %562 = vmatprep.subr.mxu0 0.0
    %563 = vmatpush2.msra.mxu0 0.0
    %564 = vmatprep.subr.mxu0 0.0
    %565 = vmatpush2.msra.mxu0 0.0
    %566 = vmatprep.mubr.f32.mxu0 0.0
    %567 = vmatmul.mubr.f32.gmra.mxu0 %v497
    %v568 = vpop.f32.mrf.mxu0
    %v569 = vadd.f32 %v486, %v568
    %v570 = vpop.f32.mrf.mxu0
    %v571 = vadd.f32 %v488, %v570
    %572 = vmatprep.mubr.f32.mxu0 0.0
    %573 = vmatmul.mubr.f32.gmra.mxu0 %v500
    %v574 = vpop.f32.mrf.mxu0
    %v575 = vadd.f32 %v492, %v574
    %v576 = vpop.f32.mrf.mxu0
    %v577 = vadd.f32 %v494, %v576
    %578 = vdwg.mxu0
    %s579 = scalar_lea.vmem %s2, 32
    %v580 = vld [vmem:[%s579] sm:$0xff]
    %v581 = vld [vmem:[%s579 + $0x8] sm:$0xff]
    %v583 = vsel %vm213, %v580, 0
    %v586 = vsel %vm213, %v581, 0
    %588 = vmatprep.subr.mxu0 0.0
    %589 = vmatpush1.msra.mxu0 0.0
    %590 = vmatprep.subr.mxu0 0.0
    %591 = vmatpush1.msra.mxu0 0.0
    %592 = vmatprep.subr.mxu0 0.0
    %593 = vmatpush1.msra.mxu0 0.0
    %594 = vmatprep.subr.mxu0 0.0
    %595 = vmatpush1.msra.mxu0 0.0
    %596 = vmatprep.subr.mxu0 0.0
    %597 = vmatpush1.msra.mxu0 0.0
    %598 = vmatprep.subr.mxu0 0.0
    %599 = vmatpush1.msra.mxu0 0.0
    %600 = vmatprep.subr.mxu0 0.0
    %601 = vmatpush1.msra.mxu0 0.0
    %602 = vmatprep.subr.mxu0 0.0
    %603 = vmatpush1.msra.mxu0 0.0
    %604 = vmatprep.subr.mxu0 0.0
    %605 = vmatpush1.msra.mxu0 0.0
    %606 = vmatprep.subr.mxu0 0.0
    %607 = vmatpush1.msra.mxu0 0.0
    %608 = vmatprep.subr.mxu0 0.0
    %609 = vmatpush1.msra.mxu0 0.0
    %610 = vmatprep.subr.mxu0 0.0
    %611 = vmatpush1.msra.mxu0 0.0
    %612 = vmatprep.subr.mxu0 0.0
    %613 = vmatpush1.msra.mxu0 %v210
    %614 = vmatprep.subr.mxu0 0.0
    %615 = vmatpush1.msra.mxu0 %v209
    %616 = vmatprep.subr.mxu0 0.0
    %617 = vmatpush1.msra.mxu0 %v208
    %618 = vmatprep.subr.mxu0 0.0
    %619 = vmatpush1.msra.mxu0 %v207
    %620 = vmatprep.subr.mxu0 0.0
    %621 = vmatpush2.msra.mxu0 0.0
    %622 = vmatprep.subr.mxu0 0.0
    %623 = vmatpush2.msra.mxu0 0.0
    %624 = vmatprep.subr.mxu0 0.0
    %625 = vmatpush2.msra.mxu0 0.0
    %626 = vmatprep.subr.mxu0 0.0
    %627 = vmatpush2.msra.mxu0 0.0
    %628 = vmatprep.subr.mxu0 0.0
    %629 = vmatpush2.msra.mxu0 0.0
    %630 = vmatprep.subr.mxu0 0.0
    %631 = vmatpush2.msra.mxu0 0.0
    %632 = vmatprep.subr.mxu0 0.0
    %633 = vmatpush2.msra.mxu0 0.0
    %634 = vmatprep.subr.mxu0 0.0
    %635 = vmatpush2.msra.mxu0 0.0
    %636 = vmatprep.subr.mxu0 0.0
    %637 = vmatpush2.msra.mxu0 0.0
    %638 = vmatprep.subr.mxu0 0.0
    %639 = vmatpush2.msra.mxu0 0.0
    %640 = vmatprep.subr.mxu0 0.0
    %641 = vmatpush2.msra.mxu0 0.0
    %642 = vmatprep.subr.mxu0 0.0
    %643 = vmatpush2.msra.mxu0 0.0
    %644 = vmatprep.subr.mxu0 0.0
    %645 = vmatpush2.msra.mxu0 0.0
    %646 = vmatprep.subr.mxu0 0.0
    %647 = vmatpush2.msra.mxu0 0.0
    %648 = vmatprep.subr.mxu0 0.0
    %649 = vmatpush2.msra.mxu0 0.0
    %650 = vmatprep.subr.mxu0 0.0
    %651 = vmatpush2.msra.mxu0 0.0
    %652 = vmatprep.mubr.f32.mxu0 0.0
    %653 = vmatmul.mubr.f32.gmra.mxu0 %v583
    %v654 = vpop.f32.mrf.mxu0
    %v655 = vadd.f32 0.0, %v654
    %v656 = vpop.f32.mrf.mxu0
    %657 = vmatprep.mubr.f32.mxu0 0.0
    %658 = vmatmul.mubr.f32.gmra.mxu0 %v586
    %v659 = vpop.f32.mrf.mxu0
    %v660 = vadd.f32 0.0, %v659
    %v661 = vpop.f32.mrf.mxu0
    %662 = vdwg.mxu0
    %s663 = scalar_lea.vmem %s3, 256
    %v664 = vld [vmem:[%s663] sm:$0xff]
    %v665 = vld [vmem:[%s663 + $0x8] sm:$0xff]
    %v666 = vld [vmem:[%s663 + $0x10] sm:$0xff]
    %v667 = vld [vmem:[%s663 + $0x18] sm:$0xff]
    %v668 = vld [vmem:[%s663 + $0x20] sm:$0xff]
    %v669 = vld [vmem:[%s663 + $0x28] sm:$0xff]
    %v670 = vld [vmem:[%s663 + $0x30] sm:$0xff]
    %v671 = vld [vmem:[%s663 + $0x38] sm:$0xff]
    %v672 = vld [vmem:[%s663 + $0x40] sm:$0xff]
    %v673 = vld [vmem:[%s663 + $0x48] sm:$0xff]
    %v674 = vld [vmem:[%s663 + $0x50] sm:$0xff]
    %v675 = vld [vmem:[%s663 + $0x58] sm:$0xff]
    %v676 = vld [vmem:[%s663 + $0x60] sm:$0xff]
    %v677 = vld [vmem:[%s663 + $0x68] sm:$0xff]
    %v678 = vld [vmem:[%s663 + $0x70] sm:$0xff]
    %v679 = vld [vmem:[%s663 + $0x78] sm:$0xff]
    %v681 = vsel %vm412, %v655, 0
    %v684 = vsel %vm412, %v660, 0
    %686 = vmatprep.subr.mxu0 0.0
    %687 = vmatpush1.msra.mxu0 0.0
    %688 = vmatprep.subr.mxu0 0.0
    %689 = vmatpush1.msra.mxu0 0.0
    %690 = vmatprep.subr.mxu0 0.0
    %691 = vmatpush1.msra.mxu0 0.0
    %692 = vmatprep.subr.mxu0 0.0
    %693 = vmatpush1.msra.mxu0 0.0
    %694 = vmatprep.subr.mxu0 0.0
    %695 = vmatpush1.msra.mxu0 0.0
    %696 = vmatprep.subr.mxu0 0.0
    %697 = vmatpush1.msra.mxu0 0.0
    %698 = vmatprep.subr.mxu0 0.0
    %699 = vmatpush1.msra.mxu0 0.0
    %700 = vmatprep.subr.mxu0 0.0
    %701 = vmatpush1.msra.mxu0 0.0
    %702 = vmatprep.subr.mxu0 %v679
    %703 = vmatpush1.msra.mxu0 %v678
    %704 = vmatprep.subr.mxu0 %v677
    %705 = vmatpush1.msra.mxu0 %v676
    %706 = vmatprep.subr.mxu0 %v675
    %707 = vmatpush1.msra.mxu0 %v674
    %708 = vmatprep.subr.mxu0 %v673
    %709 = vmatpush1.msra.mxu0 %v672
    %710 = vmatprep.subr.mxu0 %v671
    %711 = vmatpush1.msra.mxu0 %v670
    %712 = vmatprep.subr.mxu0 %v669
    %713 = vmatpush1.msra.mxu0 %v668
    %714 = vmatprep.subr.mxu0 %v667
    %715 = vmatpush1.msra.mxu0 %v666
    %716 = vmatprep.subr.mxu0 %v665
    %717 = vmatpush1.msra.mxu0 %v664
    %718 = vmatprep.subr.mxu0 0.0
    %719 = vmatpush2.msra.mxu0 0.0
    %720 = vmatprep.subr.mxu0 0.0
    %721 = vmatpush2.msra.mxu0 0.0
    %722 = vmatprep.subr.mxu0 0.0
    %723 = vmatpush2.msra.mxu0 0.0
    %724 = vmatprep.subr.mxu0 0.0
    %725 = vmatpush2.msra.mxu0 0.0
    %726 = vmatprep.subr.mxu0 0.0
    %727 = vmatpush2.msra.mxu0 0.0
    %728 = vmatprep.subr.mxu0 0.0
    %729 = vmatpush2.msra.mxu0 0.0
    %730 = vmatprep.subr.mxu0 0.0
    %731 = vmatpush2.msra.mxu0 0.0
    %732 = vmatprep.subr.mxu0 0.0
    %733 = vmatpush2.msra.mxu0 0.0
    %734 = vmatprep.subr.mxu0 0.0
    %735 = vmatpush2.msra.mxu0 0.0
    %736 = vmatprep.subr.mxu0 0.0
    %737 = vmatpush2.msra.mxu0 0.0
    %738 = vmatprep.subr.mxu0 0.0
    %739 = vmatpush2.msra.mxu0 0.0
    %740 = vmatprep.subr.mxu0 0.0
    %741 = vmatpush2.msra.mxu0 0.0
    %742 = vmatprep.subr.mxu0 0.0
    %743 = vmatpush2.msra.mxu0 0.0
    %744 = vmatprep.subr.mxu0 0.0
    %745 = vmatpush2.msra.mxu0 0.0
    %746 = vmatprep.subr.mxu0 0.0
    %747 = vmatpush2.msra.mxu0 0.0
    %748 = vmatprep.subr.mxu0 0.0
    %749 = vmatpush2.msra.mxu0 0.0
    %750 = vmatprep.mubr.f32.mxu0 0.0
    %751 = vmatmul.mubr.f32.gmra.mxu0 %v681
    %v752 = vpop.f32.mrf.mxu0
    %v753 = vadd.f32 0.0, %v752
    %v754 = vpop.f32.mrf.mxu0
    %v755 = vadd.f32 0.0, %v754
    %756 = vmatprep.mubr.f32.mxu0 0.0
    %757 = vmatmul.mubr.f32.gmra.mxu0 %v684
    %v758 = vpop.f32.mrf.mxu0
    %v759 = vadd.f32 0.0, %v758
    %v760 = vpop.f32.mrf.mxu0
    %v761 = vadd.f32 0.0, %v760
    %762 = vdwg.mxu0
    %v763 = vadd.f32 %v569, %v753
    %v764 = vadd.f32 %v571, %v755
    %v765 = vadd.f32 %v575, %v759
    %v766 = vadd.f32 %v577, %v761
    %v767 = vld [vmem:[#allocation2] sm:$0x3]
    %v769 = vlaneseq
    %v770 = vshrl.u32 %v769, 7
    %v771 = vsub.s32 0, %v770
    %v772 = vrot.slane %v767, %v771
    %v773 = vlaneseq
    %v774 = vshrl.u32 %v773, 7
    %v775 = vsub.s32 1, %v774
    %v776 = vrot.slane %v767, %v775
    %v779 = vadd.f32 %v763, %v772
    %v780 = vadd.f32 %v764, %v776
    %v781 = vadd.f32 %v765, %v772
    %v782 = vadd.f32 %v766, %v776
    %v783 = vmax.f32 %v779, 0.0
    %v784 = vmax.f32 %v780, 0.0
    %v785 = vmax.f32 %v781, 0.0
    %v786 = vmax.f32 %v782, 0.0
    %v787 = vld [vmem:[#allocation5] sm:$0xff]
    %vm788 = vcmask 130048
    %v790 = vsel %vm788, %v787, 0
    %792 = vmatprep.subr.mxu0 0.0
    %793 = vmatpush1.msra.mxu0 0.0
    %794 = vmatprep.subr.mxu0 0.0
    %795 = vmatpush1.msra.mxu0 0.0
    %796 = vmatprep.subr.mxu0 0.0
    %797 = vmatpush1.msra.mxu0 0.0
    %798 = vmatprep.subr.mxu0 0.0
    %799 = vmatpush1.msra.mxu0 0.0
    %800 = vmatprep.subr.mxu0 0.0
    %801 = vmatpush1.msra.mxu0 0.0
    %802 = vmatprep.subr.mxu0 0.0
    %803 = vmatpush1.msra.mxu0 0.0
    %804 = vmatprep.subr.mxu0 0.0
    %805 = vmatpush1.msra.mxu0 0.0
    %806 = vmatprep.subr.mxu0 0.0
    %807 = vmatpush1.msra.mxu0 0.0
    %808 = vmatprep.subr.mxu0 0.0
    %809 = vmatpush1.msra.mxu0 0.0
    %810 = vmatprep.subr.mxu0 0.0
    %811 = vmatpush1.msra.mxu0 0.0
    %812 = vmatprep.subr.mxu0 0.0
    %813 = vmatpush1.msra.mxu0 0.0
    %814 = vmatprep.subr.mxu0 0.0
    %815 = vmatpush1.msra.mxu0 0.0
    %816 = vmatprep.subr.mxu0 0.0
    %817 = vmatpush1.msra.mxu0 0.0
    %818 = vmatprep.subr.mxu0 0.0
    %819 = vmatpush1.msra.mxu0 0.0
    %820 = vmatprep.subr.mxu0 %v786
    %821 = vmatpush1.msra.mxu0 %v785
    %822 = vmatprep.subr.mxu0 %v784
    %823 = vmatpush1.msra.mxu0 %v783
    %824 = vmatprep.subr.mxu0 0.0
    %825 = vmatpush2.msra.mxu0 0.0
    %826 = vmatprep.subr.mxu0 0.0
    %827 = vmatpush2.msra.mxu0 0.0
    %828 = vmatprep.subr.mxu0 0.0
    %829 = vmatpush2.msra.mxu0 0.0
    %830 = vmatprep.subr.mxu0 0.0
    %831 = vmatpush2.msra.mxu0 0.0
    %832 = vmatprep.subr.mxu0 0.0
    %833 = vmatpush2.msra.mxu0 0.0
    %834 = vmatprep.subr.mxu0 0.0
    %835 = vmatpush2.msra.mxu0 0.0
    %836 = vmatprep.subr.mxu0 0.0
    %837 = vmatpush2.msra.mxu0 0.0
    %838 = vmatprep.subr.mxu0 0.0
    %839 = vmatpush2.msra.mxu0 0.0
    %840 = vmatprep.subr.mxu0 0.0
    %841 = vmatpush2.msra.mxu0 0.0
    %842 = vmatprep.subr.mxu0 0.0
    %843 = vmatpush2.msra.mxu0 0.0
    %844 = vmatprep.subr.mxu0 0.0
    %845 = vmatpush2.msra.mxu0 0.0
    %846 = vmatprep.subr.mxu0 0.0
    %847 = vmatpush2.msra.mxu0 0.0
    %848 = vmatprep.subr.mxu0 0.0
    %849 = vmatpush2.msra.mxu0 0.0
    %850 = vmatprep.subr.mxu0 0.0
    %851 = vmatpush2.msra.mxu0 0.0
    %852 = vmatprep.subr.mxu0 0.0
    %853 = vmatpush2.msra.mxu0 0.0
    %854 = vmatprep.subr.mxu0 0.0
    %855 = vmatpush2.msra.mxu0 0.0
    %856 = vmatprep.mubr.f32.mxu0 0.0
    %857 = vmatmul.mubr.f32.gmra.mxu0 %v790
    %v858 = vpop.f32.mrf.mxu0
    %v859 = vadd.f32 0.0, %v858
    %v860 = vpop.f32.mrf.mxu0
    %v861 = vadd.f32 0.0, %v860
    %862 = vdwg.mxu0
    %v863 = vld [vmem:[%s6] sm:$0xff]
    %v864 = vld [vmem:[%s6 + $0x8] sm:$0xff]
    %v865 = vld [vmem:[%s6 + $0x10] sm:$0xff]
    %v866 = vld [vmem:[%s6 + $0x18] sm:$0xff]
    %v867 = vld [vmem:[%s6 + $0x20] sm:$0xff]
    %v868 = vld [vmem:[%s6 + $0x28] sm:$0xff]
    %v869 = vld [vmem:[%s6 + $0x30] sm:$0xff]
    %v870 = vld [vmem:[%s6 + $0x38] sm:$0xff]
    %v871 = vld [vmem:[%s6 + $0x40] sm:$0xff]
    %v872 = vld [vmem:[%s6 + $0x48] sm:$0xff]
    %v873 = vld [vmem:[%s6 + $0x50] sm:$0xff]
    %v874 = vld [vmem:[%s6 + $0x58] sm:$0xff]
    %v875 = vld [vmem:[%s6 + $0x60] sm:$0xff]
    %v876 = vld [vmem:[%s6 + $0x68] sm:$0xff]
    %v877 = vld [vmem:[%s6 + $0x70] sm:$0xff]
    %v878 = vld [vmem:[%s6 + $0x78] sm:$0xff]
    %v879 = vld [vmem:[%s6 + $0x80] sm:$0xff]
    %v880 = vld [vmem:[%s6 + $0x88] sm:$0xff]
    %v881 = vld [vmem:[%s6 + $0x90] sm:$0xff]
    %v882 = vld [vmem:[%s6 + $0x98] sm:$0xff]
    %v883 = vld [vmem:[%s6 + $0xa0] sm:$0xff]
    %v884 = vld [vmem:[%s6 + $0xa8] sm:$0xff]
    %v885 = vld [vmem:[%s6 + $0xb0] sm:$0xff]
    %v886 = vld [vmem:[%s6 + $0xb8] sm:$0xff]
    %v887 = vld [vmem:[%s6 + $0xc0] sm:$0xff]
    %v888 = vld [vmem:[%s6 + $0xc8] sm:$0xff]
    %v889 = vld [vmem:[%s6 + $0xd0] sm:$0xff]
    %v890 = vld [vmem:[%s6 + $0xd8] sm:$0xff]
    %v891 = vld [vmem:[%s6 + $0xe0] sm:$0xff]
    %v892 = vld [vmem:[%s6 + $0xe8] sm:$0xff]
    %v893 = vld [vmem:[%s6 + $0xf0] sm:$0xff]
    %v894 = vld [vmem:[%s6 + $0xf8] sm:$0xff]
    %s895 = scalar_lea.vmem [#allocation5], 8
    %v896 = vld [vmem:[%s895] sm:$0xff]
    %v898 = vsel %vm788, %v896, 0
    %900 = vmatprep.subr.mxu0 0.0
    %901 = vmatpush1.msra.mxu0 0.0
    %902 = vmatprep.subr.mxu0 0.0
    %903 = vmatpush1.msra.mxu0 0.0
    %904 = vmatprep.subr.mxu0 0.0
    %905 = vmatpush1.msra.mxu0 0.0
    %906 = vmatprep.subr.mxu0 0.0
    %907 = vmatpush1.msra.mxu0 0.0
    %908 = vmatprep.subr.mxu0 0.0
    %909 = vmatpush1.msra.mxu0 0.0
    %910 = vmatprep.subr.mxu0 0.0
    %911 = vmatpush1.msra.mxu0 0.0
    %912 = vmatprep.subr.mxu0 0.0
    %913 = vmatpush1.msra.mxu0 0.0
    %914 = vmatprep.subr.mxu0 0.0
    %915 = vmatpush1.msra.mxu0 0.0
    %916 = vmatprep.subr.mxu0 0.0
    %917 = vmatpush1.msra.mxu0 0.0
    %918 = vmatprep.subr.mxu0 0.0
    %919 = vmatpush1.msra.mxu0 0.0
    %920 = vmatprep.subr.mxu0 0.0
    %921 = vmatpush1.msra.mxu0 0.0
    %922 = vmatprep.subr.mxu0 0.0
    %923 = vmatpush1.msra.mxu0 0.0
    %924 = vmatprep.subr.mxu0 0.0
    %925 = vmatpush1.msra.mxu0 0.0
    %926 = vmatprep.subr.mxu0 0.0
    %927 = vmatpush1.msra.mxu0 0.0
    %928 = vmatprep.subr.mxu0 %v786
    %929 = vmatpush1.msra.mxu0 %v785
    %930 = vmatprep.subr.mxu0 %v784
    %931 = vmatpush1.msra.mxu0 %v783
    %932 = vmatprep.subr.mxu0 0.0
    %933 = vmatpush2.msra.mxu0 0.0
    %934 = vmatprep.subr.mxu0 0.0
    %935 = vmatpush2.msra.mxu0 0.0
    %936 = vmatprep.subr.mxu0 0.0
    %937 = vmatpush2.msra.mxu0 0.0
    %938 = vmatprep.subr.mxu0 0.0
    %939 = vmatpush2.msra.mxu0 0.0
    %940 = vmatprep.subr.mxu0 0.0
    %941 = vmatpush2.msra.mxu0 0.0
    %942 = vmatprep.subr.mxu0 0.0
    %943 = vmatpush2.msra.mxu0 0.0
    %944 = vmatprep.subr.mxu0 0.0
    %945 = vmatpush2.msra.mxu0 0.0
    %946 = vmatprep.subr.mxu0 0.0
    %947 = vmatpush2.msra.mxu0 0.0
    %948 = vmatprep.subr.mxu0 0.0
    %949 = vmatpush2.msra.mxu0 0.0
    %950 = vmatprep.subr.mxu0 0.0
    %951 = vmatpush2.msra.mxu0 0.0
    %952 = vmatprep.subr.mxu0 0.0
    %953 = vmatpush2.msra.mxu0 0.0
    %954 = vmatprep.subr.mxu0 0.0
    %955 = vmatpush2.msra.mxu0 0.0
    %956 = vmatprep.subr.mxu0 0.0
    %957 = vmatpush2.msra.mxu0 0.0
    %958 = vmatprep.subr.mxu0 0.0
    %959 = vmatpush2.msra.mxu0 0.0
    %960 = vmatprep.subr.mxu0 0.0
    %961 = vmatpush2.msra.mxu0 0.0
    %962 = vmatprep.subr.mxu0 0.0
    %963 = vmatpush2.msra.mxu0 0.0
    %964 = vmatprep.mubr.f32.mxu0 0.0
    %965 = vmatmul.mubr.f32.gmra.mxu0 %v898
    %v966 = vpop.f32.mrf.mxu0
    %v967 = vadd.f32 0.0, %v966
    %v968 = vpop.f32.mrf.mxu0
    %v969 = vadd.f32 0.0, %v968
    %970 = vdwg.mxu0
    %s971 = scalar_lea.vmem %s6, 256
    %v972 = vld [vmem:[%s971] sm:$0xff]
    %v973 = vld [vmem:[%s971 + $0x8] sm:$0xff]
    %v974 = vld [vmem:[%s971 + $0x10] sm:$0xff]
    %v975 = vld [vmem:[%s971 + $0x18] sm:$0xff]
    %v976 = vld [vmem:[%s971 + $0x20] sm:$0xff]
    %v977 = vld [vmem:[%s971 + $0x28] sm:$0xff]
    %v978 = vld [vmem:[%s971 + $0x30] sm:$0xff]
    %v979 = vld [vmem:[%s971 + $0x38] sm:$0xff]
    %v980 = vld [vmem:[%s971 + $0x40] sm:$0xff]
    %v981 = vld [vmem:[%s971 + $0x48] sm:$0xff]
    %v982 = vld [vmem:[%s971 + $0x50] sm:$0xff]
    %v983 = vld [vmem:[%s971 + $0x58] sm:$0xff]
    %v984 = vld [vmem:[%s971 + $0x60] sm:$0xff]
    %v985 = vld [vmem:[%s971 + $0x68] sm:$0xff]
    %v986 = vld [vmem:[%s971 + $0x70] sm:$0xff]
    %v987 = vld [vmem:[%s971 + $0x78] sm:$0xff]
    %v988 = vld [vmem:[%s971 + $0x80] sm:$0xff]
    %v989 = vld [vmem:[%s971 + $0x88] sm:$0xff]
    %v990 = vld [vmem:[%s971 + $0x90] sm:$0xff]
    %v991 = vld [vmem:[%s971 + $0x98] sm:$0xff]
    %v992 = vld [vmem:[%s971 + $0xa0] sm:$0xff]
    %v993 = vld [vmem:[%s971 + $0xa8] sm:$0xff]
    %v994 = vld [vmem:[%s971 + $0xb0] sm:$0xff]
    %v995 = vld [vmem:[%s971 + $0xb8] sm:$0xff]
    %v996 = vld [vmem:[%s971 + $0xc0] sm:$0xff]
    %v997 = vld [vmem:[%s971 + $0xc8] sm:$0xff]
    %v998 = vld [vmem:[%s971 + $0xd0] sm:$0xff]
    %v999 = vld [vmem:[%s971 + $0xd8] sm:$0xff]
    %v1000 = vld [vmem:[%s971 + $0xe0] sm:$0xff]
    %v1001 = vld [vmem:[%s971 + $0xe8] sm:$0xff]
    %v1002 = vld [vmem:[%s971 + $0xf0] sm:$0xff]
    %v1003 = vld [vmem:[%s971 + $0xf8] sm:$0xff]
    %1004 = vmatprep.subr.mxu0 0.0
    %1005 = vmatpush1.msra.mxu0 %v987
    %1006 = vmatprep.subr.mxu0 0.0
    %1007 = vmatpush1.msra.mxu0 %v986
    %1008 = vmatprep.subr.mxu0 0.0
    %1009 = vmatpush1.msra.mxu0 %v985
    %1010 = vmatprep.subr.mxu0 0.0
    %1011 = vmatpush1.msra.mxu0 %v984
    %1012 = vmatprep.subr.mxu0 0.0
    %1013 = vmatpush1.msra.mxu0 %v983
    %1014 = vmatprep.subr.mxu0 0.0
    %1015 = vmatpush1.msra.mxu0 %v982
    %1016 = vmatprep.subr.mxu0 0.0
    %1017 = vmatpush1.msra.mxu0 %v981
    %1018 = vmatprep.subr.mxu0 0.0
    %1019 = vmatpush1.msra.mxu0 %v980
    %1020 = vmatprep.subr.mxu0 0.0
    %1021 = vmatpush1.msra.mxu0 %v979
    %1022 = vmatprep.subr.mxu0 0.0
    %1023 = vmatpush1.msra.mxu0 %v978
    %1024 = vmatprep.subr.mxu0 0.0
    %1025 = vmatpush1.msra.mxu0 %v977
    %1026 = vmatprep.subr.mxu0 0.0
    %1027 = vmatpush1.msra.mxu0 %v976
    %1028 = vmatprep.subr.mxu0 0.0
    %1029 = vmatpush1.msra.mxu0 %v975
    %1030 = vmatprep.subr.mxu0 0.0
    %1031 = vmatpush1.msra.mxu0 %v974
    %1032 = vmatprep.subr.mxu0 0.0
    %1033 = vmatpush1.msra.mxu0 %v973
    %1034 = vmatprep.subr.mxu0 0.0
    %1035 = vmatpush1.msra.mxu0 %v972
    %1036 = vmatprep.subr.mxu0 0.0
    %1037 = vmatpush2.msra.mxu0 %v1003
    %1038 = vmatprep.subr.mxu0 0.0
    %1039 = vmatpush2.msra.mxu0 %v1002
    %1040 = vmatprep.subr.mxu0 0.0
    %1041 = vmatpush2.msra.mxu0 %v1001
    %1042 = vmatprep.subr.mxu0 0.0
    %1043 = vmatpush2.msra.mxu0 %v1000
    %1044 = vmatprep.subr.mxu0 0.0
    %1045 = vmatpush2.msra.mxu0 %v999
    %1046 = vmatprep.subr.mxu0 0.0
    %1047 = vmatpush2.msra.mxu0 %v998
    %1048 = vmatprep.subr.mxu0 0.0
    %1049 = vmatpush2.msra.mxu0 %v997
    %1050 = vmatprep.subr.mxu0 0.0
    %1051 = vmatpush2.msra.mxu0 %v996
    %1052 = vmatprep.subr.mxu0 0.0
    %1053 = vmatpush2.msra.mxu0 %v995
    %1054 = vmatprep.subr.mxu0 0.0
    %1055 = vmatpush2.msra.mxu0 %v994
    %1056 = vmatprep.subr.mxu0 0.0
    %1057 = vmatpush2.msra.mxu0 %v993
    %1058 = vmatprep.subr.mxu0 0.0
    %1059 = vmatpush2.msra.mxu0 %v992
    %1060 = vmatprep.subr.mxu0 0.0
    %1061 = vmatpush2.msra.mxu0 %v991
    %1062 = vmatprep.subr.mxu0 0.0
    %1063 = vmatpush2.msra.mxu0 %v990
    %1064 = vmatprep.subr.mxu0 0.0
    %1065 = vmatpush2.msra.mxu0 %v989
    %1066 = vmatprep.subr.mxu0 0.0
    %1067 = vmatpush2.msra.mxu0 %v988
    %1068 = vmatprep.mubr.f32.mxu0 %v969
    %1069 = vmatmul.mubr.f32.gmra.mxu0 %v967
    %v1070 = vpop.f32.mrf.mxu0
    %v1071 = vadd.f32 0.0, %v1070
    %v1072 = vpop.f32.mrf.mxu0
    %1073 = vdwg.mxu0
    %1074 = vmatprep.subr.mxu0 0.0
    %1075 = vmatpush1.msra.mxu0 %v878
    %1076 = vmatprep.subr.mxu0 0.0
    %1077 = vmatpush1.msra.mxu0 %v877
    %1078 = vmatprep.subr.mxu0 0.0
    %1079 = vmatpush1.msra.mxu0 %v876
    %1080 = vmatprep.subr.mxu0 0.0
    %1081 = vmatpush1.msra.mxu0 %v875
    %1082 = vmatprep.subr.mxu0 0.0
    %1083 = vmatpush1.msra.mxu0 %v874
    %1084 = vmatprep.subr.mxu0 0.0
    %1085 = vmatpush1.msra.mxu0 %v873
    %1086 = vmatprep.subr.mxu0 0.0
    %1087 = vmatpush1.msra.mxu0 %v872
    %1088 = vmatprep.subr.mxu0 0.0
    %1089 = vmatpush1.msra.mxu0 %v871
    %1090 = vmatprep.subr.mxu0 0.0
    %1091 = vmatpush1.msra.mxu0 %v870
    %1092 = vmatprep.subr.mxu0 0.0
    %1093 = vmatpush1.msra.mxu0 %v869
    %1094 = vmatprep.subr.mxu0 0.0
    %1095 = vmatpush1.msra.mxu0 %v868
    %1096 = vmatprep.subr.mxu0 0.0
    %1097 = vmatpush1.msra.mxu0 %v867
    %1098 = vmatprep.subr.mxu0 0.0
    %1099 = vmatpush1.msra.mxu0 %v866
    %1100 = vmatprep.subr.mxu0 0.0
    %1101 = vmatpush1.msra.mxu0 %v865
    %1102 = vmatprep.subr.mxu0 0.0
    %1103 = vmatpush1.msra.mxu0 %v864
    %1104 = vmatprep.subr.mxu0 0.0
    %1105 = vmatpush1.msra.mxu0 %v863
    %1106 = vmatprep.subr.mxu0 0.0
    %1107 = vmatpush2.msra.mxu0 %v894
    %1108 = vmatprep.subr.mxu0 0.0
    %1109 = vmatpush2.msra.mxu0 %v893
    %1110 = vmatprep.subr.mxu0 0.0
    %1111 = vmatpush2.msra.mxu0 %v892
    %1112 = vmatprep.subr.mxu0 0.0
    %1113 = vmatpush2.msra.mxu0 %v891
    %1114 = vmatprep.subr.mxu0 0.0
    %1115 = vmatpush2.msra.mxu0 %v890
    %1116 = vmatprep.subr.mxu0 0.0
    %1117 = vmatpush2.msra.mxu0 %v889
    %1118 = vmatprep.subr.mxu0 0.0
    %1119 = vmatpush2.msra.mxu0 %v888
    %1120 = vmatprep.subr.mxu0 0.0
    %1121 = vmatpush2.msra.mxu0 %v887
    %1122 = vmatprep.subr.mxu0 0.0
    %1123 = vmatpush2.msra.mxu0 %v886
    %1124 = vmatprep.subr.mxu0 0.0
    %1125 = vmatpush2.msra.mxu0 %v885
    %1126 = vmatprep.subr.mxu0 0.0
    %1127 = vmatpush2.msra.mxu0 %v884
    %1128 = vmatprep.subr.mxu0 0.0
    %1129 = vmatpush2.msra.mxu0 %v883
    %1130 = vmatprep.subr.mxu0 0.0
    %1131 = vmatpush2.msra.mxu0 %v882
    %1132 = vmatprep.subr.mxu0 0.0
    %1133 = vmatpush2.msra.mxu0 %v881
    %1134 = vmatprep.subr.mxu0 0.0
    %1135 = vmatpush2.msra.mxu0 %v880
    %1136 = vmatprep.subr.mxu0 0.0
    %1137 = vmatpush2.msra.mxu0 %v879
    %1138 = vmatprep.mubr.f32.mxu0 %v861
    %1139 = vmatmul.mubr.f32.gmra.mxu0 %v859
    %v1140 = vpop.f32.mrf.mxu0
    %v1141 = vadd.f32 %v1071, %v1140
    %v1142 = vpop.f32.mrf.mxu0
    %1143 = vdwg.mxu0
    %s1144 = scalar_lea.vmem [#allocation5], 16
    %v1145 = vld [vmem:[%s1144] sm:$0xff]
    %v1147 = vsel %vm788, %v1145, 0
    %1149 = vmatprep.subr.mxu0 0.0
    %1150 = vmatpush1.msra.mxu0 0.0
    %1151 = vmatprep.subr.mxu0 0.0
    %1152 = vmatpush1.msra.mxu0 0.0
    %1153 = vmatprep.subr.mxu0 0.0
    %1154 = vmatpush1.msra.mxu0 0.0
    %1155 = vmatprep.subr.mxu0 0.0
    %1156 = vmatpush1.msra.mxu0 0.0
    %1157 = vmatprep.subr.mxu0 0.0
    %1158 = vmatpush1.msra.mxu0 0.0
    %1159 = vmatprep.subr.mxu0 0.0
    %1160 = vmatpush1.msra.mxu0 0.0
    %1161 = vmatprep.subr.mxu0 0.0
    %1162 = vmatpush1.msra.mxu0 0.0
    %1163 = vmatprep.subr.mxu0 0.0
    %1164 = vmatpush1.msra.mxu0 0.0
    %1165 = vmatprep.subr.mxu0 0.0
    %1166 = vmatpush1.msra.mxu0 0.0
    %1167 = vmatprep.subr.mxu0 0.0
    %1168 = vmatpush1.msra.mxu0 0.0
    %1169 = vmatprep.subr.mxu0 0.0
    %1170 = vmatpush1.msra.mxu0 0.0
    %1171 = vmatprep.subr.mxu0 0.0
    %1172 = vmatpush1.msra.mxu0 0.0
    %1173 = vmatprep.subr.mxu0 0.0
    %1174 = vmatpush1.msra.mxu0 0.0
    %1175 = vmatprep.subr.mxu0 0.0
    %1176 = vmatpush1.msra.mxu0 0.0
    %1177 = vmatprep.subr.mxu0 %v786
    %1178 = vmatpush1.msra.mxu0 %v785
    %1179 = vmatprep.subr.mxu0 %v784
    %1180 = vmatpush1.msra.mxu0 %v783
    %1181 = vmatprep.subr.mxu0 0.0
    %1182 = vmatpush2.msra.mxu0 0.0
    %1183 = vmatprep.subr.mxu0 0.0
    %1184 = vmatpush2.msra.mxu0 0.0
    %1185 = vmatprep.subr.mxu0 0.0
    %1186 = vmatpush2.msra.mxu0 0.0
    %1187 = vmatprep.subr.mxu0 0.0
    %1188 = vmatpush2.msra.mxu0 0.0
    %1189 = vmatprep.subr.mxu0 0.0
    %1190 = vmatpush2.msra.mxu0 0.0
    %1191 = vmatprep.subr.mxu0 0.0
    %1192 = vmatpush2.msra.mxu0 0.0
    %1193 = vmatprep.subr.mxu0 0.0
    %1194 = vmatpush2.msra.mxu0 0.0
    %1195 = vmatprep.subr.mxu0 0.0
    %1196 = vmatpush2.msra.mxu0 0.0
    %1197 = vmatprep.subr.mxu0 0.0
    %1198 = vmatpush2.msra.mxu0 0.0
    %1199 = vmatprep.subr.mxu0 0.0
    %1200 = vmatpush2.msra.mxu0 0.0
    %1201 = vmatprep.subr.mxu0 0.0
    %1202 = vmatpush2.msra.mxu0 0.0
    %1203 = vmatprep.subr.mxu0 0.0
    %1204 = vmatpush2.msra.mxu0 0.0
    %1205 = vmatprep.subr.mxu0 0.0
    %1206 = vmatpush2.msra.mxu0 0.0
    %1207 = vmatprep.subr.mxu0 0.0
    %1208 = vmatpush2.msra.mxu0 0.0
    %1209 = vmatprep.subr.mxu0 0.0
    %1210 = vmatpush2.msra.mxu0 0.0
    %1211 = vmatprep.subr.mxu0 0.0
    %1212 = vmatpush2.msra.mxu0 0.0
    %1213 = vmatprep.mubr.f32.mxu0 0.0
    %1214 = vmatmul.mubr.f32.gmra.mxu0 %v1147
    %v1215 = vpop.f32.mrf.mxu0
    %v1216 = vadd.f32 0.0, %v1215
    %v1217 = vpop.f32.mrf.mxu0
    %v1218 = vadd.f32 0.0, %v1217
    %1219 = vdwg.mxu0
    %s1220 = scalar_lea.vmem %s6, 512
    %v1221 = vld [vmem:[%s1220] sm:$0xff]
    %v1222 = vld [vmem:[%s1220 + $0x8] sm:$0xff]
    %v1223 = vld [vmem:[%s1220 + $0x10] sm:$0xff]
    %v1224 = vld [vmem:[%s1220 + $0x18] sm:$0xff]
    %v1225 = vld [vmem:[%s1220 + $0x20] sm:$0xff]
    %v1226 = vld [vmem:[%s1220 + $0x28] sm:$0xff]
    %v1227 = vld [vmem:[%s1220 + $0x30] sm:$0xff]
    %v1228 = vld [vmem:[%s1220 + $0x38] sm:$0xff]
    %v1229 = vld [vmem:[%s1220 + $0x40] sm:$0xff]
    %v1230 = vld [vmem:[%s1220 + $0x48] sm:$0xff]
    %v1231 = vld [vmem:[%s1220 + $0x50] sm:$0xff]
    %v1232 = vld [vmem:[%s1220 + $0x58] sm:$0xff]
    %v1233 = vld [vmem:[%s1220 + $0x60] sm:$0xff]
    %v1234 = vld [vmem:[%s1220 + $0x68] sm:$0xff]
    %v1235 = vld [vmem:[%s1220 + $0x70] sm:$0xff]
    %v1236 = vld [vmem:[%s1220 + $0x78] sm:$0xff]
    %v1237 = vld [vmem:[%s1220 + $0x80] sm:$0xff]
    %v1238 = vld [vmem:[%s1220 + $0x88] sm:$0xff]
    %v1239 = vld [vmem:[%s1220 + $0x90] sm:$0xff]
    %v1240 = vld [vmem:[%s1220 + $0x98] sm:$0xff]
    %v1241 = vld [vmem:[%s1220 + $0xa0] sm:$0xff]
    %v1242 = vld [vmem:[%s1220 + $0xa8] sm:$0xff]
    %v1243 = vld [vmem:[%s1220 + $0xb0] sm:$0xff]
    %v1244 = vld [vmem:[%s1220 + $0xb8] sm:$0xff]
    %v1245 = vld [vmem:[%s1220 + $0xc0] sm:$0xff]
    %v1246 = vld [vmem:[%s1220 + $0xc8] sm:$0xff]
    %v1247 = vld [vmem:[%s1220 + $0xd0] sm:$0xff]
    %v1248 = vld [vmem:[%s1220 + $0xd8] sm:$0xff]
    %v1249 = vld [vmem:[%s1220 + $0xe0] sm:$0xff]
    %v1250 = vld [vmem:[%s1220 + $0xe8] sm:$0xff]
    %v1251 = vld [vmem:[%s1220 + $0xf0] sm:$0xff]
    %v1252 = vld [vmem:[%s1220 + $0xf8] sm:$0xff]
    %1253 = vmatprep.subr.mxu0 0.0
    %1254 = vmatpush1.msra.mxu0 %v1236
    %1255 = vmatprep.subr.mxu0 0.0
    %1256 = vmatpush1.msra.mxu0 %v1235
    %1257 = vmatprep.subr.mxu0 0.0
    %1258 = vmatpush1.msra.mxu0 %v1234
    %1259 = vmatprep.subr.mxu0 0.0
    %1260 = vmatpush1.msra.mxu0 %v1233
    %1261 = vmatprep.subr.mxu0 0.0
    %1262 = vmatpush1.msra.mxu0 %v1232
    %1263 = vmatprep.subr.mxu0 0.0
    %1264 = vmatpush1.msra.mxu0 %v1231
    %1265 = vmatprep.subr.mxu0 0.0
    %1266 = vmatpush1.msra.mxu0 %v1230
    %1267 = vmatprep.subr.mxu0 0.0
    %1268 = vmatpush1.msra.mxu0 %v1229
    %1269 = vmatprep.subr.mxu0 0.0
    %1270 = vmatpush1.msra.mxu0 %v1228
    %1271 = vmatprep.subr.mxu0 0.0
    %1272 = vmatpush1.msra.mxu0 %v1227
    %1273 = vmatprep.subr.mxu0 0.0
    %1274 = vmatpush1.msra.mxu0 %v1226
    %1275 = vmatprep.subr.mxu0 0.0
    %1276 = vmatpush1.msra.mxu0 %v1225
    %1277 = vmatprep.subr.mxu0 0.0
    %1278 = vmatpush1.msra.mxu0 %v1224
    %1279 = vmatprep.subr.mxu0 0.0
    %1280 = vmatpush1.msra.mxu0 %v1223
    %1281 = vmatprep.subr.mxu0 0.0
    %1282 = vmatpush1.msra.mxu0 %v1222
    %1283 = vmatprep.subr.mxu0 0.0
    %1284 = vmatpush1.msra.mxu0 %v1221
    %1285 = vmatprep.subr.mxu0 0.0
    %1286 = vmatpush2.msra.mxu0 %v1252
    %1287 = vmatprep.subr.mxu0 0.0
    %1288 = vmatpush2.msra.mxu0 %v1251
    %1289 = vmatprep.subr.mxu0 0.0
    %1290 = vmatpush2.msra.mxu0 %v1250
    %1291 = vmatprep.subr.mxu0 0.0
    %1292 = vmatpush2.msra.mxu0 %v1249
    %1293 = vmatprep.subr.mxu0 0.0
    %1294 = vmatpush2.msra.mxu0 %v1248
    %1295 = vmatprep.subr.mxu0 0.0
    %1296 = vmatpush2.msra.mxu0 %v1247
    %1297 = vmatprep.subr.mxu0 0.0
    %1298 = vmatpush2.msra.mxu0 %v1246
    %1299 = vmatprep.subr.mxu0 0.0
    %1300 = vmatpush2.msra.mxu0 %v1245
    %1301 = vmatprep.subr.mxu0 0.0
    %1302 = vmatpush2.msra.mxu0 %v1244
    %1303 = vmatprep.subr.mxu0 0.0
    %1304 = vmatpush2.msra.mxu0 %v1243
    %1305 = vmatprep.subr.mxu0 0.0
    %1306 = vmatpush2.msra.mxu0 %v1242
    %1307 = vmatprep.subr.mxu0 0.0
    %1308 = vmatpush2.msra.mxu0 %v1241
    %1309 = vmatprep.subr.mxu0 0.0
    %1310 = vmatpush2.msra.mxu0 %v1240
    %1311 = vmatprep.subr.mxu0 0.0
    %1312 = vmatpush2.msra.mxu0 %v1239
    %1313 = vmatprep.subr.mxu0 0.0
    %1314 = vmatpush2.msra.mxu0 %v1238
    %1315 = vmatprep.subr.mxu0 0.0
    %1316 = vmatpush2.msra.mxu0 %v1237
    %1317 = vmatprep.mubr.f32.mxu0 %v1218
    %1318 = vmatmul.mubr.f32.gmra.mxu0 %v1216
    %v1319 = vpop.f32.mrf.mxu0
    %v1320 = vadd.f32 0.0, %v1319
    %v1321 = vpop.f32.mrf.mxu0
    %1322 = vdwg.mxu0
    %v1323 = vadd.f32 %v1141, %v1320
    %v1324 = vld [vmem:[%s7] sm:$0x1]
    %v1326 = vlaneseq
    %v1327 = vshrl.u32 %v1326, 7
    %v1328 = vsub.s32 0, %v1327
    %v1329 = vrot.slane %v1324, %v1328
    %v1331 = vadd.f32 %v1323, %v1329
    %v1332 = vmax.f32 %v1331, 0.0
    %v1333 = vld [vmem:[#allocation7] sm:$0x3]
    %vm1334 = vcmask 64512
    %v1336 = vsel %vm1334, %v1333, 0
    %1338 = vmatprep.subr.mxu0 0.0
    %1339 = vmatpush1.msra.mxu0 0.0
    %1340 = vmatprep.subr.mxu0 0.0
    %1341 = vmatpush1.msra.mxu0 0.0
    %1342 = vmatprep.subr.mxu0 0.0
    %1343 = vmatpush1.msra.mxu0 0.0
    %1344 = vmatprep.subr.mxu0 0.0
    %1345 = vmatpush1.msra.mxu0 0.0
    %1346 = vmatprep.subr.mxu0 0.0
    %1347 = vmatpush1.msra.mxu0 0.0
    %1348 = vmatprep.subr.mxu0 0.0
    %1349 = vmatpush1.msra.mxu0 0.0
    %1350 = vmatprep.subr.mxu0 0.0
    %1351 = vmatpush1.msra.mxu0 0.0
    %1352 = vmatprep.subr.mxu0 0.0
    %1353 = vmatpush1.msra.mxu0 0.0
    %1354 = vmatprep.subr.mxu0 0.0
    %1355 = vmatpush1.msra.mxu0 0.0
    %1356 = vmatprep.subr.mxu0 0.0
    %1357 = vmatpush1.msra.mxu0 0.0
    %1358 = vmatprep.subr.mxu0 0.0
    %1359 = vmatpush1.msra.mxu0 0.0
    %1360 = vmatprep.subr.mxu0 0.0
    %1361 = vmatpush1.msra.mxu0 0.0
    %1362 = vmatprep.subr.mxu0 0.0
    %1363 = vmatpush1.msra.mxu0 0.0
    %1364 = vmatprep.subr.mxu0 0.0
    %1365 = vmatpush1.msra.mxu0 0.0
    %1366 = vmatprep.subr.mxu0 0.0
    %1367 = vmatpush1.msra.mxu0 0.0
    %1368 = vmatprep.subr.mxu0 0.0
    %1369 = vmatpush1.msra.mxu0 %v1332
    %1370 = vmatprep.subr.mxu0 0.0
    %1371 = vmatpush2.msra.mxu0 0.0
    %1372 = vmatprep.subr.mxu0 0.0
    %1373 = vmatpush2.msra.mxu0 0.0
    %1374 = vmatprep.subr.mxu0 0.0
    %1375 = vmatpush2.msra.mxu0 0.0
    %1376 = vmatprep.subr.mxu0 0.0
    %1377 = vmatpush2.msra.mxu0 0.0
    %1378 = vmatprep.subr.mxu0 0.0
    %1379 = vmatpush2.msra.mxu0 0.0
    %1380 = vmatprep.subr.mxu0 0.0
    %1381 = vmatpush2.msra.mxu0 0.0
    %1382 = vmatprep.subr.mxu0 0.0
    %1383 = vmatpush2.msra.mxu0 0.0
    %1384 = vmatprep.subr.mxu0 0.0
    %1385 = vmatpush2.msra.mxu0 0.0
    %1386 = vmatprep.subr.mxu0 0.0
    %1387 = vmatpush2.msra.mxu0 0.0
    %1388 = vmatprep.subr.mxu0 0.0
    %1389 = vmatpush2.msra.mxu0 0.0
    %1390 = vmatprep.subr.mxu0 0.0
    %1391 = vmatpush2.msra.mxu0 0.0
    %1392 = vmatprep.subr.mxu0 0.0
    %1393 = vmatpush2.msra.mxu0 0.0
    %1394 = vmatprep.subr.mxu0 0.0
    %1395 = vmatpush2.msra.mxu0 0.0
    %1396 = vmatprep.subr.mxu0 0.0
    %1397 = vmatpush2.msra.mxu0 0.0
    %1398 = vmatprep.subr.mxu0 0.0
    %1399 = vmatpush2.msra.mxu0 0.0
    %1400 = vmatprep.subr.mxu0 0.0
    %1401 = vmatpush2.msra.mxu0 0.0
    %1402 = vmatprep.mubr.f32.mxu0 0.0
    %1403 = vmatmul.mubr.f32.gmra.mxu0 %v1336
    %v1404 = vpop.f32.mrf.mxu0
    %v1405 = vadd.f32 0.0, %v1404
    %v1406 = vpop.f32.mrf.mxu0
    %1407 = vdwg.mxu0
    %v1408 = vld [vmem:[%s9] sm:$0xff]
    %v1409 = vld [vmem:[%s9 + $0x8] sm:$0xff]
    %v1410 = vld [vmem:[%s9 + $0x10] sm:$0xff]
    %v1411 = vld [vmem:[%s9 + $0x18] sm:$0xff]
    %v1412 = vld [vmem:[%s9 + $0x20] sm:$0xff]
    %v1413 = vld [vmem:[%s9 + $0x28] sm:$0xff]
    %v1414 = vld [vmem:[%s9 + $0x30] sm:$0xff]
    %v1415 = vld [vmem:[%s9 + $0x38] sm:$0xff]
    %v1416 = vld [vmem:[%s9 + $0x40] sm:$0xff]
    %v1417 = vld [vmem:[%s9 + $0x48] sm:$0xff]
    %v1418 = vld [vmem:[%s9 + $0x50] sm:$0xff]
    %v1419 = vld [vmem:[%s9 + $0x58] sm:$0xff]
    %v1420 = vld [vmem:[%s9 + $0x60] sm:$0xff]
    %v1421 = vld [vmem:[%s9 + $0x68] sm:$0xff]
    %v1422 = vld [vmem:[%s9 + $0x70] sm:$0xff]
    %v1423 = vld [vmem:[%s9 + $0x78] sm:$0xff]
    %s1424 = scalar_lea.vmem [#allocation7], 2
    %v1425 = vld [vmem:[%s1424] sm:$0x3]
    %v1427 = vsel %vm1334, %v1425, 0
    %1429 = vmatprep.subr.mxu0 0.0
    %1430 = vmatpush1.msra.mxu0 0.0
    %1431 = vmatprep.subr.mxu0 0.0
    %1432 = vmatpush1.msra.mxu0 0.0
    %1433 = vmatprep.subr.mxu0 0.0
    %1434 = vmatpush1.msra.mxu0 0.0
    %1435 = vmatprep.subr.mxu0 0.0
    %1436 = vmatpush1.msra.mxu0 0.0
    %1437 = vmatprep.subr.mxu0 0.0
    %1438 = vmatpush1.msra.mxu0 0.0
    %1439 = vmatprep.subr.mxu0 0.0
    %1440 = vmatpush1.msra.mxu0 0.0
    %1441 = vmatprep.subr.mxu0 0.0
    %1442 = vmatpush1.msra.mxu0 0.0
    %1443 = vmatprep.subr.mxu0 0.0
    %1444 = vmatpush1.msra.mxu0 0.0
    %1445 = vmatprep.subr.mxu0 0.0
    %1446 = vmatpush1.msra.mxu0 0.0
    %1447 = vmatprep.subr.mxu0 0.0
    %1448 = vmatpush1.msra.mxu0 0.0
    %1449 = vmatprep.subr.mxu0 0.0
    %1450 = vmatpush1.msra.mxu0 0.0
    %1451 = vmatprep.subr.mxu0 0.0
    %1452 = vmatpush1.msra.mxu0 0.0
    %1453 = vmatprep.subr.mxu0 0.0
    %1454 = vmatpush1.msra.mxu0 0.0
    %1455 = vmatprep.subr.mxu0 0.0
    %1456 = vmatpush1.msra.mxu0 0.0
    %1457 = vmatprep.subr.mxu0 0.0
    %1458 = vmatpush1.msra.mxu0 0.0
    %1459 = vmatprep.subr.mxu0 0.0
    %1460 = vmatpush1.msra.mxu0 %v1332
    %1461 = vmatprep.subr.mxu0 0.0
    %1462 = vmatpush2.msra.mxu0 0.0
    %1463 = vmatprep.subr.mxu0 0.0
    %1464 = vmatpush2.msra.mxu0 0.0
    %1465 = vmatprep.subr.mxu0 0.0
    %1466 = vmatpush2.msra.mxu0 0.0
    %1467 = vmatprep.subr.mxu0 0.0
    %1468 = vmatpush2.msra.mxu0 0.0
    %1469 = vmatprep.subr.mxu0 0.0
    %1470 = vmatpush2.msra.mxu0 0.0
    %1471 = vmatprep.subr.mxu0 0.0
    %1472 = vmatpush2.msra.mxu0 0.0
    %1473 = vmatprep.subr.mxu0 0.0
    %1474 = vmatpush2.msra.mxu0 0.0
    %1475 = vmatprep.subr.mxu0 0.0
    %1476 = vmatpush2.msra.mxu0 0.0
    %1477 = vmatprep.subr.mxu0 0.0
    %1478 = vmatpush2.msra.mxu0 0.0
    %1479 = vmatprep.subr.mxu0 0.0
    %1480 = vmatpush2.msra.mxu0 0.0
    %1481 = vmatprep.subr.mxu0 0.0
    %1482 = vmatpush2.msra.mxu0 0.0
    %1483 = vmatprep.subr.mxu0 0.0
    %1484 = vmatpush2.msra.mxu0 0.0
    %1485 = vmatprep.subr.mxu0 0.0
    %1486 = vmatpush2.msra.mxu0 0.0
    %1487 = vmatprep.subr.mxu0 0.0
    %1488 = vmatpush2.msra.mxu0 0.0
    %1489 = vmatprep.subr.mxu0 0.0
    %1490 = vmatpush2.msra.mxu0 0.0
    %1491 = vmatprep.subr.mxu0 0.0
    %1492 = vmatpush2.msra.mxu0 0.0
    %1493 = vmatprep.mubr.f32.mxu0 0.0
    %1494 = vmatmul.mubr.f32.gmra.mxu0 %v1427
    %v1495 = vpop.f32.mrf.mxu0
    %v1496 = vadd.f32 0.0, %v1495
    %v1497 = vpop.f32.mrf.mxu0
    %1498 = vdwg.mxu0
    %s1499 = scalar_lea.vmem %s9, 128
    %v1500 = vld [vmem:[%s1499] sm:$0xff]
    %v1501 = vld [vmem:[%s1499 + $0x8] sm:$0xff]
    %v1502 = vld [vmem:[%s1499 + $0x10] sm:$0xff]
    %v1503 = vld [vmem:[%s1499 + $0x18] sm:$0xff]
    %v1504 = vld [vmem:[%s1499 + $0x20] sm:$0xff]
    %v1505 = vld [vmem:[%s1499 + $0x28] sm:$0xff]
    %v1506 = vld [vmem:[%s1499 + $0x30] sm:$0xff]
    %v1507 = vld [vmem:[%s1499 + $0x38] sm:$0xff]
    %v1508 = vld [vmem:[%s1499 + $0x40] sm:$0xff]
    %v1509 = vld [vmem:[%s1499 + $0x48] sm:$0xff]
    %v1510 = vld [vmem:[%s1499 + $0x50] sm:$0xff]
    %v1511 = vld [vmem:[%s1499 + $0x58] sm:$0xff]
    %v1512 = vld [vmem:[%s1499 + $0x60] sm:$0xff]
    %v1513 = vld [vmem:[%s1499 + $0x68] sm:$0xff]
    %v1514 = vld [vmem:[%s1499 + $0x70] sm:$0xff]
    %v1515 = vld [vmem:[%s1499 + $0x78] sm:$0xff]
    %1516 = vmatprep.subr.mxu0 0.0
    %1517 = vmatpush1.msra.mxu0 %v1515
    %1518 = vmatprep.subr.mxu0 0.0
    %1519 = vmatpush1.msra.mxu0 %v1514
    %1520 = vmatprep.subr.mxu0 0.0
    %1521 = vmatpush1.msra.mxu0 %v1513
    %1522 = vmatprep.subr.mxu0 0.0
    %1523 = vmatpush1.msra.mxu0 %v1512
    %1524 = vmatprep.subr.mxu0 0.0
    %1525 = vmatpush1.msra.mxu0 %v1511
    %1526 = vmatprep.subr.mxu0 0.0
    %1527 = vmatpush1.msra.mxu0 %v1510
    %1528 = vmatprep.subr.mxu0 0.0
    %1529 = vmatpush1.msra.mxu0 %v1509
    %1530 = vmatprep.subr.mxu0 0.0
    %1531 = vmatpush1.msra.mxu0 %v1508
    %1532 = vmatprep.subr.mxu0 0.0
    %1533 = vmatpush1.msra.mxu0 %v1507
    %1534 = vmatprep.subr.mxu0 0.0
    %1535 = vmatpush1.msra.mxu0 %v1506
    %1536 = vmatprep.subr.mxu0 0.0
    %1537 = vmatpush1.msra.mxu0 %v1505
    %1538 = vmatprep.subr.mxu0 0.0
    %1539 = vmatpush1.msra.mxu0 %v1504
    %1540 = vmatprep.subr.mxu0 0.0
    %1541 = vmatpush1.msra.mxu0 %v1503
    %1542 = vmatprep.subr.mxu0 0.0
    %1543 = vmatpush1.msra.mxu0 %v1502
    %1544 = vmatprep.subr.mxu0 0.0
    %1545 = vmatpush1.msra.mxu0 %v1501
    %1546 = vmatprep.subr.mxu0 0.0
    %1547 = vmatpush1.msra.mxu0 %v1500
    %1548 = vmatprep.subr.mxu0 0.0
    %1549 = vmatpush2.msra.mxu0 0.0
    %1550 = vmatprep.subr.mxu0 0.0
    %1551 = vmatpush2.msra.mxu0 0.0
    %1552 = vmatprep.subr.mxu0 0.0
    %1553 = vmatpush2.msra.mxu0 0.0
    %1554 = vmatprep.subr.mxu0 0.0
    %1555 = vmatpush2.msra.mxu0 0.0
    %1556 = vmatprep.subr.mxu0 0.0
    %1557 = vmatpush2.msra.mxu0 0.0
    %1558 = vmatprep.subr.mxu0 0.0
    %1559 = vmatpush2.msra.mxu0 0.0
    %1560 = vmatprep.subr.mxu0 0.0
    %1561 = vmatpush2.msra.mxu0 0.0
    %1562 = vmatprep.subr.mxu0 0.0
    %1563 = vmatpush2.msra.mxu0 0.0
    %1564 = vmatprep.subr.mxu0 0.0
    %1565 = vmatpush2.msra.mxu0 0.0
    %1566 = vmatprep.subr.mxu0 0.0
    %1567 = vmatpush2.msra.mxu0 0.0
    %1568 = vmatprep.subr.mxu0 0.0
    %1569 = vmatpush2.msra.mxu0 0.0
    %1570 = vmatprep.subr.mxu0 0.0
    %1571 = vmatpush2.msra.mxu0 0.0
    %1572 = vmatprep.subr.mxu0 0.0
    %1573 = vmatpush2.msra.mxu0 0.0
    %1574 = vmatprep.subr.mxu0 0.0
    %1575 = vmatpush2.msra.mxu0 0.0
    %1576 = vmatprep.subr.mxu0 0.0
    %1577 = vmatpush2.msra.mxu0 0.0
    %1578 = vmatprep.subr.mxu0 0.0
    %1579 = vmatpush2.msra.mxu0 0.0
    %1580 = vmatprep.mubr.f32.mxu0 0.0
    %1581 = vmatmul.mubr.f32.gmra.mxu0 %v1496
    %v1582 = vpop.f32.mrf.mxu0
    %v1583 = vadd.f32 0.0, %v1582
    %v1584 = vpop.f32.mrf.mxu0
    %1585 = vdwg.mxu0
    %1586 = vmatprep.subr.mxu0 0.0
    %1587 = vmatpush1.msra.mxu0 %v1423
    %1588 = vmatprep.subr.mxu0 0.0
    %1589 = vmatpush1.msra.mxu0 %v1422
    %1590 = vmatprep.subr.mxu0 0.0
    %1591 = vmatpush1.msra.mxu0 %v1421
    %1592 = vmatprep.subr.mxu0 0.0
    %1593 = vmatpush1.msra.mxu0 %v1420
    %1594 = vmatprep.subr.mxu0 0.0
    %1595 = vmatpush1.msra.mxu0 %v1419
    %1596 = vmatprep.subr.mxu0 0.0
    %1597 = vmatpush1.msra.mxu0 %v1418
    %1598 = vmatprep.subr.mxu0 0.0
    %1599 = vmatpush1.msra.mxu0 %v1417
    %1600 = vmatprep.subr.mxu0 0.0
    %1601 = vmatpush1.msra.mxu0 %v1416
    %1602 = vmatprep.subr.mxu0 0.0
    %1603 = vmatpush1.msra.mxu0 %v1415
    %1604 = vmatprep.subr.mxu0 0.0
    %1605 = vmatpush1.msra.mxu0 %v1414
    %1606 = vmatprep.subr.mxu0 0.0
    %1607 = vmatpush1.msra.mxu0 %v1413
    %1608 = vmatprep.subr.mxu0 0.0
    %1609 = vmatpush1.msra.mxu0 %v1412
    %1610 = vmatprep.subr.mxu0 0.0
    %1611 = vmatpush1.msra.mxu0 %v1411
    %1612 = vmatprep.subr.mxu0 0.0
    %1613 = vmatpush1.msra.mxu0 %v1410
    %1614 = vmatprep.subr.mxu0 0.0
    %1615 = vmatpush1.msra.mxu0 %v1409
    %1616 = vmatprep.subr.mxu0 0.0
    %1617 = vmatpush1.msra.mxu0 %v1408
    %1618 = vmatprep.subr.mxu0 0.0
    %1619 = vmatpush2.msra.mxu0 0.0
    %1620 = vmatprep.subr.mxu0 0.0
    %1621 = vmatpush2.msra.mxu0 0.0
    %1622 = vmatprep.subr.mxu0 0.0
    %1623 = vmatpush2.msra.mxu0 0.0
    %1624 = vmatprep.subr.mxu0 0.0
    %1625 = vmatpush2.msra.mxu0 0.0
    %1626 = vmatprep.subr.mxu0 0.0
    %1627 = vmatpush2.msra.mxu0 0.0
    %1628 = vmatprep.subr.mxu0 0.0
    %1629 = vmatpush2.msra.mxu0 0.0
    %1630 = vmatprep.subr.mxu0 0.0
    %1631 = vmatpush2.msra.mxu0 0.0
    %1632 = vmatprep.subr.mxu0 0.0
    %1633 = vmatpush2.msra.mxu0 0.0
    %1634 = vmatprep.subr.mxu0 0.0
    %1635 = vmatpush2.msra.mxu0 0.0
    %1636 = vmatprep.subr.mxu0 0.0
    %1637 = vmatpush2.msra.mxu0 0.0
    %1638 = vmatprep.subr.mxu0 0.0
    %1639 = vmatpush2.msra.mxu0 0.0
    %1640 = vmatprep.subr.mxu0 0.0
    %1641 = vmatpush2.msra.mxu0 0.0
    %1642 = vmatprep.subr.mxu0 0.0
    %1643 = vmatpush2.msra.mxu0 0.0
    %1644 = vmatprep.subr.mxu0 0.0
    %1645 = vmatpush2.msra.mxu0 0.0
    %1646 = vmatprep.subr.mxu0 0.0
    %1647 = vmatpush2.msra.mxu0 0.0
    %1648 = vmatprep.subr.mxu0 0.0
    %1649 = vmatpush2.msra.mxu0 0.0
    %1650 = vmatprep.mubr.f32.mxu0 0.0
    %1651 = vmatmul.mubr.f32.gmra.mxu0 %v1405
    %v1652 = vpop.f32.mrf.mxu0
    %v1653 = vadd.f32 %v1583, %v1652
    %v1654 = vpop.f32.mrf.mxu0
    %1655 = vdwg.mxu0
    %s1656 = scalar_lea.vmem [#allocation7], 4
    %v1657 = vld [vmem:[%s1656] sm:$0x3]
    %v1659 = vsel %vm1334, %v1657, 0
    %1661 = vmatprep.subr.mxu0 0.0
    %1662 = vmatpush1.msra.mxu0 0.0
    %1663 = vmatprep.subr.mxu0 0.0
    %1664 = vmatpush1.msra.mxu0 0.0
    %1665 = vmatprep.subr.mxu0 0.0
    %1666 = vmatpush1.msra.mxu0 0.0
    %1667 = vmatprep.subr.mxu0 0.0
    %1668 = vmatpush1.msra.mxu0 0.0
    %1669 = vmatprep.subr.mxu0 0.0
    %1670 = vmatpush1.msra.mxu0 0.0
    %1671 = vmatprep.subr.mxu0 0.0
    %1672 = vmatpush1.msra.mxu0 0.0
    %1673 = vmatprep.subr.mxu0 0.0
    %1674 = vmatpush1.msra.mxu0 0.0
    %1675 = vmatprep.subr.mxu0 0.0
    %1676 = vmatpush1.msra.mxu0 0.0
    %1677 = vmatprep.subr.mxu0 0.0
    %1678 = vmatpush1.msra.mxu0 0.0
    %1679 = vmatprep.subr.mxu0 0.0
    %1680 = vmatpush1.msra.mxu0 0.0
    %1681 = vmatprep.subr.mxu0 0.0
    %1682 = vmatpush1.msra.mxu0 0.0
    %1683 = vmatprep.subr.mxu0 0.0
    %1684 = vmatpush1.msra.mxu0 0.0
    %1685 = vmatprep.subr.mxu0 0.0
    %1686 = vmatpush1.msra.mxu0 0.0
    %1687 = vmatprep.subr.mxu0 0.0
    %1688 = vmatpush1.msra.mxu0 0.0
    %1689 = vmatprep.subr.mxu0 0.0
    %1690 = vmatpush1.msra.mxu0 0.0
    %1691 = vmatprep.subr.mxu0 0.0
    %1692 = vmatpush1.msra.mxu0 %v1332
    %1693 = vmatprep.subr.mxu0 0.0
    %1694 = vmatpush2.msra.mxu0 0.0
    %1695 = vmatprep.subr.mxu0 0.0
    %1696 = vmatpush2.msra.mxu0 0.0
    %1697 = vmatprep.subr.mxu0 0.0
    %1698 = vmatpush2.msra.mxu0 0.0
    %1699 = vmatprep.subr.mxu0 0.0
    %1700 = vmatpush2.msra.mxu0 0.0
    %1701 = vmatprep.subr.mxu0 0.0
    %1702 = vmatpush2.msra.mxu0 0.0
    %1703 = vmatprep.subr.mxu0 0.0
    %1704 = vmatpush2.msra.mxu0 0.0
    %1705 = vmatprep.subr.mxu0 0.0
    %1706 = vmatpush2.msra.mxu0 0.0
    %1707 = vmatprep.subr.mxu0 0.0
    %1708 = vmatpush2.msra.mxu0 0.0
    %1709 = vmatprep.subr.mxu0 0.0
    %1710 = vmatpush2.msra.mxu0 0.0
    %1711 = vmatprep.subr.mxu0 0.0
    %1712 = vmatpush2.msra.mxu0 0.0
    %1713 = vmatprep.subr.mxu0 0.0
    %1714 = vmatpush2.msra.mxu0 0.0
    %1715 = vmatprep.subr.mxu0 0.0
    %1716 = vmatpush2.msra.mxu0 0.0
    %1717 = vmatprep.subr.mxu0 0.0
    %1718 = vmatpush2.msra.mxu0 0.0
    %1719 = vmatprep.subr.mxu0 0.0
    %1720 = vmatpush2.msra.mxu0 0.0
    %1721 = vmatprep.subr.mxu0 0.0
    %1722 = vmatpush2.msra.mxu0 0.0
    %1723 = vmatprep.subr.mxu0 0.0
    %1724 = vmatpush2.msra.mxu0 0.0
    %1725 = vmatprep.mubr.f32.mxu0 0.0
    %1726 = vmatmul.mubr.f32.gmra.mxu0 %v1659
    %v1727 = vpop.f32.mrf.mxu0
    %v1728 = vadd.f32 0.0, %v1727
    %v1729 = vpop.f32.mrf.mxu0
    %1730 = vdwg.mxu0
    %s1731 = scalar_lea.vmem %s9, 256
    %v1732 = vld [vmem:[%s1731] sm:$0xff]
    %v1733 = vld [vmem:[%s1731 + $0x8] sm:$0xff]
    %v1734 = vld [vmem:[%s1731 + $0x10] sm:$0xff]
    %v1735 = vld [vmem:[%s1731 + $0x18] sm:$0xff]
    %v1736 = vld [vmem:[%s1731 + $0x20] sm:$0xff]
    %v1737 = vld [vmem:[%s1731 + $0x28] sm:$0xff]
    %v1738 = vld [vmem:[%s1731 + $0x30] sm:$0xff]
    %v1739 = vld [vmem:[%s1731 + $0x38] sm:$0xff]
    %v1740 = vld [vmem:[%s1731 + $0x40] sm:$0xff]
    %v1741 = vld [vmem:[%s1731 + $0x48] sm:$0xff]
    %v1742 = vld [vmem:[%s1731 + $0x50] sm:$0xff]
    %v1743 = vld [vmem:[%s1731 + $0x58] sm:$0xff]
    %v1744 = vld [vmem:[%s1731 + $0x60] sm:$0xff]
    %v1745 = vld [vmem:[%s1731 + $0x68] sm:$0xff]
    %v1746 = vld [vmem:[%s1731 + $0x70] sm:$0xff]
    %v1747 = vld [vmem:[%s1731 + $0x78] sm:$0xff]
    %1748 = vmatprep.subr.mxu0 0.0
    %1749 = vmatpush1.msra.mxu0 %v1747
    %1750 = vmatprep.subr.mxu0 0.0
    %1751 = vmatpush1.msra.mxu0 %v1746
    %1752 = vmatprep.subr.mxu0 0.0
    %1753 = vmatpush1.msra.mxu0 %v1745
    %1754 = vmatprep.subr.mxu0 0.0
    %1755 = vmatpush1.msra.mxu0 %v1744
    %1756 = vmatprep.subr.mxu0 0.0
    %1757 = vmatpush1.msra.mxu0 %v1743
    %1758 = vmatprep.subr.mxu0 0.0
    %1759 = vmatpush1.msra.mxu0 %v1742
    %1760 = vmatprep.subr.mxu0 0.0
    %1761 = vmatpush1.msra.mxu0 %v1741
    %1762 = vmatprep.subr.mxu0 0.0
    %1763 = vmatpush1.msra.mxu0 %v1740
    %1764 = vmatprep.subr.mxu0 0.0
    %1765 = vmatpush1.msra.mxu0 %v1739
    %1766 = vmatprep.subr.mxu0 0.0
    %1767 = vmatpush1.msra.mxu0 %v1738
    %1768 = vmatprep.subr.mxu0 0.0
    %1769 = vmatpush1.msra.mxu0 %v1737
    %1770 = vmatprep.subr.mxu0 0.0
    %1771 = vmatpush1.msra.mxu0 %v1736
    %1772 = vmatprep.subr.mxu0 0.0
    %1773 = vmatpush1.msra.mxu0 %v1735
    %1774 = vmatprep.subr.mxu0 0.0
    %1775 = vmatpush1.msra.mxu0 %v1734
    %1776 = vmatprep.subr.mxu0 0.0
    %1777 = vmatpush1.msra.mxu0 %v1733
    %1778 = vmatprep.subr.mxu0 0.0
    %1779 = vmatpush1.msra.mxu0 %v1732
    %1780 = vmatprep.subr.mxu0 0.0
    %1781 = vmatpush2.msra.mxu0 0.0
    %1782 = vmatprep.subr.mxu0 0.0
    %1783 = vmatpush2.msra.mxu0 0.0
    %1784 = vmatprep.subr.mxu0 0.0
    %1785 = vmatpush2.msra.mxu0 0.0
    %1786 = vmatprep.subr.mxu0 0.0
    %1787 = vmatpush2.msra.mxu0 0.0
    %1788 = vmatprep.subr.mxu0 0.0
    %1789 = vmatpush2.msra.mxu0 0.0
    %1790 = vmatprep.subr.mxu0 0.0
    %1791 = vmatpush2.msra.mxu0 0.0
    %1792 = vmatprep.subr.mxu0 0.0
    %1793 = vmatpush2.msra.mxu0 0.0
    %1794 = vmatprep.subr.mxu0 0.0
    %1795 = vmatpush2.msra.mxu0 0.0
    %1796 = vmatprep.subr.mxu0 0.0
    %1797 = vmatpush2.msra.mxu0 0.0
    %1798 = vmatprep.subr.mxu0 0.0
    %1799 = vmatpush2.msra.mxu0 0.0
    %1800 = vmatprep.subr.mxu0 0.0
    %1801 = vmatpush2.msra.mxu0 0.0
    %1802 = vmatprep.subr.mxu0 0.0
    %1803 = vmatpush2.msra.mxu0 0.0
    %1804 = vmatprep.subr.mxu0 0.0
    %1805 = vmatpush2.msra.mxu0 0.0
    %1806 = vmatprep.subr.mxu0 0.0
    %1807 = vmatpush2.msra.mxu0 0.0
    %1808 = vmatprep.subr.mxu0 0.0
    %1809 = vmatpush2.msra.mxu0 0.0
    %1810 = vmatprep.subr.mxu0 0.0
    %1811 = vmatpush2.msra.mxu0 0.0
    %1812 = vmatprep.mubr.f32.mxu0 0.0
    %1813 = vmatmul.mubr.f32.gmra.mxu0 %v1728
    %v1814 = vpop.f32.mrf.mxu0
    %v1815 = vadd.f32 0.0, %v1814
    %v1816 = vpop.f32.mrf.mxu0
    %1817 = vdwg.mxu0
    %v1818 = vadd.f32 %v1653, %v1815
    %s1819 = scalar_lea.vmem [#allocation7], 6
    %v1820 = vld [vmem:[%s1819] sm:$0x3]
    %v1822 = vsel %vm1334, %v1820, 0
    %1824 = vmatprep.subr.mxu0 0.0
    %1825 = vmatpush1.msra.mxu0 0.0
    %1826 = vmatprep.subr.mxu0 0.0
    %1827 = vmatpush1.msra.mxu0 0.0
    %1828 = vmatprep.subr.mxu0 0.0
    %1829 = vmatpush1.msra.mxu0 0.0
    %1830 = vmatprep.subr.mxu0 0.0
    %1831 = vmatpush1.msra.mxu0 0.0
    %1832 = vmatprep.subr.mxu0 0.0
    %1833 = vmatpush1.msra.mxu0 0.0
    %1834 = vmatprep.subr.mxu0 0.0
    %1835 = vmatpush1.msra.mxu0 0.0
    %1836 = vmatprep.subr.mxu0 0.0
    %1837 = vmatpush1.msra.mxu0 0.0
    %1838 = vmatprep.subr.mxu0 0.0
    %1839 = vmatpush1.msra.mxu0 0.0
    %1840 = vmatprep.subr.mxu0 0.0
    %1841 = vmatpush1.msra.mxu0 0.0
    %1842 = vmatprep.subr.mxu0 0.0
    %1843 = vmatpush1.msra.mxu0 0.0
    %1844 = vmatprep.subr.mxu0 0.0
    %1845 = vmatpush1.msra.mxu0 0.0
    %1846 = vmatprep.subr.mxu0 0.0
    %1847 = vmatpush1.msra.mxu0 0.0
    %1848 = vmatprep.subr.mxu0 0.0
    %1849 = vmatpush1.msra.mxu0 0.0
    %1850 = vmatprep.subr.mxu0 0.0
    %1851 = vmatpush1.msra.mxu0 0.0
    %1852 = vmatprep.subr.mxu0 0.0
    %1853 = vmatpush1.msra.mxu0 0.0
    %1854 = vmatprep.subr.mxu0 0.0
    %1855 = vmatpush1.msra.mxu0 %v1332
    %1856 = vmatprep.subr.mxu0 0.0
    %1857 = vmatpush2.msra.mxu0 0.0
    %1858 = vmatprep.subr.mxu0 0.0
    %1859 = vmatpush2.msra.mxu0 0.0
    %1860 = vmatprep.subr.mxu0 0.0
    %1861 = vmatpush2.msra.mxu0 0.0
    %1862 = vmatprep.subr.mxu0 0.0
    %1863 = vmatpush2.msra.mxu0 0.0
    %1864 = vmatprep.subr.mxu0 0.0
    %1865 = vmatpush2.msra.mxu0 0.0
    %1866 = vmatprep.subr.mxu0 0.0
    %1867 = vmatpush2.msra.mxu0 0.0
    %1868 = vmatprep.subr.mxu0 0.0
    %1869 = vmatpush2.msra.mxu0 0.0
    %1870 = vmatprep.subr.mxu0 0.0
    %1871 = vmatpush2.msra.mxu0 0.0
    %1872 = vmatprep.subr.mxu0 0.0
    %1873 = vmatpush2.msra.mxu0 0.0
    %1874 = vmatprep.subr.mxu0 0.0
    %1875 = vmatpush2.msra.mxu0 0.0
    %1876 = vmatprep.subr.mxu0 0.0
    %1877 = vmatpush2.msra.mxu0 0.0
    %1878 = vmatprep.subr.mxu0 0.0
    %1879 = vmatpush2.msra.mxu0 0.0
    %1880 = vmatprep.subr.mxu0 0.0
    %1881 = vmatpush2.msra.mxu0 0.0
    %1882 = vmatprep.subr.mxu0 0.0
    %1883 = vmatpush2.msra.mxu0 0.0
    %1884 = vmatprep.subr.mxu0 0.0
    %1885 = vmatpush2.msra.mxu0 0.0
    %1886 = vmatprep.subr.mxu0 0.0
    %1887 = vmatpush2.msra.mxu0 0.0
    %1888 = vmatprep.mubr.f32.mxu0 0.0
    %1889 = vmatmul.mubr.f32.gmra.mxu0 %v1822
    %v1890 = vpop.f32.mrf.mxu0
    %v1891 = vadd.f32 0.0, %v1890
    %v1892 = vpop.f32.mrf.mxu0
    %1893 = vdwg.mxu0
    %s1894 = scalar_lea.vmem %s9, 384
    %v1895 = vld [vmem:[%s1894] sm:$0xff]
    %v1896 = vld [vmem:[%s1894 + $0x8] sm:$0xff]
    %v1897 = vld [vmem:[%s1894 + $0x10] sm:$0xff]
    %v1898 = vld [vmem:[%s1894 + $0x18] sm:$0xff]
    %v1899 = vld [vmem:[%s1894 + $0x20] sm:$0xff]
    %v1900 = vld [vmem:[%s1894 + $0x28] sm:$0xff]
    %v1901 = vld [vmem:[%s1894 + $0x30] sm:$0xff]
    %v1902 = vld [vmem:[%s1894 + $0x38] sm:$0xff]
    %v1903 = vld [vmem:[%s1894 + $0x40] sm:$0xff]
    %v1904 = vld [vmem:[%s1894 + $0x48] sm:$0xff]
    %v1905 = vld [vmem:[%s1894 + $0x50] sm:$0xff]
    %v1906 = vld [vmem:[%s1894 + $0x58] sm:$0xff]
    %v1907 = vld [vmem:[%s1894 + $0x60] sm:$0xff]
    %v1908 = vld [vmem:[%s1894 + $0x68] sm:$0xff]
    %v1909 = vld [vmem:[%s1894 + $0x70] sm:$0xff]
    %v1910 = vld [vmem:[%s1894 + $0x78] sm:$0xff]
    %1911 = vmatprep.subr.mxu0 0.0
    %1912 = vmatpush1.msra.mxu0 %v1910
    %1913 = vmatprep.subr.mxu0 0.0
    %1914 = vmatpush1.msra.mxu0 %v1909
    %1915 = vmatprep.subr.mxu0 0.0
    %1916 = vmatpush1.msra.mxu0 %v1908
    %1917 = vmatprep.subr.mxu0 0.0
    %1918 = vmatpush1.msra.mxu0 %v1907
    %1919 = vmatprep.subr.mxu0 0.0
    %1920 = vmatpush1.msra.mxu0 %v1906
    %1921 = vmatprep.subr.mxu0 0.0
    %1922 = vmatpush1.msra.mxu0 %v1905
    %1923 = vmatprep.subr.mxu0 0.0
    %1924 = vmatpush1.msra.mxu0 %v1904
    %1925 = vmatprep.subr.mxu0 0.0
    %1926 = vmatpush1.msra.mxu0 %v1903
    %1927 = vmatprep.subr.mxu0 0.0
    %1928 = vmatpush1.msra.mxu0 %v1902
    %1929 = vmatprep.subr.mxu0 0.0
    %1930 = vmatpush1.msra.mxu0 %v1901
    %1931 = vmatprep.subr.mxu0 0.0
    %1932 = vmatpush1.msra.mxu0 %v1900
    %1933 = vmatprep.subr.mxu0 0.0
    %1934 = vmatpush1.msra.mxu0 %v1899
    %1935 = vmatprep.subr.mxu0 0.0
    %1936 = vmatpush1.msra.mxu0 %v1898
    %1937 = vmatprep.subr.mxu0 0.0
    %1938 = vmatpush1.msra.mxu0 %v1897
    %1939 = vmatprep.subr.mxu0 0.0
    %1940 = vmatpush1.msra.mxu0 %v1896
    %1941 = vmatprep.subr.mxu0 0.0
    %1942 = vmatpush1.msra.mxu0 %v1895
    %1943 = vmatprep.subr.mxu0 0.0
    %1944 = vmatpush2.msra.mxu0 0.0
    %1945 = vmatprep.subr.mxu0 0.0
    %1946 = vmatpush2.msra.mxu0 0.0
    %1947 = vmatprep.subr.mxu0 0.0
    %1948 = vmatpush2.msra.mxu0 0.0
    %1949 = vmatprep.subr.mxu0 0.0
    %1950 = vmatpush2.msra.mxu0 0.0
    %1951 = vmatprep.subr.mxu0 0.0
    %1952 = vmatpush2.msra.mxu0 0.0
    %1953 = vmatprep.subr.mxu0 0.0
    %1954 = vmatpush2.msra.mxu0 0.0
    %1955 = vmatprep.subr.mxu0 0.0
    %1956 = vmatpush2.msra.mxu0 0.0
    %1957 = vmatprep.subr.mxu0 0.0
    %1958 = vmatpush2.msra.mxu0 0.0
    %1959 = vmatprep.subr.mxu0 0.0
    %1960 = vmatpush2.msra.mxu0 0.0
    %1961 = vmatprep.subr.mxu0 0.0
    %1962 = vmatpush2.msra.mxu0 0.0
    %1963 = vmatprep.subr.mxu0 0.0
    %1964 = vmatpush2.msra.mxu0 0.0
    %1965 = vmatprep.subr.mxu0 0.0
    %1966 = vmatpush2.msra.mxu0 0.0
    %1967 = vmatprep.subr.mxu0 0.0
    %1968 = vmatpush2.msra.mxu0 0.0
    %1969 = vmatprep.subr.mxu0 0.0
    %1970 = vmatpush2.msra.mxu0 0.0
    %1971 = vmatprep.subr.mxu0 0.0
    %1972 = vmatpush2.msra.mxu0 0.0
    %1973 = vmatprep.subr.mxu0 0.0
    %1974 = vmatpush2.msra.mxu0 0.0
    %1975 = vmatprep.mubr.f32.mxu0 0.0
    %1976 = vmatmul.mubr.f32.gmra.mxu0 %v1891
    %v1977 = vpop.f32.mrf.mxu0
    %v1978 = vadd.f32 0.0, %v1977
    %v1979 = vpop.f32.mrf.mxu0
    %1980 = vdwg.mxu0
    %v1981 = vadd.f32 %v1818, %v1978
    %v1982 = vld [vmem:[#allocation8] sm:$0x1]
    %v1984 = vlaneseq
    %v1985 = vshrl.u32 %v1984, 7
    %v1986 = vsub.s32 0, %v1985
    %v1987 = vrot.slane %v1982, %v1986
    %v1989 = vadd.f32 %v1981, %v1987
    %v1990 = vld [vmem:[%s1] sm:$0x3]
    %v1991 = vld [vmem:[#allocation10] sm:$0xff]
    %v1992 = vld [vmem:[#allocation10 + $0x8] sm:$0xf]
    %v1993 = vld [vmem:[#allocation11] sm:$0x1]
    %v1995 = vlaneseq
    %v1996 = vshrl.u32 %v1995, 7
    %v1997 = vsub.s32 0, %v1996
    %v1998 = vrot.slane %v1993, %v1997
    %vm2000 = vcmask 97280
    %v2002 = vsel %vm2000, %v1990, 0
    %vm2004 = vcmask 1043456
    %v2006 = vsel %vm2004, %v1992, 0
    %2008 = vmatprep.subr.mxu0 0.0
    %2009 = vmatpush1.msra.mxu0 0.0
    %2010 = vmatprep.subr.mxu0 0.0
    %2011 = vmatpush1.msra.mxu0 0.0
    %2012 = vmatprep.subr.mxu0 0.0
    %2013 = vmatpush1.msra.mxu0 0.0
    %2014 = vmatprep.subr.mxu0 0.0
    %2015 = vmatpush1.msra.mxu0 0.0
    %2016 = vmatprep.subr.mxu0 0.0
    %2017 = vmatpush1.msra.mxu0 0.0
    %2018 = vmatprep.subr.mxu0 0.0
    %2019 = vmatpush1.msra.mxu0 0.0
    %2020 = vmatprep.subr.mxu0 0.0
    %2021 = vmatpush1.msra.mxu0 0.0
    %2022 = vmatprep.subr.mxu0 0.0
    %2023 = vmatpush1.msra.mxu0 0.0
    %2024 = vmatprep.subr.mxu0 0.0
    %2025 = vmatpush1.msra.mxu0 0.0
    %2026 = vmatprep.subr.mxu0 0.0
    %2027 = vmatpush1.msra.mxu0 0.0
    %2028 = vmatprep.subr.mxu0 0.0
    %2029 = vmatpush1.msra.mxu0 0.0
    %2030 = vmatprep.subr.mxu0 0.0
    %2031 = vmatpush1.msra.mxu0 0.0
    %2032 = vmatprep.subr.mxu0 0.0
    %2033 = vmatpush1.msra.mxu0 0.0
    %2034 = vmatprep.subr.mxu0 0.0
    %2035 = vmatpush1.msra.mxu0 0.0
    %2036 = vmatprep.subr.mxu0 0.0
    %2037 = vmatpush1.msra.mxu0 %v2006
    %2038 = vmatprep.subr.mxu0 0.0
    %2039 = vmatpush1.msra.mxu0 %v1991
    %2040 = vmatprep.subr.mxu0 0.0
    %2041 = vmatpush2.msra.mxu0 0.0
    %2042 = vmatprep.subr.mxu0 0.0
    %2043 = vmatpush2.msra.mxu0 0.0
    %2044 = vmatprep.subr.mxu0 0.0
    %2045 = vmatpush2.msra.mxu0 0.0
    %2046 = vmatprep.subr.mxu0 0.0
    %2047 = vmatpush2.msra.mxu0 0.0
    %2048 = vmatprep.subr.mxu0 0.0
    %2049 = vmatpush2.msra.mxu0 0.0
    %2050 = vmatprep.subr.mxu0 0.0
    %2051 = vmatpush2.msra.mxu0 0.0
    %2052 = vmatprep.subr.mxu0 0.0
    %2053 = vmatpush2.msra.mxu0 0.0
    %2054 = vmatprep.subr.mxu0 0.0
    %2055 = vmatpush2.msra.mxu0 0.0
    %2056 = vmatprep.subr.mxu0 0.0
    %2057 = vmatpush2.msra.mxu0 0.0
    %2058 = vmatprep.subr.mxu0 0.0
    %2059 = vmatpush2.msra.mxu0 0.0
    %2060 = vmatprep.subr.mxu0 0.0
    %2061 = vmatpush2.msra.mxu0 0.0
    %2062 = vmatprep.subr.mxu0 0.0
    %2063 = vmatpush2.msra.mxu0 0.0
    %2064 = vmatprep.subr.mxu0 0.0
    %2065 = vmatpush2.msra.mxu0 0.0
    %2066 = vmatprep.subr.mxu0 0.0
    %2067 = vmatpush2.msra.mxu0 0.0
    %2068 = vmatprep.subr.mxu0 0.0
    %2069 = vmatpush2.msra.mxu0 0.0
    %2070 = vmatprep.subr.mxu0 0.0
    %2071 = vmatpush2.msra.mxu0 0.0
    %2072 = vmatprep.mubr.f32.mxu0 0.0
    %2073 = vmatmul.mubr.f32.gmra.mxu0 %v2002
    %v2074 = vpop.f32.mrf.mxu0
    %v2075 = vadd.f32 %v1998, %v2074
    %v2076 = vpop.f32.mrf.mxu0
    %2077 = vdwg.mxu0
    %v2078 = vmax.f32 %v2075, 0.0
    %v2079 = vld [vmem:[%s13] sm:$0xff]
    %v2080 = vld [vmem:[%s13 + $0x8] sm:$0xff]
    %v2081 = vld [vmem:[%s13 + $0x10] sm:$0xff]
    %v2082 = vld [vmem:[%s13 + $0x18] sm:$0xff]
    %v2083 = vld [vmem:[%s13 + $0x20] sm:$0xff]
    %v2084 = vld [vmem:[%s13 + $0x28] sm:$0xff]
    %v2085 = vld [vmem:[%s13 + $0x30] sm:$0xff]
    %v2086 = vld [vmem:[%s13 + $0x38] sm:$0xff]
    %v2087 = vld [vmem:[%s13 + $0x40] sm:$0xff]
    %v2088 = vld [vmem:[%s13 + $0x48] sm:$0xff]
    %v2089 = vld [vmem:[%s13 + $0x50] sm:$0xff]
    %v2090 = vld [vmem:[%s13 + $0x58] sm:$0xff]
    %v2091 = vld [vmem:[#allocation13] sm:$0x1]
    %v2093 = vlaneseq
    %v2094 = vshrl.u32 %v2093, 7
    %v2095 = vsub.s32 0, %v2094
    %v2096 = vrot.slane %v2091, %v2095
    %vm2098 = vcmask 785408
    %v2100 = vsel %vm2098, %v2078, 0
    %2102 = vmatprep.subr.mxu0 0.0
    %2103 = vmatpush1.msra.mxu0 0.0
    %2104 = vmatprep.subr.mxu0 0.0
    %2105 = vmatpush1.msra.mxu0 0.0
    %2106 = vmatprep.subr.mxu0 0.0
    %2107 = vmatpush1.msra.mxu0 0.0
    %2108 = vmatprep.subr.mxu0 0.0
    %2109 = vmatpush1.msra.mxu0 0.0
    %2110 = vmatprep.subr.mxu0 0.0
    %2111 = vmatpush1.msra.mxu0 %v2090
    %2112 = vmatprep.subr.mxu0 0.0
    %2113 = vmatpush1.msra.mxu0 %v2089
    %2114 = vmatprep.subr.mxu0 0.0
    %2115 = vmatpush1.msra.mxu0 %v2088
    %2116 = vmatprep.subr.mxu0 0.0
    %2117 = vmatpush1.msra.mxu0 %v2087
    %2118 = vmatprep.subr.mxu0 0.0
    %2119 = vmatpush1.msra.mxu0 %v2086
    %2120 = vmatprep.subr.mxu0 0.0
    %2121 = vmatpush1.msra.mxu0 %v2085
    %2122 = vmatprep.subr.mxu0 0.0
    %2123 = vmatpush1.msra.mxu0 %v2084
    %2124 = vmatprep.subr.mxu0 0.0
    %2125 = vmatpush1.msra.mxu0 %v2083
    %2126 = vmatprep.subr.mxu0 0.0
    %2127 = vmatpush1.msra.mxu0 %v2082
    %2128 = vmatprep.subr.mxu0 0.0
    %2129 = vmatpush1.msra.mxu0 %v2081
    %2130 = vmatprep.subr.mxu0 0.0
    %2131 = vmatpush1.msra.mxu0 %v2080
    %2132 = vmatprep.subr.mxu0 0.0
    %2133 = vmatpush1.msra.mxu0 %v2079
    %2134 = vmatprep.subr.mxu0 0.0
    %2135 = vmatpush2.msra.mxu0 0.0
    %2136 = vmatprep.subr.mxu0 0.0
    %2137 = vmatpush2.msra.mxu0 0.0
    %2138 = vmatprep.subr.mxu0 0.0
    %2139 = vmatpush2.msra.mxu0 0.0
    %2140 = vmatprep.subr.mxu0 0.0
    %2141 = vmatpush2.msra.mxu0 0.0
    %2142 = vmatprep.subr.mxu0 0.0
    %2143 = vmatpush2.msra.mxu0 0.0
    %2144 = vmatprep.subr.mxu0 0.0
    %2145 = vmatpush2.msra.mxu0 0.0
    %2146 = vmatprep.subr.mxu0 0.0
    %2147 = vmatpush2.msra.mxu0 0.0
    %2148 = vmatprep.subr.mxu0 0.0
    %2149 = vmatpush2.msra.mxu0 0.0
    %2150 = vmatprep.subr.mxu0 0.0
    %2151 = vmatpush2.msra.mxu0 0.0
    %2152 = vmatprep.subr.mxu0 0.0
    %2153 = vmatpush2.msra.mxu0 0.0
    %2154 = vmatprep.subr.mxu0 0.0
    %2155 = vmatpush2.msra.mxu0 0.0
    %2156 = vmatprep.subr.mxu0 0.0
    %2157 = vmatpush2.msra.mxu0 0.0
    %2158 = vmatprep.subr.mxu0 0.0
    %2159 = vmatpush2.msra.mxu0 0.0
    %2160 = vmatprep.subr.mxu0 0.0
    %2161 = vmatpush2.msra.mxu0 0.0
    %2162 = vmatprep.subr.mxu0 0.0
    %2163 = vmatpush2.msra.mxu0 0.0
    %2164 = vmatprep.subr.mxu0 0.0
    %2165 = vmatpush2.msra.mxu0 0.0
    %2166 = vmatprep.mubr.f32.mxu0 0.0
    %2167 = vmatmul.mubr.f32.gmra.mxu0 %v2100
    %v2168 = vpop.f32.mrf.mxu0
    %v2169 = vadd.f32 %v2096, %v2168
    %v2170 = vpop.f32.mrf.mxu0
    %2171 = vdwg.mxu0
    %v2172 = vmax.f32 %v2169, 0.0
    %v2173 = vld [vmem:[#allocation14] sm:$0xff]
    %v2174 = vld [vmem:[#allocation14 + $0x8] sm:$0xff]
    %v2175 = vld [vmem:[#allocation14 + $0x10] sm:$0xff]
    %v2176 = vld [vmem:[#allocation14 + $0x18] sm:$0xff]
    %v2177 = vld [vmem:[%s16] sm:$0xff]
    %v2178 = vld [vmem:[%s16 + $0x8] sm:$0xff]
    %v2179 = vld [vmem:[%s16 + $0x10] sm:$0xff]
    %v2180 = vld [vmem:[%s16 + $0x18] sm:$0xff]
    %v2181 = vld [vmem:[%s16 + $0x20] sm:$0xff]
    %v2182 = vld [vmem:[%s16 + $0x28] sm:$0xff]
    %v2183 = vld [vmem:[%s16 + $0x30] sm:$0xff]
    %v2184 = vld [vmem:[%s16 + $0x38] sm:$0xff]
    %v2185 = vld [vmem:[%s16 + $0x40] sm:$0xff]
    %v2186 = vld [vmem:[%s16 + $0x48] sm:$0xff]
    %v2187 = vld [vmem:[%s16 + $0x50] sm:$0xff]
    %v2188 = vld [vmem:[%s16 + $0x58] sm:$0xff]
    %v2190 = vsel %vm2098, %v2172, 0
    %2192 = vmatprep.subr.mxu0 0.0
    %2193 = vmatpush1.msra.mxu0 0.0
    %2194 = vmatprep.subr.mxu0 0.0
    %2195 = vmatpush1.msra.mxu0 0.0
    %2196 = vmatprep.subr.mxu0 0.0
    %2197 = vmatpush1.msra.mxu0 0.0
    %2198 = vmatprep.subr.mxu0 0.0
    %2199 = vmatpush1.msra.mxu0 0.0
    %2200 = vmatprep.subr.mxu0 0.0
    %2201 = vmatpush1.msra.mxu0 %v2188
    %2202 = vmatprep.subr.mxu0 0.0
    %2203 = vmatpush1.msra.mxu0 %v2187
    %2204 = vmatprep.subr.mxu0 0.0
    %2205 = vmatpush1.msra.mxu0 %v2186
    %2206 = vmatprep.subr.mxu0 0.0
    %2207 = vmatpush1.msra.mxu0 %v2185
    %2208 = vmatprep.subr.mxu0 0.0
    %2209 = vmatpush1.msra.mxu0 %v2184
    %2210 = vmatprep.subr.mxu0 0.0
    %2211 = vmatpush1.msra.mxu0 %v2183
    %2212 = vmatprep.subr.mxu0 0.0
    %2213 = vmatpush1.msra.mxu0 %v2182
    %2214 = vmatprep.subr.mxu0 0.0
    %2215 = vmatpush1.msra.mxu0 %v2181
    %2216 = vmatprep.subr.mxu0 0.0
    %2217 = vmatpush1.msra.mxu0 %v2180
    %2218 = vmatprep.subr.mxu0 0.0
    %2219 = vmatpush1.msra.mxu0 %v2179
    %2220 = vmatprep.subr.mxu0 0.0
    %2221 = vmatpush1.msra.mxu0 %v2178
    %2222 = vmatprep.subr.mxu0 0.0
    %2223 = vmatpush1.msra.mxu0 %v2177
    %2224 = vmatprep.subr.mxu0 0.0
    %2225 = vmatpush2.msra.mxu0 0.0
    %2226 = vmatprep.subr.mxu0 0.0
    %2227 = vmatpush2.msra.mxu0 0.0
    %2228 = vmatprep.subr.mxu0 0.0
    %2229 = vmatpush2.msra.mxu0 0.0
    %2230 = vmatprep.subr.mxu0 0.0
    %2231 = vmatpush2.msra.mxu0 0.0
    %2232 = vmatprep.subr.mxu0 0.0
    %2233 = vmatpush2.msra.mxu0 0.0
    %2234 = vmatprep.subr.mxu0 0.0
    %2235 = vmatpush2.msra.mxu0 0.0
    %2236 = vmatprep.subr.mxu0 0.0
    %2237 = vmatpush2.msra.mxu0 0.0
    %2238 = vmatprep.subr.mxu0 0.0
    %2239 = vmatpush2.msra.mxu0 0.0
    %2240 = vmatprep.subr.mxu0 0.0
    %2241 = vmatpush2.msra.mxu0 0.0
    %2242 = vmatprep.subr.mxu0 0.0
    %2243 = vmatpush2.msra.mxu0 0.0
    %2244 = vmatprep.subr.mxu0 0.0
    %2245 = vmatpush2.msra.mxu0 0.0
    %2246 = vmatprep.subr.mxu0 0.0
    %2247 = vmatpush2.msra.mxu0 0.0
    %2248 = vmatprep.subr.mxu0 0.0
    %2249 = vmatpush2.msra.mxu0 0.0
    %2250 = vmatprep.subr.mxu0 0.0
    %2251 = vmatpush2.msra.mxu0 0.0
    %2252 = vmatprep.subr.mxu0 0.0
    %2253 = vmatpush2.msra.mxu0 0.0
    %2254 = vmatprep.subr.mxu0 0.0
    %2255 = vmatpush2.msra.mxu0 0.0
    %2256 = vmatprep.mubr.f32.mxu0 0.0
    %2257 = vmatmul.mubr.f32.gmra.mxu0 %v2190
    %v2258 = vpop.f32.mrf.mxu0
    %v2259 = vadd.f32 0.0, %v2258
    %v2260 = vpop.f32.mrf.mxu0
    %2261 = vdwg.mxu0
    %v2263 = vsel %vm213, %v1989, 0
    %2265 = vmatprep.subr.mxu0 0.0
    %2266 = vmatpush1.msra.mxu0 0.0
    %2267 = vmatprep.subr.mxu0 0.0
    %2268 = vmatpush1.msra.mxu0 0.0
    %2269 = vmatprep.subr.mxu0 0.0
    %2270 = vmatpush1.msra.mxu0 0.0
    %2271 = vmatprep.subr.mxu0 0.0
    %2272 = vmatpush1.msra.mxu0 0.0
    %2273 = vmatprep.subr.mxu0 0.0
    %2274 = vmatpush1.msra.mxu0 0.0
    %2275 = vmatprep.subr.mxu0 0.0
    %2276 = vmatpush1.msra.mxu0 0.0
    %2277 = vmatprep.subr.mxu0 0.0
    %2278 = vmatpush1.msra.mxu0 0.0
    %2279 = vmatprep.subr.mxu0 0.0
    %2280 = vmatpush1.msra.mxu0 0.0
    %2281 = vmatprep.subr.mxu0 0.0
    %2282 = vmatpush1.msra.mxu0 0.0
    %2283 = vmatprep.subr.mxu0 0.0
    %2284 = vmatpush1.msra.mxu0 0.0
    %2285 = vmatprep.subr.mxu0 0.0
    %2286 = vmatpush1.msra.mxu0 0.0
    %2287 = vmatprep.subr.mxu0 0.0
    %2288 = vmatpush1.msra.mxu0 0.0
    %2289 = vmatprep.subr.mxu0 0.0
    %2290 = vmatpush1.msra.mxu0 %v2176
    %2291 = vmatprep.subr.mxu0 0.0
    %2292 = vmatpush1.msra.mxu0 %v2175
    %2293 = vmatprep.subr.mxu0 0.0
    %2294 = vmatpush1.msra.mxu0 %v2174
    %2295 = vmatprep.subr.mxu0 0.0
    %2296 = vmatpush1.msra.mxu0 %v2173
    %2297 = vmatprep.subr.mxu0 0.0
    %2298 = vmatpush2.msra.mxu0 0.0
    %2299 = vmatprep.subr.mxu0 0.0
    %2300 = vmatpush2.msra.mxu0 0.0
    %2301 = vmatprep.subr.mxu0 0.0
    %2302 = vmatpush2.msra.mxu0 0.0
    %2303 = vmatprep.subr.mxu0 0.0
    %2304 = vmatpush2.msra.mxu0 0.0
    %2305 = vmatprep.subr.mxu0 0.0
    %2306 = vmatpush2.msra.mxu0 0.0
    %2307 = vmatprep.subr.mxu0 0.0
    %2308 = vmatpush2.msra.mxu0 0.0
    %2309 = vmatprep.subr.mxu0 0.0
    %2310 = vmatpush2.msra.mxu0 0.0
    %2311 = vmatprep.subr.mxu0 0.0
    %2312 = vmatpush2.msra.mxu0 0.0
    %2313 = vmatprep.subr.mxu0 0.0
    %2314 = vmatpush2.msra.mxu0 0.0
    %2315 = vmatprep.subr.mxu0 0.0
    %2316 = vmatpush2.msra.mxu0 0.0
    %2317 = vmatprep.subr.mxu0 0.0
    %2318 = vmatpush2.msra.mxu0 0.0
    %2319 = vmatprep.subr.mxu0 0.0
    %2320 = vmatpush2.msra.mxu0 0.0
    %2321 = vmatprep.subr.mxu0 0.0
    %2322 = vmatpush2.msra.mxu0 0.0
    %2323 = vmatprep.subr.mxu0 0.0
    %2324 = vmatpush2.msra.mxu0 0.0
    %2325 = vmatprep.subr.mxu0 0.0
    %2326 = vmatpush2.msra.mxu0 0.0
    %2327 = vmatprep.subr.mxu0 0.0
    %2328 = vmatpush2.msra.mxu0 0.0
    %2329 = vmatprep.mubr.f32.mxu0 0.0
    %2330 = vmatmul.mubr.f32.gmra.mxu0 %v2263
    %v2331 = vpop.f32.mrf.mxu0
    %v2332 = vadd.f32 %v2259, %v2331
    %v2333 = vpop.f32.mrf.mxu0
    %2334 = vdwg.mxu0
    %v2335 = vld [vmem:[#allocation16] sm:$0x1]
    %v2337 = vlaneseq
    %v2338 = vshrl.u32 %v2337, 7
    %v2339 = vsub.s32 0, %v2338
    %v2340 = vrot.slane %v2335, %v2339
    %v2342 = vadd.f32 %v2332, %v2340
    %v2343 = vmax.f32 %v2342, 0.0
    %v2344 = vld [vmem:[%s18] sm:$0xff]
    %v2345 = vld [vmem:[%s18 + $0x8] sm:$0xff]
    %v2346 = vld [vmem:[%s18 + $0x10] sm:$0xff]
    %v2347 = vld [vmem:[%s18 + $0x18] sm:$0xff]
    %v2348 = vld [vmem:[%s18 + $0x20] sm:$0xff]
    %v2349 = vld [vmem:[%s18 + $0x28] sm:$0xff]
    %v2350 = vld [vmem:[%s18 + $0x30] sm:$0xff]
    %v2351 = vld [vmem:[%s18 + $0x38] sm:$0xff]
    %v2352 = vld [vmem:[#allocation17] sm:$0x1]
    %v2354 = vlaneseq
    %v2355 = vshrl.u32 %v2354, 7
    %v2356 = vsub.s32 0, %v2355
    %v2357 = vrot.slane %v2352, %v2356
    %v2360 = vsel %vm412, %v2343, 0
    %2362 = vmatprep.subr.mxu0 0.0
    %2363 = vmatpush1.msra.mxu0 0.0
    %2364 = vmatprep.subr.mxu0 0.0
    %2365 = vmatpush1.msra.mxu0 0.0
    %2366 = vmatprep.subr.mxu0 0.0
    %2367 = vmatpush1.msra.mxu0 0.0
    %2368 = vmatprep.subr.mxu0 0.0
    %2369 = vmatpush1.msra.mxu0 0.0
    %2370 = vmatprep.subr.mxu0 0.0
    %2371 = vmatpush1.msra.mxu0 0.0
    %2372 = vmatprep.subr.mxu0 0.0
    %2373 = vmatpush1.msra.mxu0 0.0
    %2374 = vmatprep.subr.mxu0 0.0
    %2375 = vmatpush1.msra.mxu0 0.0
    %2376 = vmatprep.subr.mxu0 0.0
    %2377 = vmatpush1.msra.mxu0 0.0
    %2378 = vmatprep.subr.mxu0 0.0
    %2379 = vmatpush1.msra.mxu0 %v2351
    %2380 = vmatprep.subr.mxu0 0.0
    %2381 = vmatpush1.msra.mxu0 %v2350
    %2382 = vmatprep.subr.mxu0 0.0
    %2383 = vmatpush1.msra.mxu0 %v2349
    %2384 = vmatprep.subr.mxu0 0.0
    %2385 = vmatpush1.msra.mxu0 %v2348
    %2386 = vmatprep.subr.mxu0 0.0
    %2387 = vmatpush1.msra.mxu0 %v2347
    %2388 = vmatprep.subr.mxu0 0.0
    %2389 = vmatpush1.msra.mxu0 %v2346
    %2390 = vmatprep.subr.mxu0 0.0
    %2391 = vmatpush1.msra.mxu0 %v2345
    %2392 = vmatprep.subr.mxu0 0.0
    %2393 = vmatpush1.msra.mxu0 %v2344
    %2394 = vmatprep.subr.mxu0 0.0
    %2395 = vmatpush2.msra.mxu0 0.0
    %2396 = vmatprep.subr.mxu0 0.0
    %2397 = vmatpush2.msra.mxu0 0.0
    %2398 = vmatprep.subr.mxu0 0.0
    %2399 = vmatpush2.msra.mxu0 0.0
    %2400 = vmatprep.subr.mxu0 0.0
    %2401 = vmatpush2.msra.mxu0 0.0
    %2402 = vmatprep.subr.mxu0 0.0
    %2403 = vmatpush2.msra.mxu0 0.0
    %2404 = vmatprep.subr.mxu0 0.0
    %2405 = vmatpush2.msra.mxu0 0.0
    %2406 = vmatprep.subr.mxu0 0.0
    %2407 = vmatpush2.msra.mxu0 0.0
    %2408 = vmatprep.subr.mxu0 0.0
    %2409 = vmatpush2.msra.mxu0 0.0
    %2410 = vmatprep.subr.mxu0 0.0
    %2411 = vmatpush2.msra.mxu0 0.0
    %2412 = vmatprep.subr.mxu0 0.0
    %2413 = vmatpush2.msra.mxu0 0.0
    %2414 = vmatprep.subr.mxu0 0.0
    %2415 = vmatpush2.msra.mxu0 0.0
    %2416 = vmatprep.subr.mxu0 0.0
    %2417 = vmatpush2.msra.mxu0 0.0
    %2418 = vmatprep.subr.mxu0 0.0
    %2419 = vmatpush2.msra.mxu0 0.0
    %2420 = vmatprep.subr.mxu0 0.0
    %2421 = vmatpush2.msra.mxu0 0.0
    %2422 = vmatprep.subr.mxu0 0.0
    %2423 = vmatpush2.msra.mxu0 0.0
    %2424 = vmatprep.subr.mxu0 0.0
    %2425 = vmatpush2.msra.mxu0 0.0
    %2426 = vmatprep.mubr.f32.mxu0 0.0
    %2427 = vmatmul.mubr.f32.gmra.mxu0 %v2360
    %v2428 = vpop.f32.mrf.mxu0
    %v2429 = vadd.f32 %v2357, %v2428
    %v2430 = vpop.f32.mrf.mxu0
    %2431 = vdwg.mxu0
    %v2432 = vmax.f32 %v2429, 0.0
    %v2433 = vld [vmem:[%s20] sm:$0xff]
    %v2434 = vld [vmem:[%s20 + $0x8] sm:$0xff]
    %v2435 = vld [vmem:[%s20 + $0x10] sm:$0xff]
    %v2436 = vld [vmem:[%s20 + $0x18] sm:$0xff]
    %v2437 = vld [vmem:[#allocation19] sm:$0x1]
    %v2439 = vlaneseq
    %v2440 = vshrl.u32 %v2439, 7
    %v2441 = vsub.s32 0, %v2440
    %v2442 = vrot.slane %v2437, %v2441
    %v2445 = vsel %vm213, %v2432, 0
    %2447 = vmatprep.subr.mxu0 0.0
    %2448 = vmatpush1.msra.mxu0 0.0
    %2449 = vmatprep.subr.mxu0 0.0
    %2450 = vmatpush1.msra.mxu0 0.0
    %2451 = vmatprep.subr.mxu0 0.0
    %2452 = vmatpush1.msra.mxu0 0.0
    %2453 = vmatprep.subr.mxu0 0.0
    %2454 = vmatpush1.msra.mxu0 0.0
    %2455 = vmatprep.subr.mxu0 0.0
    %2456 = vmatpush1.msra.mxu0 0.0
    %2457 = vmatprep.subr.mxu0 0.0
    %2458 = vmatpush1.msra.mxu0 0.0
    %2459 = vmatprep.subr.mxu0 0.0
    %2460 = vmatpush1.msra.mxu0 0.0
    %2461 = vmatprep.subr.mxu0 0.0
    %2462 = vmatpush1.msra.mxu0 0.0
    %2463 = vmatprep.subr.mxu0 0.0
    %2464 = vmatpush1.msra.mxu0 0.0
    %2465 = vmatprep.subr.mxu0 0.0
    %2466 = vmatpush1.msra.mxu0 0.0
    %2467 = vmatprep.subr.mxu0 0.0
    %2468 = vmatpush1.msra.mxu0 0.0
    %2469 = vmatprep.subr.mxu0 0.0
    %2470 = vmatpush1.msra.mxu0 0.0
    %2471 = vmatprep.subr.mxu0 0.0
    %2472 = vmatpush1.msra.mxu0 %v2436
    %2473 = vmatprep.subr.mxu0 0.0
    %2474 = vmatpush1.msra.mxu0 %v2435
    %2475 = vmatprep.subr.mxu0 0.0
    %2476 = vmatpush1.msra.mxu0 %v2434
    %2477 = vmatprep.subr.mxu0 0.0
    %2478 = vmatpush1.msra.mxu0 %v2433
    %2479 = vmatprep.subr.mxu0 0.0
    %2480 = vmatpush2.msra.mxu0 0.0
    %2481 = vmatprep.subr.mxu0 0.0
    %2482 = vmatpush2.msra.mxu0 0.0
    %2483 = vmatprep.subr.mxu0 0.0
    %2484 = vmatpush2.msra.mxu0 0.0
    %2485 = vmatprep.subr.mxu0 0.0
    %2486 = vmatpush2.msra.mxu0 0.0
    %2487 = vmatprep.subr.mxu0 0.0
    %2488 = vmatpush2.msra.mxu0 0.0
    %2489 = vmatprep.subr.mxu0 0.0
    %2490 = vmatpush2.msra.mxu0 0.0
    %2491 = vmatprep.subr.mxu0 0.0
    %2492 = vmatpush2.msra.mxu0 0.0
    %2493 = vmatprep.subr.mxu0 0.0
    %2494 = vmatpush2.msra.mxu0 0.0
    %2495 = vmatprep.subr.mxu0 0.0
    %2496 = vmatpush2.msra.mxu0 0.0
    %2497 = vmatprep.subr.mxu0 0.0
    %2498 = vmatpush2.msra.mxu0 0.0
    %2499 = vmatprep.subr.mxu0 0.0
    %2500 = vmatpush2.msra.mxu0 0.0
    %2501 = vmatprep.subr.mxu0 0.0
    %2502 = vmatpush2.msra.mxu0 0.0
    %2503 = vmatprep.subr.mxu0 0.0
    %2504 = vmatpush2.msra.mxu0 0.0
    %2505 = vmatprep.subr.mxu0 0.0
    %2506 = vmatpush2.msra.mxu0 0.0
    %2507 = vmatprep.subr.mxu0 0.0
    %2508 = vmatpush2.msra.mxu0 0.0
    %2509 = vmatprep.subr.mxu0 0.0
    %2510 = vmatpush2.msra.mxu0 0.0
    %2511 = vmatprep.mubr.f32.mxu0 0.0
    %2512 = vmatmul.mubr.f32.gmra.mxu0 %v2445
    %v2513 = vpop.f32.mrf.mxu0
    %v2514 = vadd.f32 %v2442, %v2513
    %v2515 = vpop.f32.mrf.mxu0
    %2516 = vdwg.mxu0
    %v2517 = vtanh.pop %v2514
    %vm2518 = vcmask 9216
    %2519 = vst.msk [vmem:[#allocation20] sm:$0x3] %vm2518, %v2517
    // Predicated region
    $region134: #{policy_forward.1} parent=1 // pred_check
      _
    $region135: #{policy_forward.1} parent=1 // pred_check_branch
      %2521 = sbr.rel (0) target = $region137
    $region136: #{policy_forward.1} parent=1 // pred_region
      %s2523 = ssub.s32 32, 32
      %2524 = vsyncadd [#allocation4], %s2523
      %s2526 = sshll.u32 [#allocation20], 4
      %s2527 = int_to_ptr.vmem [resolvable:$true] %s2526
      %2529 = dma.vmem_to_hbm [thread:$0]  %s2527, 32, %s22, [#allocation4]
    $region137: #{policy_forward.1} parent=1 // pred_fallthru
      _
    // Predicated region
    $region138: #{policy_forward.1} parent=1 // pred_check
      _
    $region139: #{policy_forward.1} parent=1 // pred_check_branch
      %2531 = sbr.rel (0) target = $region141
    $region140: #{policy_forward.1} parent=1 // pred_region
      %2532 = dma.done [#allocation4], 32
    $region141: #{policy_forward.1} parent=1 // pred_fallthru
      _
    %2533 = vsyncpa [#allocation3], 1
    %2534 = vsyncpa [#allocation6], 1
    %2535 = vsyncpa [#allocation9], 1
    %2536 = vsyncpa [#allocation12], 1
    %2537 = vsyncpa [#allocation15], 1
    %2538 = vsyncpa [#allocation18], 1
    %2539 = vsyncpa [#allocation4], 1

</llo_original>
